<compile_context>
chip_gen: v5e
topology: v5e:2x2
jax: 0.10.0
libtpu: 0.0.40
codegen_flags: <defaults>
</compile_context>

<pallas_src>
import functools

import jax
import jax.numpy as jnp
from jax.experimental import pallas as pl
from jax.experimental.pallas import tpu as pltpu

H_N = 40        # hidden width
INPUT_N = 2     # input features
N_MID = 9       # number of (40 -> 40) Linear+Swish blocks after the first layer

_HAS_BUFFERED = hasattr(pl, "Buffered")


def _swish(x):
    # Swish(x) = x * sigmoid(x) = 0.5 * x * (1 + tanh(x/2)).
    # Exactly one EUP transcendental (tanh); adds/muls go to the VPU.
    return 0.5 * x * (1.0 + jnp.tanh(0.5 * x))


def pinn_p_kernel(x_ref, w0_ref, b0_ref, wh_ref, bh_ref, wl_ref, bl_ref, o_ref):
    """Full MLP forward for one batch tile, batch on the lane axis.

    x_ref : (2, TN)       input coords (transposed), f32
    w0_ref: (40, 2)       first-layer weight (out, in), f32
    b0_ref: (40, 1)       first-layer bias (column), f32
    wh_ref: (9, 40, 40)   packed hidden weights (out, in), bf16
    bh_ref: (9, 40, 1)    packed hidden biases, f32
    wl_ref: (1, 40)       last-layer weight, bf16
    bl_ref: (1, 1)        last-layer bias, f32
    o_ref : (1, TN)       output (lane-dense), f32
    """
    x = x_ref[...].astype(jnp.float32)            # (2, TN)
    w0 = w0_ref[...]                              # (40, 2), f32

    # Layer 0 (K=2): two broadcast multiply-adds on the VPU instead of an
    # almost-empty MXU pass.
    h = (w0[:, 0:1] * x[0:1, :]
         + w0[:, 1:2] * x[1:2, :]
         + b0_ref[...])                           # (40, TN), f32
    h = _swish(h)

    # 9 x (Linear(40,40) -> Swish): bf16 operands on the MXU, f32 accumulate.
    for i in range(N_MID):
        w = wh_ref[i]                             # (40, 40) bf16 (static slice)
        b = bh_ref[i]                             # (40, 1)  f32
        h = jnp.dot(w, h.astype(jnp.bfloat16),
                    preferred_element_type=jnp.float32) + b
        h = _swish(h)                             # elementwise kept in f32

    # Final Linear(40, 1) -> (1, TN), stored lane-dense.
    y = jnp.dot(wl_ref[...], h.astype(jnp.bfloat16),
                preferred_element_type=jnp.float32) + bl_ref[...]
    o_ref[...] = y.astype(o_ref.dtype)


def init_params(key):
    """Deterministic synthetic parameters, (out_features, in_features) layout, f32."""
    keys = jax.random.split(key, N_MID + 2)

    def lin(kk, fan_in, fan_out):
        kw, kb = jax.random.split(kk)
        w = (jax.random.normal(kw, (fan_out, fan_in), jnp.float32)
             / jnp.sqrt(jnp.float32(fan_in)))
        b = jax.random.normal(kb, (fan_out, 1), jnp.float32) * 0.01
        return w, b

    w0, b0 = lin(keys[0], INPUT_N, H_N)           # (40, 2), (40, 1)

    whs, bhs = [], []
    for i in range(N_MID):
        w, b = lin(keys[1 + i], H_N, H_N)
        whs.append(w)
        bhs.append(b)
    wh = jnp.stack(whs)                           # (9, 40, 40)
    bh = jnp.stack(bhs)                           # (9, 40, 1)

    wl, bl = lin(keys[N_MID + 1], H_N, 1)         # (1, 40), (1, 1)
    return (w0, b0, wh, bh, wl, bl)


def _num_tensorcores():
    """Best-effort TensorCore-per-device count (v7x/v4/v5p = 2, v5e/v6e = 1)."""
    try:
        kind = jax.devices()[0].device_kind.lower()
    except Exception:
        return 1
    return 2 if any(tag in kind for tag in ("v7", "v4", "v5p")) else 1


def _pick_tile(n, requested, num_tc):
    """Pick the batch tile (lane width).

    n is already a multiple of 128.  Largest tile <= requested that divides n;
    on single-TC chips never split just to make grid>1; on multi-TC chips
    prefer an even grid with per-core tiles >= 512 so both cores are balanced.
    """
    requested = max(128, (int(requested) // 128) * 128)
    cands = [t for t in range(128, n + 1, 128) if n % t == 0 and t <= requested]
    if not cands:
        cands = [128]
    if num_tc >= 2 and n >= 1024:
        even = [t for t in cands if (n // t) % 2 == 0 and t >= 512]
        if even:
            return max(even)
    return max(cands)


def _resident_spec(shape, buffered):
    """BlockSpec for a grid-invariant (weight/bias) input; single-buffered if possible."""
    ndim = len(shape)
    index_map = lambda i: (0,) * ndim
    if buffered and _HAS_BUFFERED:
        try:
            return pl.BlockSpec(shape, index_map, pipeline_mode=pl.Buffered(1))
        except TypeError:
            pass
    return pl.BlockSpec(shape, index_map)


def pinn_p_forward(x, params, *, tile_n=4096):
    """Forward pass matching PINN_p: x (N, 2) -> (N, 1)."""
    n = int(x.shape[0])
    n_pad = ((n + 127) // 128) * 128              # lane-dense padding
    num_tc = _num_tensorcores()
    tile = _pick_tile(n_pad, tile_n, num_tc)
    grid = (n_pad // tile,)

    w0, b0, wh, bh, wl, bl = params
    wh_b = wh.astype(jnp.bfloat16)                # MXU operands in bf16
    wl_b = wl.astype(jnp.bfloat16)

    x_t = x.T.astype(jnp.float32)                 # (2, n): batch on lanes
    if n_pad != n:
        x_t = jnp.pad(x_t, ((0, 0), (0, n_pad - n)))

    # Compute-heavy despite tiny I/O; tell the XLA scheduler.
    flops = n_pad * (2 * INPUT_N * H_N + N_MID * 2 * H_N * H_N + 2 * H_N)
    transcendentals = n_pad * (N_MID + 1) * H_N
    weight_bytes = sum(int(a.size) * a.dtype.itemsize
                       for a in (w0, b0, wh_b, bh, wl_b, bl))
    bytes_accessed = n_pad * (INPUT_N + 1) * 4 + weight_bytes
    cost = pl.CostEstimate(flops=int(flops),
                           transcendentals=int(transcendentals),
                           bytes_accessed=int(bytes_accessed))

    def _call(buffered):
        in_specs = [
            pl.BlockSpec((INPUT_N, tile), lambda i: (0, i)),      # x_t  (tiled)
            _resident_spec((H_N, INPUT_N), buffered),             # w0
            _resident_spec((H_N, 1), buffered),                   # b0
            _resident_spec((N_MID, H_N, H_N), buffered),          # wh packed (bf16)
            _resident_spec((N_MID, H_N, 1), buffered),            # bh packed
            _resident_spec((1, H_N), buffered),                   # wl (bf16)
            _resident_spec((1, 1), buffered),                     # bl
        ]
        out_spec = pl.BlockSpec((1, tile), lambda i: (0, i))      # lane-dense output
        return pl.pallas_call(
            pinn_p_kernel,
            out_shape=jax.ShapeDtypeStruct((1, n_pad), jnp.float32),
            grid_spec=pltpu.PrefetchScalarGridSpec(
                num_scalar_prefetch=0,
                grid=grid,
                in_specs=in_specs,
                out_specs=out_spec,
            ),
            compiler_params=pltpu.CompilerParams(
                dimension_semantics=("parallel",),
            ),
            cost_estimate=cost,
        )(x_t, w0, b0, wh_b, bh, wl_b, bl)

    try:
        out_t = _call(buffered=True)
    except Exception:
        # Fallback if this JAX version rejects pipeline_mode / Buffered(1).
        out_t = _call(buffered=False)

    return out_t[:, :n].T                         # (n, 1), matches the module


def pinn_p_reference(x, params):
    """Pure-JAX f32 reference of the same forward pass (exact sigmoid)."""
    w0, b0, wh, bh, wl, bl = params
    h = w0 @ x.T.astype(jnp.float32) + b0         # (40, N)
    h = h * jax.nn.sigmoid(h)
    for i in range(N_MID):
        h = wh[i] @ h + bh[i]
        h = h * jax.nn.sigmoid(h)
    y = wl @ h + bl                               # (1, N)
    return y.T                                    # (N, 1)


if __name__ == "__main__":
    key = jax.random.PRNGKey(0)
    kx, kp = jax.random.split(key)

    # Small deterministic input: 200 collocation points with (x, y) coords.
    # 200 is NOT a multiple of 128, exercising the pad-and-slice path.
    N = 200
    x = jax.random.uniform(kx, (N, INPUT_N), jnp.float32)

    params = init_params(kp)

    out = pinn_p_forward(x, params)
    out = jax.block_until_ready(out)

    ref = pinn_p_reference(x, params)
    assert out.shape == (N, 1), out.shape
    # Tolerance accounts for bf16 MXU operands (f32 accumulation) across 10 layers.
    max_err = float(jnp.max(jnp.abs(out - ref)))
    assert max_err < 2e-2, max_err

    print("KERNEL_OK")
</pallas_src>

<mosaic_0001>
module attributes {stable_mosaic.version = 11 : i64} {
  func.func @pinn_p_kernel(%arg0: i32, %arg1: memref<2x256xf32, #tpu.memory_space<vmem>>, %arg2: memref<40x2xf32, #tpu.memory_space<vmem>>, %arg3: memref<40x1xf32, #tpu.memory_space<vmem>>, %arg4: memref<9x40x40xbf16, #tpu.memory_space<vmem>>, %arg5: memref<9x40x1xf32, #tpu.memory_space<vmem>>, %arg6: memref<1x40xbf16, #tpu.memory_space<vmem>>, %arg7: memref<1x1xf32, #tpu.memory_space<vmem>>, %arg8: memref<1x256xf32, #tpu.memory_space<vmem>>) attributes {dimension_semantics = [#tpu.dimension_semantics<parallel>], iteration_bounds = array<i64: 1>, scalar_prefetch = 0 : i64, scratch_operands = 0 : i64, tpu.core_type = #tpu.core_type<tc>, window_params = [{transform_indices = @transform_0, window_bounds = array<i64: 2, 256>}, {pipeline_mode = #tpu.pipeline_mode<synchronous>, transform_indices = @transform_1, window_bounds = array<i64: 40, 2>}, {pipeline_mode = #tpu.pipeline_mode<synchronous>, transform_indices = @transform_2, window_bounds = array<i64: 40, 1>}, {pipeline_mode = #tpu.pipeline_mode<synchronous>, transform_indices = @transform_3, window_bounds = array<i64: 9, 40, 40>}, {pipeline_mode = #tpu.pipeline_mode<synchronous>, transform_indices = @transform_4, window_bounds = array<i64: 9, 40, 1>}, {pipeline_mode = #tpu.pipeline_mode<synchronous>, transform_indices = @transform_5, window_bounds = array<i64: 1, 40>}, {pipeline_mode = #tpu.pipeline_mode<synchronous>, transform_indices = @transform_6, window_bounds = array<i64: 1, 1>}, {transform_indices = @transform_7, window_bounds = array<i64: 1, 256>}]} {
    %c0 = arith.constant 0 : index
    %c0_0 = arith.constant 0 : index
    %0 = vector.load %arg1[%c0, %c0_0] : memref<2x256xf32, #tpu.memory_space<vmem>>, vector<2x256xf32>
    %c0_1 = arith.constant 0 : index
    %c0_2 = arith.constant 0 : index
    %1 = vector.load %arg2[%c0_1, %c0_2] : memref<40x2xf32, #tpu.memory_space<vmem>>, vector<40x2xf32>
    %2 = vector.extract_strided_slice %1 {offsets = [0, 0], sizes = [40, 1], strides = [1, 1]} : vector<40x2xf32> to vector<40x1xf32>
    %3 = vector.extract_strided_slice %0 {offsets = [0, 0], sizes = [1, 256], strides = [1, 1]} : vector<2x256xf32> to vector<1x256xf32>
    %4 = vector.broadcast %2 : vector<40x1xf32> to vector<40x256xf32>
    %5 = vector.broadcast %3 : vector<1x256xf32> to vector<40x256xf32>
    %6 = arith.mulf %4, %5 : vector<40x256xf32>
    %7 = vector.extract_strided_slice %1 {offsets = [0, 1], sizes = [40, 1], strides = [1, 1]} : vector<40x2xf32> to vector<40x1xf32>
    %8 = vector.extract_strided_slice %0 {offsets = [1, 0], sizes = [1, 256], strides = [1, 1]} : vector<2x256xf32> to vector<1x256xf32>
    %9 = vector.broadcast %7 : vector<40x1xf32> to vector<40x256xf32>
    %10 = vector.broadcast %8 : vector<1x256xf32> to vector<40x256xf32>
    %11 = arith.mulf %9, %10 : vector<40x256xf32>
    %12 = arith.addf %6, %11 : vector<40x256xf32>
    %c0_3 = arith.constant 0 : index
    %c0_4 = arith.constant 0 : index
    %13 = vector.load %arg3[%c0_3, %c0_4] : memref<40x1xf32, #tpu.memory_space<vmem>>, vector<40x1xf32>
    %14 = vector.broadcast %13 : vector<40x1xf32> to vector<40x256xf32>
    %15 = arith.addf %12, %14 : vector<40x256xf32>
    %cst = arith.constant 5.000000e-01 : f32
    %16 = vector.broadcast %cst : f32 to vector<40x256xf32>
    %17 = arith.mulf %16, %15 : vector<40x256xf32>
    %cst_5 = arith.constant 5.000000e-01 : f32
    %18 = vector.broadcast %cst_5 : f32 to vector<40x256xf32>
    %19 = arith.mulf %18, %15 : vector<40x256xf32>
    %20 = math.tanh %19 : vector<40x256xf32>
    %cst_6 = arith.constant 1.000000e+00 : f32
    %21 = vector.broadcast %cst_6 : f32 to vector<40x256xf32>
    %22 = arith.addf %21, %20 : vector<40x256xf32>
    %23 = arith.mulf %17, %22 : vector<40x256xf32>
    %c0_7 = arith.constant 0 : index
    %c0_8 = arith.constant 0 : index
    %c0_9 = arith.constant 0 : index
    %24 = vector.load %arg4[%c0_7, %c0_8, %c0_9] : memref<9x40x40xbf16, #tpu.memory_space<vmem>>, vector<1x40x40xbf16>
    %25 = vector.shape_cast %24 : vector<1x40x40xbf16> to vector<40x40xbf16>
    %c0_10 = arith.constant 0 : index
    %c0_11 = arith.constant 0 : index
    %c0_12 = arith.constant 0 : index
    %26 = vector.load %arg5[%c0_10, %c0_11, %c0_12] : memref<9x40x1xf32, #tpu.memory_space<vmem>>, vector<1x40x1xf32>
    %27 = vector.shape_cast %26 : vector<1x40x1xf32> to vector<40x1xf32>
    %28 = arith.truncf %23 : vector<40x256xf32> to vector<40x256xbf16>
    %cst_13 = arith.constant dense<0.000000e+00> : vector<40x256xf32>
    %29 = tpu.matmul %25, %28, %cst_13 {dimension_numbers = #tpu.dot_dimension_numbers<[1], [0], [0], [1], [0, 0, 1, 1], [], []>} : vector<40x40xbf16>, vector<40x256xbf16>, vector<40x256xf32> -> vector<40x256xf32>
    %30 = vector.broadcast %27 : vector<40x1xf32> to vector<40x256xf32>
    %31 = arith.addf %29, %30 : vector<40x256xf32>
    %cst_14 = arith.constant 5.000000e-01 : f32
    %32 = vector.broadcast %cst_14 : f32 to vector<40x256xf32>
    %33 = arith.mulf %32, %31 : vector<40x256xf32>
    %cst_15 = arith.constant 5.000000e-01 : f32
    %34 = vector.broadcast %cst_15 : f32 to vector<40x256xf32>
    %35 = arith.mulf %34, %31 : vector<40x256xf32>
    %36 = math.tanh %35 : vector<40x256xf32>
    %cst_16 = arith.constant 1.000000e+00 : f32
    %37 = vector.broadcast %cst_16 : f32 to vector<40x256xf32>
    %38 = arith.addf %37, %36 : vector<40x256xf32>
    %39 = arith.mulf %33, %38 : vector<40x256xf32>
    %c1 = arith.constant 1 : index
    %c0_17 = arith.constant 0 : index
    %c0_18 = arith.constant 0 : index
    %40 = vector.load %arg4[%c1, %c0_17, %c0_18] : memref<9x40x40xbf16, #tpu.memory_space<vmem>>, vector<1x40x40xbf16>
    %41 = vector.shape_cast %40 : vector<1x40x40xbf16> to vector<40x40xbf16>
    %c1_19 = arith.constant 1 : index
    %c0_20 = arith.constant 0 : index
    %c0_21 = arith.constant 0 : index
    %42 = vector.load %arg5[%c1_19, %c0_20, %c0_21] : memref<9x40x1xf32, #tpu.memory_space<vmem>>, vector<1x40x1xf32>
    %43 = vector.shape_cast %42 : vector<1x40x1xf32> to vector<40x1xf32>
    %44 = arith.truncf %39 : vector<40x256xf32> to vector<40x256xbf16>
    %cst_22 = arith.constant dense<0.000000e+00> : vector<40x256xf32>
    %45 = tpu.matmul %41, %44, %cst_22 {dimension_numbers = #tpu.dot_dimension_numbers<[1], [0], [0], [1], [0, 0, 1, 1], [], []>} : vector<40x40xbf16>, vector<40x256xbf16>, vector<40x256xf32> -> vector<40x256xf32>
    %46 = vector.broadcast %43 : vector<40x1xf32> to vector<40x256xf32>
    %47 = arith.addf %45, %46 : vector<40x256xf32>
    %cst_23 = arith.constant 5.000000e-01 : f32
    %48 = vector.broadcast %cst_23 : f32 to vector<40x256xf32>
    %49 = arith.mulf %48, %47 : vector<40x256xf32>
    %cst_24 = arith.constant 5.000000e-01 : f32
    %50 = vector.broadcast %cst_24 : f32 to vector<40x256xf32>
    %51 = arith.mulf %50, %47 : vector<40x256xf32>
    %52 = math.tanh %51 : vector<40x256xf32>
    %cst_25 = arith.constant 1.000000e+00 : f32
    %53 = vector.broadcast %cst_25 : f32 to vector<40x256xf32>
    %54 = arith.addf %53, %52 : vector<40x256xf32>
    %55 = arith.mulf %49, %54 : vector<40x256xf32>
    %c2 = arith.constant 2 : index
    %c0_26 = arith.constant 0 : index
    %c0_27 = arith.constant 0 : index
    %56 = vector.load %arg4[%c2, %c0_26, %c0_27] : memref<9x40x40xbf16, #tpu.memory_space<vmem>>, vector<1x40x40xbf16>
    %57 = vector.shape_cast %56 : vector<1x40x40xbf16> to vector<40x40xbf16>
    %c2_28 = arith.constant 2 : index
    %c0_29 = arith.constant 0 : index
    %c0_30 = arith.constant 0 : index
    %58 = vector.load %arg5[%c2_28, %c0_29, %c0_30] : memref<9x40x1xf32, #tpu.memory_space<vmem>>, vector<1x40x1xf32>
    %59 = vector.shape_cast %58 : vector<1x40x1xf32> to vector<40x1xf32>
    %60 = arith.truncf %55 : vector<40x256xf32> to vector<40x256xbf16>
    %cst_31 = arith.constant dense<0.000000e+00> : vector<40x256xf32>
    %61 = tpu.matmul %57, %60, %cst_31 {dimension_numbers = #tpu.dot_dimension_numbers<[1], [0], [0], [1], [0, 0, 1, 1], [], []>} : vector<40x40xbf16>, vector<40x256xbf16>, vector<40x256xf32> -> vector<40x256xf32>
    %62 = vector.broadcast %59 : vector<40x1xf32> to vector<40x256xf32>
    %63 = arith.addf %61, %62 : vector<40x256xf32>
    %cst_32 = arith.constant 5.000000e-01 : f32
    %64 = vector.broadcast %cst_32 : f32 to vector<40x256xf32>
    %65 = arith.mulf %64, %63 : vector<40x256xf32>
    %cst_33 = arith.constant 5.000000e-01 : f32
    %66 = vector.broadcast %cst_33 : f32 to vector<40x256xf32>
    %67 = arith.mulf %66, %63 : vector<40x256xf32>
    %68 = math.tanh %67 : vector<40x256xf32>
    %cst_34 = arith.constant 1.000000e+00 : f32
    %69 = vector.broadcast %cst_34 : f32 to vector<40x256xf32>
    %70 = arith.addf %69, %68 : vector<40x256xf32>
    %71 = arith.mulf %65, %70 : vector<40x256xf32>
    %c3 = arith.constant 3 : index
    %c0_35 = arith.constant 0 : index
    %c0_36 = arith.constant 0 : index
    %72 = vector.load %arg4[%c3, %c0_35, %c0_36] : memref<9x40x40xbf16, #tpu.memory_space<vmem>>, vector<1x40x40xbf16>
    %73 = vector.shape_cast %72 : vector<1x40x40xbf16> to vector<40x40xbf16>
    %c3_37 = arith.constant 3 : index
    %c0_38 = arith.constant 0 : index
    %c0_39 = arith.constant 0 : index
    %74 = vector.load %arg5[%c3_37, %c0_38, %c0_39] : memref<9x40x1xf32, #tpu.memory_space<vmem>>, vector<1x40x1xf32>
    %75 = vector.shape_cast %74 : vector<1x40x1xf32> to vector<40x1xf32>
    %76 = arith.truncf %71 : vector<40x256xf32> to vector<40x256xbf16>
    %cst_40 = arith.constant dense<0.000000e+00> : vector<40x256xf32>
    %77 = tpu.matmul %73, %76, %cst_40 {dimension_numbers = #tpu.dot_dimension_numbers<[1], [0], [0], [1], [0, 0, 1, 1], [], []>} : vector<40x40xbf16>, vector<40x256xbf16>, vector<40x256xf32> -> vector<40x256xf32>
    %78 = vector.broadcast %75 : vector<40x1xf32> to vector<40x256xf32>
    %79 = arith.addf %77, %78 : vector<40x256xf32>
    %cst_41 = arith.constant 5.000000e-01 : f32
    %80 = vector.broadcast %cst_41 : f32 to vector<40x256xf32>
    %81 = arith.mulf %80, %79 : vector<40x256xf32>
    %cst_42 = arith.constant 5.000000e-01 : f32
    %82 = vector.broadcast %cst_42 : f32 to vector<40x256xf32>
    %83 = arith.mulf %82, %79 : vector<40x256xf32>
    %84 = math.tanh %83 : vector<40x256xf32>
    %cst_43 = arith.constant 1.000000e+00 : f32
    %85 = vector.broadcast %cst_43 : f32 to vector<40x256xf32>
    %86 = arith.addf %85, %84 : vector<40x256xf32>
    %87 = arith.mulf %81, %86 : vector<40x256xf32>
    %c4 = arith.constant 4 : index
    %c0_44 = arith.constant 0 : index
    %c0_45 = arith.constant 0 : index
    %88 = vector.load %arg4[%c4, %c0_44, %c0_45] : memref<9x40x40xbf16, #tpu.memory_space<vmem>>, vector<1x40x40xbf16>
    %89 = vector.shape_cast %88 : vector<1x40x40xbf16> to vector<40x40xbf16>
    %c4_46 = arith.constant 4 : index
    %c0_47 = arith.constant 0 : index
    %c0_48 = arith.constant 0 : index
    %90 = vector.load %arg5[%c4_46, %c0_47, %c0_48] : memref<9x40x1xf32, #tpu.memory_space<vmem>>, vector<1x40x1xf32>
    %91 = vector.shape_cast %90 : vector<1x40x1xf32> to vector<40x1xf32>
    %92 = arith.truncf %87 : vector<40x256xf32> to vector<40x256xbf16>
    %cst_49 = arith.constant dense<0.000000e+00> : vector<40x256xf32>
    %93 = tpu.matmul %89, %92, %cst_49 {dimension_numbers = #tpu.dot_dimension_numbers<[1], [0], [0], [1], [0, 0, 1, 1], [], []>} : vector<40x40xbf16>, vector<40x256xbf16>, vector<40x256xf32> -> vector<40x256xf32>
    %94 = vector.broadcast %91 : vector<40x1xf32> to vector<40x256xf32>
    %95 = arith.addf %93, %94 : vector<40x256xf32>
    %cst_50 = arith.constant 5.000000e-01 : f32
    %96 = vector.broadcast %cst_50 : f32 to vector<40x256xf32>
    %97 = arith.mulf %96, %95 : vector<40x256xf32>
    %cst_51 = arith.constant 5.000000e-01 : f32
    %98 = vector.broadcast %cst_51 : f32 to vector<40x256xf32>
    %99 = arith.mulf %98, %95 : vector<40x256xf32>
    %100 = math.tanh %99 : vector<40x256xf32>
    %cst_52 = arith.constant 1.000000e+00 : f32
    %101 = vector.broadcast %cst_52 : f32 to vector<40x256xf32>
    %102 = arith.addf %101, %100 : vector<40x256xf32>
    %103 = arith.mulf %97, %102 : vector<40x256xf32>
    %c5 = arith.constant 5 : index
    %c0_53 = arith.constant 0 : index
    %c0_54 = arith.constant 0 : index
    %104 = vector.load %arg4[%c5, %c0_53, %c0_54] : memref<9x40x40xbf16, #tpu.memory_space<vmem>>, vector<1x40x40xbf16>
    %105 = vector.shape_cast %104 : vector<1x40x40xbf16> to vector<40x40xbf16>
    %c5_55 = arith.constant 5 : index
    %c0_56 = arith.constant 0 : index
    %c0_57 = arith.constant 0 : index
    %106 = vector.load %arg5[%c5_55, %c0_56, %c0_57] : memref<9x40x1xf32, #tpu.memory_space<vmem>>, vector<1x40x1xf32>
    %107 = vector.shape_cast %106 : vector<1x40x1xf32> to vector<40x1xf32>
    %108 = arith.truncf %103 : vector<40x256xf32> to vector<40x256xbf16>
    %cst_58 = arith.constant dense<0.000000e+00> : vector<40x256xf32>
    %109 = tpu.matmul %105, %108, %cst_58 {dimension_numbers = #tpu.dot_dimension_numbers<[1], [0], [0], [1], [0, 0, 1, 1], [], []>} : vector<40x40xbf16>, vector<40x256xbf16>, vector<40x256xf32> -> vector<40x256xf32>
    %110 = vector.broadcast %107 : vector<40x1xf32> to vector<40x256xf32>
    %111 = arith.addf %109, %110 : vector<40x256xf32>
    %cst_59 = arith.constant 5.000000e-01 : f32
    %112 = vector.broadcast %cst_59 : f32 to vector<40x256xf32>
    %113 = arith.mulf %112, %111 : vector<40x256xf32>
    %cst_60 = arith.constant 5.000000e-01 : f32
    %114 = vector.broadcast %cst_60 : f32 to vector<40x256xf32>
    %115 = arith.mulf %114, %111 : vector<40x256xf32>
    %116 = math.tanh %115 : vector<40x256xf32>
    %cst_61 = arith.constant 1.000000e+00 : f32
    %117 = vector.broadcast %cst_61 : f32 to vector<40x256xf32>
    %118 = arith.addf %117, %116 : vector<40x256xf32>
    %119 = arith.mulf %113, %118 : vector<40x256xf32>
    %c6 = arith.constant 6 : index
    %c0_62 = arith.constant 0 : index
    %c0_63 = arith.constant 0 : index
    %120 = vector.load %arg4[%c6, %c0_62, %c0_63] : memref<9x40x40xbf16, #tpu.memory_space<vmem>>, vector<1x40x40xbf16>
    %121 = vector.shape_cast %120 : vector<1x40x40xbf16> to vector<40x40xbf16>
    %c6_64 = arith.constant 6 : index
    %c0_65 = arith.constant 0 : index
    %c0_66 = arith.constant 0 : index
    %122 = vector.load %arg5[%c6_64, %c0_65, %c0_66] : memref<9x40x1xf32, #tpu.memory_space<vmem>>, vector<1x40x1xf32>
    %123 = vector.shape_cast %122 : vector<1x40x1xf32> to vector<40x1xf32>
    %124 = arith.truncf %119 : vector<40x256xf32> to vector<40x256xbf16>
    %cst_67 = arith.constant dense<0.000000e+00> : vector<40x256xf32>
    %125 = tpu.matmul %121, %124, %cst_67 {dimension_numbers = #tpu.dot_dimension_numbers<[1], [0], [0], [1], [0, 0, 1, 1], [], []>} : vector<40x40xbf16>, vector<40x256xbf16>, vector<40x256xf32> -> vector<40x256xf32>
    %126 = vector.broadcast %123 : vector<40x1xf32> to vector<40x256xf32>
    %127 = arith.addf %125, %126 : vector<40x256xf32>
    %cst_68 = arith.constant 5.000000e-01 : f32
    %128 = vector.broadcast %cst_68 : f32 to vector<40x256xf32>
    %129 = arith.mulf %128, %127 : vector<40x256xf32>
    %cst_69 = arith.constant 5.000000e-01 : f32
    %130 = vector.broadcast %cst_69 : f32 to vector<40x256xf32>
    %131 = arith.mulf %130, %127 : vector<40x256xf32>
    %132 = math.tanh %131 : vector<40x256xf32>
    %cst_70 = arith.constant 1.000000e+00 : f32
    %133 = vector.broadcast %cst_70 : f32 to vector<40x256xf32>
    %134 = arith.addf %133, %132 : vector<40x256xf32>
    %135 = arith.mulf %129, %134 : vector<40x256xf32>
    %c7 = arith.constant 7 : index
    %c0_71 = arith.constant 0 : index
    %c0_72 = arith.constant 0 : index
    %136 = vector.load %arg4[%c7, %c0_71, %c0_72] : memref<9x40x40xbf16, #tpu.memory_space<vmem>>, vector<1x40x40xbf16>
    %137 = vector.shape_cast %136 : vector<1x40x40xbf16> to vector<40x40xbf16>
    %c7_73 = arith.constant 7 : index
    %c0_74 = arith.constant 0 : index
    %c0_75 = arith.constant 0 : index
    %138 = vector.load %arg5[%c7_73, %c0_74, %c0_75] : memref<9x40x1xf32, #tpu.memory_space<vmem>>, vector<1x40x1xf32>
    %139 = vector.shape_cast %138 : vector<1x40x1xf32> to vector<40x1xf32>
    %140 = arith.truncf %135 : vector<40x256xf32> to vector<40x256xbf16>
    %cst_76 = arith.constant dense<0.000000e+00> : vector<40x256xf32>
    %141 = tpu.matmul %137, %140, %cst_76 {dimension_numbers = #tpu.dot_dimension_numbers<[1], [0], [0], [1], [0, 0, 1, 1], [], []>} : vector<40x40xbf16>, vector<40x256xbf16>, vector<40x256xf32> -> vector<40x256xf32>
    %142 = vector.broadcast %139 : vector<40x1xf32> to vector<40x256xf32>
    %143 = arith.addf %141, %142 : vector<40x256xf32>
    %cst_77 = arith.constant 5.000000e-01 : f32
    %144 = vector.broadcast %cst_77 : f32 to vector<40x256xf32>
    %145 = arith.mulf %144, %143 : vector<40x256xf32>
    %cst_78 = arith.constant 5.000000e-01 : f32
    %146 = vector.broadcast %cst_78 : f32 to vector<40x256xf32>
    %147 = arith.mulf %146, %143 : vector<40x256xf32>
    %148 = math.tanh %147 : vector<40x256xf32>
    %cst_79 = arith.constant 1.000000e+00 : f32
    %149 = vector.broadcast %cst_79 : f32 to vector<40x256xf32>
    %150 = arith.addf %149, %148 : vector<40x256xf32>
    %151 = arith.mulf %145, %150 : vector<40x256xf32>
    %c8 = arith.constant 8 : index
    %c0_80 = arith.constant 0 : index
    %c0_81 = arith.constant 0 : index
    %152 = vector.load %arg4[%c8, %c0_80, %c0_81] : memref<9x40x40xbf16, #tpu.memory_space<vmem>>, vector<1x40x40xbf16>
    %153 = vector.shape_cast %152 : vector<1x40x40xbf16> to vector<40x40xbf16>
    %c8_82 = arith.constant 8 : index
    %c0_83 = arith.constant 0 : index
    %c0_84 = arith.constant 0 : index
    %154 = vector.load %arg5[%c8_82, %c0_83, %c0_84] : memref<9x40x1xf32, #tpu.memory_space<vmem>>, vector<1x40x1xf32>
    %155 = vector.shape_cast %154 : vector<1x40x1xf32> to vector<40x1xf32>
    %156 = arith.truncf %151 : vector<40x256xf32> to vector<40x256xbf16>
    %cst_85 = arith.constant dense<0.000000e+00> : vector<40x256xf32>
    %157 = tpu.matmul %153, %156, %cst_85 {dimension_numbers = #tpu.dot_dimension_numbers<[1], [0], [0], [1], [0, 0, 1, 1], [], []>} : vector<40x40xbf16>, vector<40x256xbf16>, vector<40x256xf32> -> vector<40x256xf32>
    %158 = vector.broadcast %155 : vector<40x1xf32> to vector<40x256xf32>
    %159 = arith.addf %157, %158 : vector<40x256xf32>
    %cst_86 = arith.constant 5.000000e-01 : f32
    %160 = vector.broadcast %cst_86 : f32 to vector<40x256xf32>
    %161 = arith.mulf %160, %159 : vector<40x256xf32>
    %cst_87 = arith.constant 5.000000e-01 : f32
    %162 = vector.broadcast %cst_87 : f32 to vector<40x256xf32>
    %163 = arith.mulf %162, %159 : vector<40x256xf32>
    %164 = math.tanh %163 : vector<40x256xf32>
    %cst_88 = arith.constant 1.000000e+00 : f32
    %165 = vector.broadcast %cst_88 : f32 to vector<40x256xf32>
    %166 = arith.addf %165, %164 : vector<40x256xf32>
    %167 = arith.mulf %161, %166 : vector<40x256xf32>
    %c0_89 = arith.constant 0 : index
    %c0_90 = arith.constant 0 : index
    %168 = vector.load %arg6[%c0_89, %c0_90] : memref<1x40xbf16, #tpu.memory_space<vmem>>, vector<1x40xbf16>
    %169 = arith.truncf %167 : vector<40x256xf32> to vector<40x256xbf16>
    %cst_91 = arith.constant dense<0.000000e+00> : vector<1x256xf32>
    %170 = tpu.matmul %168, %169, %cst_91 {dimension_numbers = #tpu.dot_dimension_numbers<[1], [0], [0], [1], [0, 0, 1, 1], [], []>} : vector<1x40xbf16>, vector<40x256xbf16>, vector<1x256xf32> -> vector<1x256xf32>
    %c0_92 = arith.constant 0 : index
    %c0_93 = arith.constant 0 : index
    %171 = vector.load %arg7[%c0_92, %c0_93] : memref<1x1xf32, #tpu.memory_space<vmem>>, vector<1x1xf32>
    %172 = vector.broadcast %171 : vector<1x1xf32> to vector<1x256xf32>
    %173 = arith.addf %170, %172 : vector<1x256xf32>
    %c0_94 = arith.constant 0 : index
    %c0_95 = arith.constant 0 : index
    %174 = vector.load %arg8[%c0_94, %c0_95] : memref<1x256xf32, #tpu.memory_space<vmem>>, vector<1x256xf32>
    tpu.vector_store %arg8[%c0_94, %c0_95], %173 {strides = array<i32>} : memref<1x256xf32, #tpu.memory_space<vmem>>, vector<1x256xf32>,
    return
  }
  func.func @transform_0(%arg0: i32) -> (i32, i32) {
    %c0_i32 = arith.constant 0 : i32
    %c0_i32_0 = arith.constant 0 : i32
    return %c0_i32, %arg0 : i32, i32
  }
  func.func @transform_1(%arg0: i32) -> (i32, i32) {
    %c0_i32 = arith.constant 0 : i32
    %c0_i32_0 = arith.constant 0 : i32
    %c0_i32_1 = arith.constant 0 : i32
    return %c0_i32, %c0_i32_0 : i32, i32
  }
  func.func @transform_2(%arg0: i32) -> (i32, i32) {
    %c0_i32 = arith.constant 0 : i32
    %c0_i32_0 = arith.constant 0 : i32
    %c0_i32_1 = arith.constant 0 : i32
    return %c0_i32, %c0_i32_0 : i32, i32
  }
  func.func @transform_3(%arg0: i32) -> (i32, i32, i32) {
    %c0_i32 = arith.constant 0 : i32
    %c0_i32_0 = arith.constant 0 : i32
    %c0_i32_1 = arith.constant 0 : i32
    %c0_i32_2 = arith.constant 0 : i32
    return %c0_i32, %c0_i32_0, %c0_i32_1 : i32, i32, i32
  }
  func.func @transform_4(%arg0: i32) -> (i32, i32, i32) {
    %c0_i32 = arith.constant 0 : i32
    %c0_i32_0 = arith.constant 0 : i32
    %c0_i32_1 = arith.constant 0 : i32
    %c0_i32_2 = arith.constant 0 : i32
    return %c0_i32, %c0_i32_0, %c0_i32_1 : i32, i32, i32
  }
  func.func @transform_5(%arg0: i32) -> (i32, i32) {
    %c0_i32 = arith.constant 0 : i32
    %c0_i32_0 = arith.constant 0 : i32
    %c0_i32_1 = arith.constant 0 : i32
    return %c0_i32, %c0_i32_0 : i32, i32
  }
  func.func @transform_6(%arg0: i32) -> (i32, i32) {
    %c0_i32 = arith.constant 0 : i32
    %c0_i32_0 = arith.constant 0 : i32
    %c0_i32_1 = arith.constant 0 : i32
    return %c0_i32, %c0_i32_0 : i32, i32
  }
  func.func @transform_7(%arg0: i32) -> (i32, i32) {
    %c0_i32 = arith.constant 0 : i32
    %c0_i32_0 = arith.constant 0 : i32
    return %c0_i32, %arg0 : i32, i32
  }
}

module attributes {stable_mosaic.version = 11 : i64} {
  func.func @pinn_p_kernel(%arg0: i32, %arg1: memref<2x256xf32, #tpu.memory_space<vmem>>, %arg2: memref<40x2xf32, #tpu.memory_space<vmem>>, %arg3: memref<40x1xf32, #tpu.memory_space<vmem>>, %arg4: memref<9x40x40xbf16, #tpu.memory_space<vmem>>, %arg5: memref<9x40x1xf32, #tpu.memory_space<vmem>>, %arg6: memref<1x40xbf16, #tpu.memory_space<vmem>>, %arg7: memref<1x1xf32, #tpu.memory_space<vmem>>, %arg8: memref<1x256xf32, #tpu.memory_space<vmem>>) attributes {dimension_semantics = [#tpu.dimension_semantics<parallel>], iteration_bounds = array<i64: 1>, scalar_prefetch = 0 : i64, scratch_operands = 0 : i64, tpu.core_type = #tpu.core_type<tc>, window_params = [{transform_indices = @transform_0, window_bounds = array<i64: 2, 256>}, {pipeline_mode = #tpu.pipeline_mode<synchronous>, transform_indices = @transform_1, window_bounds = array<i64: 40, 2>}, {pipeline_mode = #tpu.pipeline_mode<synchronous>, transform_indices = @transform_2, window_bounds = array<i64: 40, 1>}, {pipeline_mode = #tpu.pipeline_mode<synchronous>, transform_indices = @transform_3, window_bounds = array<i64: 9, 40, 40>}, {pipeline_mode = #tpu.pipeline_mode<synchronous>, transform_indices = @transform_4, window_bounds = array<i64: 9, 40, 1>}, {pipeline_mode = #tpu.pipeline_mode<synchronous>, transform_indices = @transform_5, window_bounds = array<i64: 1, 40>}, {pipeline_mode = #tpu.pipeline_mode<synchronous>, transform_indices = @transform_6, window_bounds = array<i64: 1, 1>}, {transform_indices = @transform_7, window_bounds = array<i64: 1, 256>}]} {
    %c0 = arith.constant 0 : index
    %c0_0 = arith.constant 0 : index
    %0 = vector.load %arg1[%c0, %c0_0] : memref<2x256xf32, #tpu.memory_space<vmem>>, vector<2x256xf32>
    %c0_1 = arith.constant 0 : index
    %c0_2 = arith.constant 0 : index
    %1 = vector.load %arg2[%c0_1, %c0_2] : memref<40x2xf32, #tpu.memory_space<vmem>>, vector<40x2xf32>
    %2 = vector.extract_strided_slice %1 {offsets = [0, 0], sizes = [40, 1], strides = [1, 1]} : vector<40x2xf32> to vector<40x1xf32>
    %3 = vector.extract_strided_slice %0 {offsets = [0, 0], sizes = [1, 256], strides = [1, 1]} : vector<2x256xf32> to vector<1x256xf32>
    %4 = vector.broadcast %2 : vector<40x1xf32> to vector<40x256xf32>
    %5 = vector.broadcast %3 : vector<1x256xf32> to vector<40x256xf32>
    %6 = arith.mulf %4, %5 : vector<40x256xf32>
    %7 = vector.extract_strided_slice %1 {offsets = [0, 1], sizes = [40, 1], strides = [1, 1]} : vector<40x2xf32> to vector<40x1xf32>
    %8 = vector.extract_strided_slice %0 {offsets = [1, 0], sizes = [1, 256], strides = [1, 1]} : vector<2x256xf32> to vector<1x256xf32>
    %9 = vector.broadcast %7 : vector<40x1xf32> to vector<40x256xf32>
    %10 = vector.broadcast %8 : vector<1x256xf32> to vector<40x256xf32>
    %11 = arith.mulf %9, %10 : vector<40x256xf32>
    %12 = arith.addf %6, %11 : vector<40x256xf32>
    %c0_3 = arith.constant 0 : index
    %c0_4 = arith.constant 0 : index
    %13 = vector.load %arg3[%c0_3, %c0_4] : memref<40x1xf32, #tpu.memory_space<vmem>>, vector<40x1xf32>
    %14 = vector.broadcast %13 : vector<40x1xf32> to vector<40x256xf32>
    %15 = arith.addf %12, %14 : vector<40x256xf32>
    %cst = arith.constant 5.000000e-01 : f32
    %16 = vector.broadcast %cst : f32 to vector<40x256xf32>
    %17 = arith.mulf %16, %15 : vector<40x256xf32>
    %cst_5 = arith.constant 5.000000e-01 : f32
    %18 = vector.broadcast %cst_5 : f32 to vector<40x256xf32>
    %19 = arith.mulf %18, %15 : vector<40x256xf32>
    %20 = math.tanh %19 : vector<40x256xf32>
    %cst_6 = arith.constant 1.000000e+00 : f32
    %21 = vector.broadcast %cst_6 : f32 to vector<40x256xf32>
    %22 = arith.addf %21, %20 : vector<40x256xf32>
    %23 = arith.mulf %17, %22 : vector<40x256xf32>
    %c0_7 = arith.constant 0 : index
    %c0_8 = arith.constant 0 : index
    %c0_9 = arith.constant 0 : index
    %24 = vector.load %arg4[%c0_7, %c0_8, %c0_9] : memref<9x40x40xbf16, #tpu.memory_space<vmem>>, vector<1x40x40xbf16>
    %25 = vector.shape_cast %24 : vector<1x40x40xbf16> to vector<40x40xbf16>
    %c0_10 = arith.constant 0 : index
    %c0_11 = arith.constant 0 : index
    %c0_12 = arith.constant 0 : index
    %26 = vector.load %arg5[%c0_10, %c0_11, %c0_12] : memref<9x40x1xf32, #tpu.memory_space<vmem>>, vector<1x40x1xf32>
    %27 = vector.shape_cast %26 : vector<1x40x1xf32> to vector<40x1xf32>
    %28 = arith.truncf %23 : vector<40x256xf32> to vector<40x256xbf16>
    %cst_13 = arith.constant dense<0.000000e+00> : vector<40x256xf32>
    %29 = tpu.matmul %25, %28, %cst_13 {dimension_numbers = #tpu.dot_dimension_numbers<[1], [0], [0], [1], [0, 0, 1, 1], [], []>} : vector<40x40xbf16>, vector<40x256xbf16>, vector<40x256xf32> -> vector<40x256xf32>
    %30 = vector.broadcast %27 : vector<40x1xf32> to vector<40x256xf32>
    %31 = arith.addf %29, %30 : vector<40x256xf32>
    %cst_14 = arith.constant 5.000000e-01 : f32
    %32 = vector.broadcast %cst_14 : f32 to vector<40x256xf32>
    %33 = arith.mulf %32, %31 : vector<40x256xf32>
    %cst_15 = arith.constant 5.000000e-01 : f32
    %34 = vector.broadcast %cst_15 : f32 to vector<40x256xf32>
    %35 = arith.mulf %34, %31 : vector<40x256xf32>
    %36 = math.tanh %35 : vector<40x256xf32>
    %cst_16 = arith.constant 1.000000e+00 : f32
    %37 = vector.broadcast %cst_16 : f32 to vector<40x256xf32>
    %38 = arith.addf %37, %36 : vector<40x256xf32>
    %39 = arith.mulf %33, %38 : vector<40x256xf32>
    %c1 = arith.constant 1 : index
    %c0_17 = arith.constant 0 : index
    %c0_18 = arith.constant 0 : index
    %40 = vector.load %arg4[%c1, %c0_17, %c0_18] : memref<9x40x40xbf16, #tpu.memory_space<vmem>>, vector<1x40x40xbf16>
    %41 = vector.shape_cast %40 : vector<1x40x40xbf16> to vector<40x40xbf16>
    %c1_19 = arith.constant 1 : index
    %c0_20 = arith.constant 0 : index
    %c0_21 = arith.constant 0 : index
    %42 = vector.load %arg5[%c1_19, %c0_20, %c0_21] : memref<9x40x1xf32, #tpu.memory_space<vmem>>, vector<1x40x1xf32>
    %43 = vector.shape_cast %42 : vector<1x40x1xf32> to vector<40x1xf32>
    %44 = arith.truncf %39 : vector<40x256xf32> to vector<40x256xbf16>
    %cst_22 = arith.constant dense<0.000000e+00> : vector<40x256xf32>
    %45 = tpu.matmul %41, %44, %cst_22 {dimension_numbers = #tpu.dot_dimension_numbers<[1], [0], [0], [1], [0, 0, 1, 1], [], []>} : vector<40x40xbf16>, vector<40x256xbf16>, vector<40x256xf32> -> vector<40x256xf32>
    %46 = vector.broadcast %43 : vector<40x1xf32> to vector<40x256xf32>
    %47 = arith.addf %45, %46 : vector<40x256xf32>
    %cst_23 = arith.constant 5.000000e-01 : f32
    %48 = vector.broadcast %cst_23 : f32 to vector<40x256xf32>
    %49 = arith.mulf %48, %47 : vector<40x256xf32>
    %cst_24 = arith.constant 5.000000e-01 : f32
    %50 = vector.broadcast %cst_24 : f32 to vector<40x256xf32>
    %51 = arith.mulf %50, %47 : vector<40x256xf32>
    %52 = math.tanh %51 : vector<40x256xf32>
    %cst_25 = arith.constant 1.000000e+00 : f32
    %53 = vector.broadcast %cst_25 : f32 to vector<40x256xf32>
    %54 = arith.addf %53, %52 : vector<40x256xf32>
    %55 = arith.mulf %49, %54 : vector<40x256xf32>
    %c2 = arith.constant 2 : index
    %c0_26 = arith.constant 0 : index
    %c0_27 = arith.constant 0 : index
    %56 = vector.load %arg4[%c2, %c0_26, %c0_27] : memref<9x40x40xbf16, #tpu.memory_space<vmem>>, vector<1x40x40xbf16>
    %57 = vector.shape_cast %56 : vector<1x40x40xbf16> to vector<40x40xbf16>
    %c2_28 = arith.constant 2 : index
    %c0_29 = arith.constant 0 : index
    %c0_30 = arith.constant 0 : index
    %58 = vector.load %arg5[%c2_28, %c0_29, %c0_30] : memref<9x40x1xf32, #tpu.memory_space<vmem>>, vector<1x40x1xf32>
    %59 = vector.shape_cast %58 : vector<1x40x1xf32> to vector<40x1xf32>
    %60 = arith.truncf %55 : vector<40x256xf32> to vector<40x256xbf16>
    %cst_31 = arith.constant dense<0.000000e+00> : vector<40x256xf32>
    %61 = tpu.matmul %57, %60, %cst_31 {dimension_numbers = #tpu.dot_dimension_numbers<[1], [0], [0], [1], [0, 0, 1, 1], [], []>} : vector<40x40xbf16>, vector<40x256xbf16>, vector<40x256xf32> -> vector<40x256xf32>
    %62 = vector.broadcast %59 : vector<40x1xf32> to vector<40x256xf32>
    %63 = arith.addf %61, %62 : vector<40x256xf32>
    %cst_32 = arith.constant 5.000000e-01 : f32
    %64 = vector.broadcast %cst_32 : f32 to vector<40x256xf32>
    %65 = arith.mulf %64, %63 : vector<40x256xf32>
    %cst_33 = arith.constant 5.000000e-01 : f32
    %66 = vector.broadcast %cst_33 : f32 to vector<40x256xf32>
    %67 = arith.mulf %66, %63 : vector<40x256xf32>
    %68 = math.tanh %67 : vector<40x256xf32>
    %cst_34 = arith.constant 1.000000e+00 : f32
    %69 = vector.broadcast %cst_34 : f32 to vector<40x256xf32>
    %70 = arith.addf %69, %68 : vector<40x256xf32>
    %71 = arith.mulf %65, %70 : vector<40x256xf32>
    %c3 = arith.constant 3 : index
    %c0_35 = arith.constant 0 : index
    %c0_36 = arith.constant 0 : index
    %72 = vector.load %arg4[%c3, %c0_35, %c0_36] : memref<9x40x40xbf16, #tpu.memory_space<vmem>>, vector<1x40x40xbf16>
    %73 = vector.shape_cast %72 : vector<1x40x40xbf16> to vector<40x40xbf16>
    %c3_37 = arith.constant 3 : index
    %c0_38 = arith.constant 0 : index
    %c0_39 = arith.constant 0 : index
    %74 = vector.load %arg5[%c3_37, %c0_38, %c0_39] : memref<9x40x1xf32, #tpu.memory_space<vmem>>, vector<1x40x1xf32>
    %75 = vector.shape_cast %74 : vector<1x40x1xf32> to vector<40x1xf32>
    %76 = arith.truncf %71 : vector<40x256xf32> to vector<40x256xbf16>
    %cst_40 = arith.constant dense<0.000000e+00> : vector<40x256xf32>
    %77 = tpu.matmul %73, %76, %cst_40 {dimension_numbers = #tpu.dot_dimension_numbers<[1], [0], [0], [1], [0, 0, 1, 1], [], []>} : vector<40x40xbf16>, vector<40x256xbf16>, vector<40x256xf32> -> vector<40x256xf32>
    %78 = vector.broadcast %75 : vector<40x1xf32> to vector<40x256xf32>
    %79 = arith.addf %77, %78 : vector<40x256xf32>
    %cst_41 = arith.constant 5.000000e-01 : f32
    %80 = vector.broadcast %cst_41 : f32 to vector<40x256xf32>
    %81 = arith.mulf %80, %79 : vector<40x256xf32>
    %cst_42 = arith.constant 5.000000e-01 : f32
    %82 = vector.broadcast %cst_42 : f32 to vector<40x256xf32>
    %83 = arith.mulf %82, %79 : vector<40x256xf32>
    %84 = math.tanh %83 : vector<40x256xf32>
    %cst_43 = arith.constant 1.000000e+00 : f32
    %85 = vector.broadcast %cst_43 : f32 to vector<40x256xf32>
    %86 = arith.addf %85, %84 : vector<40x256xf32>
    %87 = arith.mulf %81, %86 : vector<40x256xf32>
    %c4 = arith.constant 4 : index
    %c0_44 = arith.constant 0 : index
    %c0_45 = arith.constant 0 : index
    %88 = vector.load %arg4[%c4, %c0_44, %c0_45] : memref<9x40x40xbf16, #tpu.memory_space<vmem>>, vector<1x40x40xbf16>
    %89 = vector.shape_cast %88 : vector<1x40x40xbf16> to vector<40x40xbf16>
    %c4_46 = arith.constant 4 : index
    %c0_47 = arith.constant 0 : index
    %c0_48 = arith.constant 0 : index
    %90 = vector.load %arg5[%c4_46, %c0_47, %c0_48] : memref<9x40x1xf32, #tpu.memory_space<vmem>>, vector<1x40x1xf32>
    %91 = vector.shape_cast %90 : vector<1x40x1xf32> to vector<40x1xf32>
    %92 = arith.truncf %87 : vector<40x256xf32> to vector<40x256xbf16>
    %cst_49 = arith.constant dense<0.000000e+00> : vector<40x256xf32>
    %93 = tpu.matmul %89, %92, %cst_49 {dimension_numbers = #tpu.dot_dimension_numbers<[1], [0], [0], [1], [0, 0, 1, 1], [], []>} : vector<40x40xbf16>, vector<40x256xbf16>, vector<40x256xf32> -> vector<40x256xf32>
    %94 = vector.broadcast %91 : vector<40x1xf32> to vector<40x256xf32>
    %95 = arith.addf %93, %94 : vector<40x256xf32>
    %cst_50 = arith.constant 5.000000e-01 : f32
    %96 = vector.broadcast %cst_50 : f32 to vector<40x256xf32>
    %97 = arith.mulf %96, %95 : vector<40x256xf32>
    %cst_51 = arith.constant 5.000000e-01 : f32
    %98 = vector.broadcast %cst_51 : f32 to vector<40x256xf32>
    %99 = arith.mulf %98, %95 : vector<40x256xf32>
    %100 = math.tanh %99 : vector<40x256xf32>
    %cst_52 = arith.constant 1.000000e+00 : f32
    %101 = vector.broadcast %cst_52 : f32 to vector<40x256xf32>
    %102 = arith.addf %101, %100 : vector<40x256xf32>
    %103 = arith.mulf %97, %102 : vector<40x256xf32>
    %c5 = arith.constant 5 : index
    %c0_53 = arith.constant 0 : index
    %c0_54 = arith.constant 0 : index
    %104 = vector.load %arg4[%c5, %c0_53, %c0_54] : memref<9x40x40xbf16, #tpu.memory_space<vmem>>, vector<1x40x40xbf16>
    %105 = vector.shape_cast %104 : vector<1x40x40xbf16> to vector<40x40xbf16>
    %c5_55 = arith.constant 5 : index
    %c0_56 = arith.constant 0 : index
    %c0_57 = arith.constant 0 : index
    %106 = vector.load %arg5[%c5_55, %c0_56, %c0_57] : memref<9x40x1xf32, #tpu.memory_space<vmem>>, vector<1x40x1xf32>
    %107 = vector.shape_cast %106 : vector<1x40x1xf32> to vector<40x1xf32>
    %108 = arith.truncf %103 : vector<40x256xf32> to vector<40x256xbf16>
    %cst_58 = arith.constant dense<0.000000e+00> : vector<40x256xf32>
    %109 = tpu.matmul %105, %108, %cst_58 {dimension_numbers = #tpu.dot_dimension_numbers<[1], [0], [0], [1], [0, 0, 1, 1], [], []>} : vector<40x40xbf16>, vector<40x256xbf16>, vector<40x256xf32> -> vector<40x256xf32>
    %110 = vector.broadcast %107 : vector<40x1xf32> to vector<40x256xf32>
    %111 = arith.addf %109, %110 : vector<40x256xf32>
    %cst_59 = arith.constant 5.000000e-01 : f32
    %112 = vector.broadcast %cst_59 : f32 to vector<40x256xf32>
    %113 = arith.mulf %112, %111 : vector<40x256xf32>
    %cst_60 = arith.constant 5.000000e-01 : f32
    %114 = vector.broadcast %cst_60 : f32 to vector<40x256xf32>
    %115 = arith.mulf %114, %111 : vector<40x256xf32>
    %116 = math.tanh %115 : vector<40x256xf32>
    %cst_61 = arith.constant 1.000000e+00 : f32
    %117 = vector.broadcast %cst_61 : f32 to vector<40x256xf32>
    %118 = arith.addf %117, %116 : vector<40x256xf32>
    %119 = arith.mulf %113, %118 : vector<40x256xf32>
    %c6 = arith.constant 6 : index
    %c0_62 = arith.constant 0 : index
    %c0_63 = arith.constant 0 : index
    %120 = vector.load %arg4[%c6, %c0_62, %c0_63] : memref<9x40x40xbf16, #tpu.memory_space<vmem>>, vector<1x40x40xbf16>
    %121 = vector.shape_cast %120 : vector<1x40x40xbf16> to vector<40x40xbf16>
    %c6_64 = arith.constant 6 : index
    %c0_65 = arith.constant 0 : index
    %c0_66 = arith.constant 0 : index
    %122 = vector.load %arg5[%c6_64, %c0_65, %c0_66] : memref<9x40x1xf32, #tpu.memory_space<vmem>>, vector<1x40x1xf32>
    %123 = vector.shape_cast %122 : vector<1x40x1xf32> to vector<40x1xf32>
    %124 = arith.truncf %119 : vector<40x256xf32> to vector<40x256xbf16>
    %cst_67 = arith.constant dense<0.000000e+00> : vector<40x256xf32>
    %125 = tpu.matmul %121, %124, %cst_67 {dimension_numbers = #tpu.dot_dimension_numbers<[1], [0], [0], [1], [0, 0, 1, 1], [], []>} : vector<40x40xbf16>, vector<40x256xbf16>, vector<40x256xf32> -> vector<40x256xf32>
    %126 = vector.broadcast %123 : vector<40x1xf32> to vector<40x256xf32>
    %127 = arith.addf %125, %126 : vector<40x256xf32>
    %cst_68 = arith.constant 5.000000e-01 : f32
    %128 = vector.broadcast %cst_68 : f32 to vector<40x256xf32>
    %129 = arith.mulf %128, %127 : vector<40x256xf32>
    %cst_69 = arith.constant 5.000000e-01 : f32
    %130 = vector.broadcast %cst_69 : f32 to vector<40x256xf32>
    %131 = arith.mulf %130, %127 : vector<40x256xf32>
    %132 = math.tanh %131 : vector<40x256xf32>
    %cst_70 = arith.constant 1.000000e+00 : f32
    %133 = vector.broadcast %cst_70 : f32 to vector<40x256xf32>
    %134 = arith.addf %133, %132 : vector<40x256xf32>
    %135 = arith.mulf %129, %134 : vector<40x256xf32>
    %c7 = arith.constant 7 : index
    %c0_71 = arith.constant 0 : index
    %c0_72 = arith.constant 0 : index
    %136 = vector.load %arg4[%c7, %c0_71, %c0_72] : memref<9x40x40xbf16, #tpu.memory_space<vmem>>, vector<1x40x40xbf16>
    %137 = vector.shape_cast %136 : vector<1x40x40xbf16> to vector<40x40xbf16>
    %c7_73 = arith.constant 7 : index
    %c0_74 = arith.constant 0 : index
    %c0_75 = arith.constant 0 : index
    %138 = vector.load %arg5[%c7_73, %c0_74, %c0_75] : memref<9x40x1xf32, #tpu.memory_space<vmem>>, vector<1x40x1xf32>
    %139 = vector.shape_cast %138 : vector<1x40x1xf32> to vector<40x1xf32>
    %140 = arith.truncf %135 : vector<40x256xf32> to vector<40x256xbf16>
    %cst_76 = arith.constant dense<0.000000e+00> : vector<40x256xf32>
    %141 = tpu.matmul %137, %140, %cst_76 {dimension_numbers = #tpu.dot_dimension_numbers<[1], [0], [0], [1], [0, 0, 1, 1], [], []>} : vector<40x40xbf16>, vector<40x256xbf16>, vector<40x256xf32> -> vector<40x256xf32>
    %142 = vector.broadcast %139 : vector<40x1xf32> to vector<40x256xf32>
    %143 = arith.addf %141, %142 : vector<40x256xf32>
    %cst_77 = arith.constant 5.000000e-01 : f32
    %144 = vector.broadcast %cst_77 : f32 to vector<40x256xf32>
    %145 = arith.mulf %144, %143 : vector<40x256xf32>
    %cst_78 = arith.constant 5.000000e-01 : f32
    %146 = vector.broadcast %cst_78 : f32 to vector<40x256xf32>
    %147 = arith.mulf %146, %143 : vector<40x256xf32>
    %148 = math.tanh %147 : vector<40x256xf32>
    %cst_79 = arith.constant 1.000000e+00 : f32
    %149 = vector.broadcast %cst_79 : f32 to vector<40x256xf32>
    %150 = arith.addf %149, %148 : vector<40x256xf32>
    %151 = arith.mulf %145, %150 : vector<40x256xf32>
    %c8 = arith.constant 8 : index
    %c0_80 = arith.constant 0 : index
    %c0_81 = arith.constant 0 : index
    %152 = vector.load %arg4[%c8, %c0_80, %c0_81] : memref<9x40x40xbf16, #tpu.memory_space<vmem>>, vector<1x40x40xbf16>
    %153 = vector.shape_cast %152 : vector<1x40x40xbf16> to vector<40x40xbf16>
    %c8_82 = arith.constant 8 : index
    %c0_83 = arith.constant 0 : index
    %c0_84 = arith.constant 0 : index
    %154 = vector.load %arg5[%c8_82, %c0_83, %c0_84] : memref<9x40x1xf32, #tpu.memory_space<vmem>>, vector<1x40x1xf32>
    %155 = vector.shape_cast %154 : vector<1x40x1xf32> to vector<40x1xf32>
    %156 = arith.truncf %151 : vector<40x256xf32> to vector<40x256xbf16>
    %cst_85 = arith.constant dense<0.000000e+00> : vector<40x256xf32>
    %157 = tpu.matmul %153, %156, %cst_85 {dimension_numbers = #tpu.dot_dimension_numbers<[1], [0], [0], [1], [0, 0, 1, 1], [], []>} : vector<40x40xbf16>, vector<40x256xbf16>, vector<40x256xf32> -> vector<40x256xf32>
    %158 = vector.broadcast %155 : vector<40x1xf32> to vector<40x256xf32>
    %159 = arith.addf %157, %158 : vector<40x256xf32>
    %cst_86 = arith.constant 5.000000e-01 : f32
    %160 = vector.broadcast %cst_86 : f32 to vector<40x256xf32>
    %161 = arith.mulf %160, %159 : vector<40x256xf32>
    %cst_87 = arith.constant 5.000000e-01 : f32
    %162 = vector.broadcast %cst_87 : f32 to vector<40x256xf32>
    %163 = arith.mulf %162, %159 : vector<40x256xf32>
    %164 = math.tanh %163 : vector<40x256xf32>
    %cst_88 = arith.constant 1.000000e+00 : f32
    %165 = vector.broadcast %cst_88 : f32 to vector<40x256xf32>
    %166 = arith.addf %165, %164 : vector<40x256xf32>
    %167 = arith.mulf %161, %166 : vector<40x256xf32>
    %c0_89 = arith.constant 0 : index
    %c0_90 = arith.constant 0 : index
    %168 = vector.load %arg6[%c0_89, %c0_90] : memref<1x40xbf16, #tpu.memory_space<vmem>>, vector<1x40xbf16>
    %169 = arith.truncf %167 : vector<40x256xf32> to vector<40x256xbf16>
    %cst_91 = arith.constant dense<0.000000e+00> : vector<1x256xf32>
    %170 = tpu.matmul %168, %169, %cst_91 {dimension_numbers = #tpu.dot_dimension_numbers<[1], [0], [0], [1], [0, 0, 1, 1], [], []>} : vector<1x40xbf16>, vector<40x256xbf16>, vector<1x256xf32> -> vector<1x256xf32>
    %c0_92 = arith.constant 0 : index
    %c0_93 = arith.constant 0 : index
    %171 = vector.load %arg7[%c0_92, %c0_93] : memref<1x1xf32, #tpu.memory_space<vmem>>, vector<1x1xf32>
    %172 = vector.broadcast %171 : vector<1x1xf32> to vector<1x256xf32>
    %173 = arith.addf %170, %172 : vector<1x256xf32>
    %c0_94 = arith.constant 0 : index
    %c0_95 = arith.constant 0 : index
    %174 = vector.load %arg8[%c0_94, %c0_95] : memref<1x256xf32, #tpu.memory_space<vmem>>, vector<1x256xf32>
    tpu.vector_store %arg8[%c0_94, %c0_95], %173 {strides = array<i32>} : memref<1x256xf32, #tpu.memory_space<vmem>>, vector<1x256xf32>,
    return
  }
  func.func @transform_0(%arg0: i32) -> (i32, i32) {
    %c0_i32 = arith.constant 0 : i32
    %c0_i32_0 = arith.constant 0 : i32
    return %c0_i32, %arg0 : i32, i32
  }
  func.func @transform_1(%arg0: i32) -> (i32, i32) {
    %c0_i32 = arith.constant 0 : i32
    %c0_i32_0 = arith.constant 0 : i32
    %c0_i32_1 = arith.constant 0 : i32
    return %c0_i32, %c0_i32_0 : i32, i32
  }
  func.func @transform_2(%arg0: i32) -> (i32, i32) {
    %c0_i32 = arith.constant 0 : i32
    %c0_i32_0 = arith.constant 0 : i32
    %c0_i32_1 = arith.constant 0 : i32
    return %c0_i32, %c0_i32_0 : i32, i32
  }
  func.func @transform_3(%arg0: i32) -> (i32, i32, i32) {
    %c0_i32 = arith.constant 0 : i32
    %c0_i32_0 = arith.constant 0 : i32
    %c0_i32_1 = arith.constant 0 : i32
    %c0_i32_2 = arith.constant 0 : i32
    return %c0_i32, %c0_i32_0, %c0_i32_1 : i32, i32, i32
  }
  func.func @transform_4(%arg0: i32) -> (i32, i32, i32) {
    %c0_i32 = arith.constant 0 : i32
    %c0_i32_0 = arith.constant 0 : i32
    %c0_i32_1 = arith.constant 0 : i32
    %c0_i32_2 = arith.constant 0 : i32
    return %c0_i32, %c0_i32_0, %c0_i32_1 : i32, i32, i32
  }
  func.func @transform_5(%arg0: i32) -> (i32, i32) {
    %c0_i32 = arith.constant 0 : i32
    %c0_i32_0 = arith.constant 0 : i32
    %c0_i32_1 = arith.constant 0 : i32
    return %c0_i32, %c0_i32_0 : i32, i32
  }
  func.func @transform_6(%arg0: i32) -> (i32, i32) {
    %c0_i32 = arith.constant 0 : i32
    %c0_i32_0 = arith.constant 0 : i32
    %c0_i32_1 = arith.constant 0 : i32
    return %c0_i32, %c0_i32_0 : i32, i32
  }
  func.func @transform_7(%arg0: i32) -> (i32, i32) {
    %c0_i32 = arith.constant 0 : i32
    %c0_i32_0 = arith.constant 0 : i32
    return %c0_i32, %arg0 : i32, i32
  }
}

</mosaic_0001>

<llo_original>
// kernel: tpu_custom_call.1
$region0: #{tpu_custom_call.1}
  #allocation0 [shape = 'u32[]', space=smem, size = 0x4, offset = 0x4, fixed_abs, tag = 'smem constant byte address 0x4 - core index']
  #allocation1 [shape = 'u32[72,128]{1,0:T(1,128)}', space=vmem, size = 0x9000, scoped, tag = 'internal scratch']
  #allocation2 [shape = 'f32[1,1]{1,0:T(1,128)S(1)}', space=vmem, size = 0x200, scoped, tag = 'scoped memory for tpu_custom_call.1']
  %s0 = inlined_call_operand.vmem [shape: f32[2,256], index: 0, kind: input, shape index: {}]
  %s1 = inlined_call_operand.vmem [shape: f32[40,2], index: 1, kind: input, shape index: {}]
  %s2 = inlined_call_operand.vmem [shape: f32[40,1], index: 2, kind: input, shape index: {}]
  %s3 = inlined_call_operand.vmem [shape: bf16[9,40,40], index: 3, kind: input, shape index: {}]
  %s4 = inlined_call_operand.vmem [shape: f32[9,40,1], index: 4, kind: input, shape index: {}]
  %s5 = inlined_call_operand.vmem [shape: bf16[1,40], index: 5, kind: input, shape index: {}]
  %s6 = inlined_call_operand.<no memory space> [shape: f32[1,1], index: 6, kind: input, shape index: {}]
  %s7 = inlined_call_operand.hbm [shape: f32[1,256], index: 7, kind: output, shape index: {}]
  %s8 = sld [smem:[#allocation0]]
  $region38: #{tpu_custom_call.1} parent=0
    _
  %s10 = ssub.s32 1, %s8
  %s11 = scalar_select 0, %s10, %s8
  %v12 = vstv %s6
  %13 = vst [vmem:[#allocation2] sm:$0x1] %v12
  $region1: #{tpu_custom_call.1} parent=0
    #allocation3 [shape = 'u8[1024]{0}', space=vmem, size = 0x400, scoped, tag = 'output window, operand 0, single buffered']
    #allocation4 [shape = 's32[1]{0}', space=sflag, size = 0x4, scoped, tag = 'scoped memory for tpu_custom_call.1']
    %14 = vsyncpa [#allocation4], 0
    // Predicated region
    $region2: #{tpu_custom_call.1} parent=1 // pred_check
      _
    $region3: #{tpu_custom_call.1} parent=1 // pred_check_branch
      %16 = sbr.rel (0) target = $region5
    $region4: #{tpu_custom_call.1} parent=1 // pred_region
      _
    $region5: #{tpu_custom_call.1} parent=1 // pred_fallthru
      _
    // Predicated region
    $region6: #{tpu_custom_call.1} parent=1 // pred_check
      _
    $region7: #{tpu_custom_call.1} parent=1 // pred_check_branch
      %18 = sbr.rel (0) target = $region9
    $region8: #{tpu_custom_call.1} parent=1 // pred_region
      _
    $region9: #{tpu_custom_call.1} parent=1 // pred_fallthru
      _
    // Predicated region
    $region10: #{tpu_custom_call.1} parent=1 // pred_check
      _
    $region11: #{tpu_custom_call.1} parent=1 // pred_check_branch
      %20 = sbr.rel (0) target = $region13
    $region12: #{tpu_custom_call.1} parent=1 // pred_region
      _
    $region13: #{tpu_custom_call.1} parent=1 // pred_fallthru
      _
    // Predicated region
    $region14: #{tpu_custom_call.1} parent=1 // pred_check
      _
    $region15: #{tpu_custom_call.1} parent=1 // pred_check_branch
      %22 = sbr.rel (0) target = $region17
    $region16: #{tpu_custom_call.1} parent=1 // pred_region
      _
    $region17: #{tpu_custom_call.1} parent=1 // pred_fallthru
      _
    // Predicated region
    $region18: #{tpu_custom_call.1} parent=1 // pred_check
      _
    $region19: #{tpu_custom_call.1} parent=1 // pred_check_branch
      %24 = sbr.rel (0) target = $region21
    $region20: #{tpu_custom_call.1} parent=1 // pred_region
      _
    $region21: #{tpu_custom_call.1} parent=1 // pred_fallthru
      _
    // Predicated region
    $region22: #{tpu_custom_call.1} parent=1 // pred_check
      _
    $region23: #{tpu_custom_call.1} parent=1 // pred_check_branch
      %26 = sbr.rel (0) target = $region25
    $region24: #{tpu_custom_call.1} parent=1 // pred_region
      _
    $region25: #{tpu_custom_call.1} parent=1 // pred_fallthru
      _
    // Predicated region
    $region26: #{tpu_custom_call.1} parent=1 // pred_check
      _
    $region27: #{tpu_custom_call.1} parent=1 // pred_check_branch
      %28 = sbr.rel (0) target = $region29
    $region28: #{tpu_custom_call.1} parent=1 // pred_region
      _
    $region29: #{tpu_custom_call.1} parent=1 // pred_fallthru
      _
    %v30 = vld [vmem:[%s0] sm:$0xf]
    %v31 = vld [vmem:[%s1] sm:$0xff]
    %v32 = vld [vmem:[%s1 + $0x8] sm:$0xff]
    %v33 = vld [vmem:[%s1 + $0x10] sm:$0xff]
    %v34 = vld [vmem:[%s1 + $0x18] sm:$0xff]
    %v35 = vld [vmem:[%s1 + $0x20] sm:$0xff]
    %37 = vset.pattern.permute.xlu0 0
    %38 = vperm.xlu0 %37, %v31
    %v39 = vpop.permute.xlu0 %38
    %42 = vset.pattern.permute.xlu0 0
    %43 = vperm.xlu0 %42, %v32
    %v44 = vpop.permute.xlu0 %43
    %47 = vset.pattern.permute.xlu0 0
    %48 = vperm.xlu0 %47, %v33
    %v49 = vpop.permute.xlu0 %48
    %52 = vset.pattern.permute.xlu0 0
    %53 = vperm.xlu0 %52, %v34
    %v54 = vpop.permute.xlu0 %53
    %57 = vset.pattern.permute.xlu0 0
    %58 = vperm.xlu0 %57, %v35
    %v59 = vpop.permute.xlu0 %58
    %v62 = vperm.slane %v30, 0
    %v63 = vperm.slane %v30, 2
    %v66 = vperm.slane %v62, 0
    %v67 = vperm.slane %v63, 0
    %v68 = vmul.f32 %v39, %v66
    %v69 = vmul.f32 %v39, %v67
    %v70 = vmul.f32 %v44, %v66
    %v71 = vmul.f32 %v44, %v67
    %v72 = vmul.f32 %v49, %v66
    %v73 = vmul.f32 %v49, %v67
    %v74 = vmul.f32 %v54, %v66
    %v75 = vmul.f32 %v54, %v67
    %v76 = vmul.f32 %v59, %v66
    %v77 = vmul.f32 %v59, %v67
    %78 = vset.pattern.permute.xlu0 1
    %79 = vperm.xlu0 %78, %v31
    %v80 = vpop.permute.xlu0 %79
    %82 = vset.pattern.permute.xlu0 1
    %83 = vperm.xlu0 %82, %v32
    %v84 = vpop.permute.xlu0 %83
    %86 = vset.pattern.permute.xlu0 1
    %87 = vperm.xlu0 %86, %v33
    %v88 = vpop.permute.xlu0 %87
    %90 = vset.pattern.permute.xlu0 1
    %91 = vperm.xlu0 %90, %v34
    %v92 = vpop.permute.xlu0 %91
    %94 = vset.pattern.permute.xlu0 1
    %95 = vperm.xlu0 %94, %v35
    %v96 = vpop.permute.xlu0 %95
    %v98 = vperm.slane %v30, 1
    %v99 = vperm.slane %v30, 3
    %v102 = vperm.slane %v98, 1
    %v103 = vperm.slane %v99, 1
    %v104 = vmul.f32 %v80, %v102
    %v105 = vmul.f32 %v80, %v103
    %v106 = vmul.f32 %v84, %v102
    %v107 = vmul.f32 %v84, %v103
    %v108 = vmul.f32 %v88, %v102
    %v109 = vmul.f32 %v88, %v103
    %v110 = vmul.f32 %v92, %v102
    %v111 = vmul.f32 %v92, %v103
    %v112 = vmul.f32 %v96, %v102
    %v113 = vmul.f32 %v96, %v103
    %v114 = vadd.f32 %v68, %v104
    %v115 = vadd.f32 %v69, %v105
    %v116 = vadd.f32 %v70, %v106
    %v117 = vadd.f32 %v71, %v107
    %v118 = vadd.f32 %v72, %v108
    %v119 = vadd.f32 %v73, %v109
    %v120 = vadd.f32 %v74, %v110
    %v121 = vadd.f32 %v75, %v111
    %v122 = vadd.f32 %v76, %v112
    %v123 = vadd.f32 %v77, %v113
    %v124 = vld [vmem:[%s2] sm:$0xff]
    %v125 = vld [vmem:[%s2 + $0x8] sm:$0xff]
    %v126 = vld [vmem:[%s2 + $0x10] sm:$0xff]
    %v127 = vld [vmem:[%s2 + $0x18] sm:$0xff]
    %v128 = vld [vmem:[%s2 + $0x20] sm:$0xff]
    %130 = vset.pattern.permute.xlu0 0
    %131 = vperm.xlu0 %130, %v124
    %v132 = vpop.permute.xlu0 %131
    %135 = vset.pattern.permute.xlu0 0
    %136 = vperm.xlu0 %135, %v125
    %v137 = vpop.permute.xlu0 %136
    %140 = vset.pattern.permute.xlu0 0
    %141 = vperm.xlu0 %140, %v126
    %v142 = vpop.permute.xlu0 %141
    %145 = vset.pattern.permute.xlu0 0
    %146 = vperm.xlu0 %145, %v127
    %v147 = vpop.permute.xlu0 %146
    %150 = vset.pattern.permute.xlu0 0
    %151 = vperm.xlu0 %150, %v128
    %v152 = vpop.permute.xlu0 %151
    %v154 = vadd.f32 %v114, %v132
    %v155 = vadd.f32 %v115, %v132
    %v156 = vadd.f32 %v116, %v137
    %v157 = vadd.f32 %v117, %v137
    %v158 = vadd.f32 %v118, %v142
    %v159 = vadd.f32 %v119, %v142
    %v160 = vadd.f32 %v120, %v147
    %v161 = vadd.f32 %v121, %v147
    %v162 = vadd.f32 %v122, %v152
    %v163 = vadd.f32 %v123, %v152
    %v164 = vmul.f32 %v154, 0.5
    %v165 = vmul.f32 %v155, 0.5
    %v166 = vmul.f32 %v156, 0.5
    %v167 = vmul.f32 %v157, 0.5
    %v168 = vmul.f32 %v158, 0.5
    %v169 = vmul.f32 %v159, 0.5
    %v170 = vmul.f32 %v160, 0.5
    %v171 = vmul.f32 %v161, 0.5
    %v172 = vmul.f32 %v162, 0.5
    %v173 = vmul.f32 %v163, 0.5
    %v174 = vtanh.pop %v164
    %v175 = vtanh.pop %v165
    %v176 = vtanh.pop %v166
    %v177 = vtanh.pop %v167
    %v178 = vtanh.pop %v168
    %v179 = vtanh.pop %v169
    %v180 = vtanh.pop %v170
    %v181 = vtanh.pop %v171
    %v182 = vtanh.pop %v172
    %v183 = vtanh.pop %v173
    %v184 = vadd.f32 %v174, 1.0
    %v185 = vadd.f32 %v175, 1.0
    %v186 = vadd.f32 %v176, 1.0
    %v187 = vadd.f32 %v177, 1.0
    %v188 = vadd.f32 %v178, 1.0
    %v189 = vadd.f32 %v179, 1.0
    %v190 = vadd.f32 %v180, 1.0
    %v191 = vadd.f32 %v181, 1.0
    %v192 = vadd.f32 %v182, 1.0
    %v193 = vadd.f32 %v183, 1.0
    %v194 = vmul.f32 %v164, %v184
    %v195 = vmul.f32 %v165, %v185
    %v196 = vmul.f32 %v166, %v186
    %v197 = vmul.f32 %v167, %v187
    %v198 = vmul.f32 %v168, %v188
    %v199 = vmul.f32 %v169, %v189
    %v200 = vmul.f32 %v170, %v190
    %v201 = vmul.f32 %v171, %v191
    %v202 = vmul.f32 %v172, %v192
    %v203 = vmul.f32 %v173, %v193
    %v204 = vld [vmem:[%s3] sm:$0xf]
    %v205 = vld [vmem:[%s3 + $0x4] sm:$0xf]
    %v206 = vld [vmem:[%s3 + $0x8] sm:$0xf]
    %v207 = vld [vmem:[%s3 + $0xc] sm:$0xf]
    %v208 = vld [vmem:[%s3 + $0x10] sm:$0xf]
    %v209 = vld [vmem:[%s4] sm:$0xff]
    %v210 = vld [vmem:[%s4 + $0x8] sm:$0xff]
    %v211 = vld [vmem:[%s4 + $0x10] sm:$0xff]
    %v212 = vld [vmem:[%s4 + $0x18] sm:$0xff]
    %v213 = vld [vmem:[%s4 + $0x20] sm:$0xff]
    %v214 = vpack.c.bf16 %v196, %v194
    %v215 = vpack.c.bf16 %v197, %v195
    %v216 = vpack.c.bf16 %v200, %v198
    %v217 = vpack.c.bf16 %v201, %v199
    %v218 = vpack.c.bf16 %v202, %v202
    %v219 = vpack.c.bf16 %v203, %v203
    %221 = vset.pattern.permute.xlu0 0
    %222 = vperm.xlu0 %221, %v209
    %v223 = vpop.permute.xlu0 %222
    %226 = vset.pattern.permute.xlu0 0
    %227 = vperm.xlu0 %226, %v210
    %v228 = vpop.permute.xlu0 %227
    %231 = vset.pattern.permute.xlu0 0
    %232 = vperm.xlu0 %231, %v211
    %v233 = vpop.permute.xlu0 %232
    %236 = vset.pattern.permute.xlu0 0
    %237 = vperm.xlu0 %236, %v212
    %v238 = vpop.permute.xlu0 %237
    %241 = vset.pattern.permute.xlu0 0
    %242 = vperm.xlu0 %241, %v213
    %v243 = vpop.permute.xlu0 %242
    %v250 = vunpack.c.l.b16 %v204
    %v251 = vunpack.c.l.b16 %v205
    %v252 = vunpack.c.l.b16 %v206
    %v253 = vunpack.c.l.b16 %v207
    %v254 = vunpack.c.l.b16 %v208
    %v255 = vpack.c.b16 %v251, %v250
    %v256 = vpack.c.b16 %v253, %v252
    %v257 = vpack.c.b16 %v254, %v254
    %vm258 = vcmask 326656
    %v260 = vsel %vm258, %v255, 0
    %v263 = vsel %vm258, %v256, 0
    %v266 = vsel %vm258, %v257, 0
    %vm268 = vcmask 1043456
    %v270 = vsel %vm268, %v218, 0
    %v273 = vsel %vm268, %v219, 0
    %275 = vmatpush.bf16.msra.mxu0 0
    %276 = vmatpush.bf16.msra.mxu0 0
    %277 = vmatpush.bf16.msra.mxu0 0
    %278 = vmatpush.bf16.msra.mxu0 0
    %279 = vmatpush.bf16.msra.mxu0 0
    %280 = vmatpush.bf16.msra.mxu0 %v270
    %281 = vmatpush.bf16.msra.mxu0 %v216
    %282 = vmatpush.bf16.msra.mxu0 %v214
    %283 = vmatmul.bf16.gmra.mxu0 %v260
    %v284 = vpop.f32.mrf.mxu0
    %v285 = vadd.f32 %v223, %v284
    %v286 = vpop.f32.mrf.mxu0
    %v287 = vadd.f32 %v228, %v286
    %288 = vmatmul.bf16.gmra.mxu0 %v263
    %v289 = vpop.f32.mrf.mxu0
    %v290 = vadd.f32 %v233, %v289
    %v291 = vpop.f32.mrf.mxu0
    %v292 = vadd.f32 %v238, %v291
    %293 = vmatmul.bf16.gmra.mxu0 %v266
    %v294 = vpop.f32.mrf.mxu0
    %v295 = vadd.f32 %v243, %v294
    %v296 = vpop.f32.mrf.mxu0
    %297 = vdwg.mxu0
    %298 = vmatpush.bf16.msra.mxu0 0
    %299 = vmatpush.bf16.msra.mxu0 0
    %300 = vmatpush.bf16.msra.mxu0 0
    %301 = vmatpush.bf16.msra.mxu0 0
    %302 = vmatpush.bf16.msra.mxu0 0
    %303 = vmatpush.bf16.msra.mxu0 %v273
    %304 = vmatpush.bf16.msra.mxu0 %v217
    %305 = vmatpush.bf16.msra.mxu0 %v215
    %306 = vmatmul.bf16.gmra.mxu0 %v260
    %v307 = vpop.f32.mrf.mxu0
    %v308 = vadd.f32 %v223, %v307
    %v309 = vpop.f32.mrf.mxu0
    %v310 = vadd.f32 %v228, %v309
    %311 = vmatmul.bf16.gmra.mxu0 %v263
    %v312 = vpop.f32.mrf.mxu0
    %v313 = vadd.f32 %v233, %v312
    %v314 = vpop.f32.mrf.mxu0
    %v315 = vadd.f32 %v238, %v314
    %316 = vmatmul.bf16.gmra.mxu0 %v266
    %v317 = vpop.f32.mrf.mxu0
    %v318 = vadd.f32 %v243, %v317
    %v319 = vpop.f32.mrf.mxu0
    %320 = vdwg.mxu0
    %v321 = vmul.f32 %v285, 0.5
    %v322 = vmul.f32 %v308, 0.5
    %v323 = vmul.f32 %v287, 0.5
    %v324 = vmul.f32 %v310, 0.5
    %v325 = vmul.f32 %v290, 0.5
    %v326 = vmul.f32 %v313, 0.5
    %v327 = vmul.f32 %v292, 0.5
    %v328 = vmul.f32 %v315, 0.5
    %v329 = vmul.f32 %v295, 0.5
    %v330 = vmul.f32 %v318, 0.5
    %v331 = vtanh.pop %v321
    %v332 = vtanh.pop %v322
    %v333 = vtanh.pop %v323
    %v334 = vtanh.pop %v324
    %v335 = vtanh.pop %v325
    %v336 = vtanh.pop %v326
    %v337 = vtanh.pop %v327
    %v338 = vtanh.pop %v328
    %v339 = vtanh.pop %v329
    %v340 = vtanh.pop %v330
    %v341 = vadd.f32 %v331, 1.0
    %v342 = vadd.f32 %v332, 1.0
    %v343 = vadd.f32 %v333, 1.0
    %v344 = vadd.f32 %v334, 1.0
    %v345 = vadd.f32 %v335, 1.0
    %v346 = vadd.f32 %v336, 1.0
    %v347 = vadd.f32 %v337, 1.0
    %v348 = vadd.f32 %v338, 1.0
    %v349 = vadd.f32 %v339, 1.0
    %v350 = vadd.f32 %v340, 1.0
    %v351 = vmul.f32 %v321, %v341
    %v352 = vmul.f32 %v322, %v342
    %v353 = vmul.f32 %v323, %v343
    %v354 = vmul.f32 %v324, %v344
    %v355 = vmul.f32 %v325, %v345
    %v356 = vmul.f32 %v326, %v346
    %v357 = vmul.f32 %v327, %v347
    %v358 = vmul.f32 %v328, %v348
    %v359 = vmul.f32 %v329, %v349
    %v360 = vmul.f32 %v330, %v350
    %s361 = scalar_lea.vmem %s3, 20
    %v362 = vld [vmem:[%s361] sm:$0xf]
    %v363 = vld [vmem:[%s361 + $0x4] sm:$0xf]
    %v364 = vld [vmem:[%s361 + $0x8] sm:$0xf]
    %v365 = vld [vmem:[%s361 + $0xc] sm:$0xf]
    %v366 = vld [vmem:[%s361 + $0x10] sm:$0xf]
    %s367 = scalar_lea.vmem %s4, 40
    %v368 = vld [vmem:[%s367] sm:$0xff]
    %v369 = vld [vmem:[%s367 + $0x8] sm:$0xff]
    %v370 = vld [vmem:[%s367 + $0x10] sm:$0xff]
    %v371 = vld [vmem:[%s367 + $0x18] sm:$0xff]
    %v372 = vld [vmem:[%s367 + $0x20] sm:$0xff]
    %v373 = vpack.c.bf16 %v353, %v351
    %v374 = vpack.c.bf16 %v354, %v352
    %v375 = vpack.c.bf16 %v357, %v355
    %v376 = vpack.c.bf16 %v358, %v356
    %v377 = vpack.c.bf16 %v359, %v359
    %v378 = vpack.c.bf16 %v360, %v360
    %380 = vset.pattern.permute.xlu0 0
    %381 = vperm.xlu0 %380, %v368
    %v382 = vpop.permute.xlu0 %381
    %385 = vset.pattern.permute.xlu0 0
    %386 = vperm.xlu0 %385, %v369
    %v387 = vpop.permute.xlu0 %386
    %390 = vset.pattern.permute.xlu0 0
    %391 = vperm.xlu0 %390, %v370
    %v392 = vpop.permute.xlu0 %391
    %395 = vset.pattern.permute.xlu0 0
    %396 = vperm.xlu0 %395, %v371
    %v397 = vpop.permute.xlu0 %396
    %400 = vset.pattern.permute.xlu0 0
    %401 = vperm.xlu0 %400, %v372
    %v402 = vpop.permute.xlu0 %401
    %v409 = vunpack.c.l.b16 %v362
    %v410 = vunpack.c.l.b16 %v363
    %v411 = vunpack.c.l.b16 %v364
    %v412 = vunpack.c.l.b16 %v365
    %v413 = vunpack.c.l.b16 %v366
    %v414 = vpack.c.b16 %v410, %v409
    %v415 = vpack.c.b16 %v412, %v411
    %v416 = vpack.c.b16 %v413, %v413
    %v418 = vsel %vm258, %v414, 0
    %v421 = vsel %vm258, %v415, 0
    %v424 = vsel %vm258, %v416, 0
    %v427 = vsel %vm268, %v377, 0
    %v430 = vsel %vm268, %v378, 0
    %432 = vmatpush.bf16.msra.mxu0 0
    %433 = vmatpush.bf16.msra.mxu0 0
    %434 = vmatpush.bf16.msra.mxu0 0
    %435 = vmatpush.bf16.msra.mxu0 0
    %436 = vmatpush.bf16.msra.mxu0 0
    %437 = vmatpush.bf16.msra.mxu0 %v427
    %438 = vmatpush.bf16.msra.mxu0 %v375
    %439 = vmatpush.bf16.msra.mxu0 %v373
    %440 = vmatmul.bf16.gmra.mxu0 %v418
    %v441 = vpop.f32.mrf.mxu0
    %v442 = vadd.f32 %v382, %v441
    %v443 = vpop.f32.mrf.mxu0
    %v444 = vadd.f32 %v387, %v443
    %445 = vmatmul.bf16.gmra.mxu0 %v421
    %v446 = vpop.f32.mrf.mxu0
    %v447 = vadd.f32 %v392, %v446
    %v448 = vpop.f32.mrf.mxu0
    %v449 = vadd.f32 %v397, %v448
    %450 = vmatmul.bf16.gmra.mxu0 %v424
    %v451 = vpop.f32.mrf.mxu0
    %v452 = vadd.f32 %v402, %v451
    %v453 = vpop.f32.mrf.mxu0
    %454 = vdwg.mxu0
    %455 = vmatpush.bf16.msra.mxu0 0
    %456 = vmatpush.bf16.msra.mxu0 0
    %457 = vmatpush.bf16.msra.mxu0 0
    %458 = vmatpush.bf16.msra.mxu0 0
    %459 = vmatpush.bf16.msra.mxu0 0
    %460 = vmatpush.bf16.msra.mxu0 %v430
    %461 = vmatpush.bf16.msra.mxu0 %v376
    %462 = vmatpush.bf16.msra.mxu0 %v374
    %463 = vmatmul.bf16.gmra.mxu0 %v418
    %v464 = vpop.f32.mrf.mxu0
    %v465 = vadd.f32 %v382, %v464
    %v466 = vpop.f32.mrf.mxu0
    %v467 = vadd.f32 %v387, %v466
    %468 = vmatmul.bf16.gmra.mxu0 %v421
    %v469 = vpop.f32.mrf.mxu0
    %v470 = vadd.f32 %v392, %v469
    %v471 = vpop.f32.mrf.mxu0
    %v472 = vadd.f32 %v397, %v471
    %473 = vmatmul.bf16.gmra.mxu0 %v424
    %v474 = vpop.f32.mrf.mxu0
    %v475 = vadd.f32 %v402, %v474
    %v476 = vpop.f32.mrf.mxu0
    %477 = vdwg.mxu0
    %v478 = vmul.f32 %v442, 0.5
    %v479 = vmul.f32 %v465, 0.5
    %v480 = vmul.f32 %v444, 0.5
    %v481 = vmul.f32 %v467, 0.5
    %v482 = vmul.f32 %v447, 0.5
    %v483 = vmul.f32 %v470, 0.5
    %v484 = vmul.f32 %v449, 0.5
    %v485 = vmul.f32 %v472, 0.5
    %v486 = vmul.f32 %v452, 0.5
    %v487 = vmul.f32 %v475, 0.5
    %v488 = vtanh.pop %v478
    %v489 = vtanh.pop %v479
    %v490 = vtanh.pop %v480
    %v491 = vtanh.pop %v481
    %v492 = vtanh.pop %v482
    %v493 = vtanh.pop %v483
    %v494 = vtanh.pop %v484
    %v495 = vtanh.pop %v485
    %v496 = vtanh.pop %v486
    %v497 = vtanh.pop %v487
    %v498 = vadd.f32 %v488, 1.0
    %v499 = vadd.f32 %v489, 1.0
    %v500 = vadd.f32 %v490, 1.0
    %v501 = vadd.f32 %v491, 1.0
    %v502 = vadd.f32 %v492, 1.0
    %v503 = vadd.f32 %v493, 1.0
    %v504 = vadd.f32 %v494, 1.0
    %v505 = vadd.f32 %v495, 1.0
    %v506 = vadd.f32 %v496, 1.0
    %v507 = vadd.f32 %v497, 1.0
    %v508 = vmul.f32 %v478, %v498
    %v509 = vmul.f32 %v479, %v499
    %v510 = vmul.f32 %v480, %v500
    %v511 = vmul.f32 %v481, %v501
    %v512 = vmul.f32 %v482, %v502
    %v513 = vmul.f32 %v483, %v503
    %v514 = vmul.f32 %v484, %v504
    %v515 = vmul.f32 %v485, %v505
    %v516 = vmul.f32 %v486, %v506
    %v517 = vmul.f32 %v487, %v507
    %s518 = scalar_lea.vmem %s3, 40
    %v519 = vld [vmem:[%s518] sm:$0xf]
    %v520 = vld [vmem:[%s518 + $0x4] sm:$0xf]
    %v521 = vld [vmem:[%s518 + $0x8] sm:$0xf]
    %v522 = vld [vmem:[%s518 + $0xc] sm:$0xf]
    %v523 = vld [vmem:[%s518 + $0x10] sm:$0xf]
    %s524 = scalar_lea.vmem %s4, 80
    %v525 = vld [vmem:[%s524] sm:$0xff]
    %v526 = vld [vmem:[%s524 + $0x8] sm:$0xff]
    %v527 = vld [vmem:[%s524 + $0x10] sm:$0xff]
    %v528 = vld [vmem:[%s524 + $0x18] sm:$0xff]
    %v529 = vld [vmem:[%s524 + $0x20] sm:$0xff]
    %v530 = vpack.c.bf16 %v510, %v508
    %v531 = vpack.c.bf16 %v511, %v509
    %v532 = vpack.c.bf16 %v514, %v512
    %v533 = vpack.c.bf16 %v515, %v513
    %v534 = vpack.c.bf16 %v516, %v516
    %v535 = vpack.c.bf16 %v517, %v517
    %537 = vset.pattern.permute.xlu0 0
    %538 = vperm.xlu0 %537, %v525
    %v539 = vpop.permute.xlu0 %538
    %542 = vset.pattern.permute.xlu0 0
    %543 = vperm.xlu0 %542, %v526
    %v544 = vpop.permute.xlu0 %543
    %547 = vset.pattern.permute.xlu0 0
    %548 = vperm.xlu0 %547, %v527
    %v549 = vpop.permute.xlu0 %548
    %552 = vset.pattern.permute.xlu0 0
    %553 = vperm.xlu0 %552, %v528
    %v554 = vpop.permute.xlu0 %553
    %557 = vset.pattern.permute.xlu0 0
    %558 = vperm.xlu0 %557, %v529
    %v559 = vpop.permute.xlu0 %558
    %v566 = vunpack.c.l.b16 %v519
    %v567 = vunpack.c.l.b16 %v520
    %v568 = vunpack.c.l.b16 %v521
    %v569 = vunpack.c.l.b16 %v522
    %v570 = vunpack.c.l.b16 %v523
    %v571 = vpack.c.b16 %v567, %v566
    %v572 = vpack.c.b16 %v569, %v568
    %v573 = vpack.c.b16 %v570, %v570
    %v575 = vsel %vm258, %v571, 0
    %v578 = vsel %vm258, %v572, 0
    %v581 = vsel %vm258, %v573, 0
    %v584 = vsel %vm268, %v534, 0
    %v587 = vsel %vm268, %v535, 0
    %589 = vmatpush.bf16.msra.mxu0 0
    %590 = vmatpush.bf16.msra.mxu0 0
    %591 = vmatpush.bf16.msra.mxu0 0
    %592 = vmatpush.bf16.msra.mxu0 0
    %593 = vmatpush.bf16.msra.mxu0 0
    %594 = vmatpush.bf16.msra.mxu0 %v584
    %595 = vmatpush.bf16.msra.mxu0 %v532
    %596 = vmatpush.bf16.msra.mxu0 %v530
    %597 = vmatmul.bf16.gmra.mxu0 %v575
    %v598 = vpop.f32.mrf.mxu0
    %v599 = vadd.f32 %v539, %v598
    %v600 = vpop.f32.mrf.mxu0
    %v601 = vadd.f32 %v544, %v600
    %602 = vmatmul.bf16.gmra.mxu0 %v578
    %v603 = vpop.f32.mrf.mxu0
    %v604 = vadd.f32 %v549, %v603
    %v605 = vpop.f32.mrf.mxu0
    %v606 = vadd.f32 %v554, %v605
    %607 = vmatmul.bf16.gmra.mxu0 %v581
    %v608 = vpop.f32.mrf.mxu0
    %v609 = vadd.f32 %v559, %v608
    %v610 = vpop.f32.mrf.mxu0
    %611 = vdwg.mxu0
    %612 = vmatpush.bf16.msra.mxu0 0
    %613 = vmatpush.bf16.msra.mxu0 0
    %614 = vmatpush.bf16.msra.mxu0 0
    %615 = vmatpush.bf16.msra.mxu0 0
    %616 = vmatpush.bf16.msra.mxu0 0
    %617 = vmatpush.bf16.msra.mxu0 %v587
    %618 = vmatpush.bf16.msra.mxu0 %v533
    %619 = vmatpush.bf16.msra.mxu0 %v531
    %620 = vmatmul.bf16.gmra.mxu0 %v575
    %v621 = vpop.f32.mrf.mxu0
    %v622 = vadd.f32 %v539, %v621
    %v623 = vpop.f32.mrf.mxu0
    %v624 = vadd.f32 %v544, %v623
    %625 = vmatmul.bf16.gmra.mxu0 %v578
    %v626 = vpop.f32.mrf.mxu0
    %v627 = vadd.f32 %v549, %v626
    %v628 = vpop.f32.mrf.mxu0
    %v629 = vadd.f32 %v554, %v628
    %630 = vmatmul.bf16.gmra.mxu0 %v581
    %v631 = vpop.f32.mrf.mxu0
    %v632 = vadd.f32 %v559, %v631
    %v633 = vpop.f32.mrf.mxu0
    %634 = vdwg.mxu0
    %v635 = vmul.f32 %v599, 0.5
    %v636 = vmul.f32 %v622, 0.5
    %v637 = vmul.f32 %v601, 0.5
    %v638 = vmul.f32 %v624, 0.5
    %v639 = vmul.f32 %v604, 0.5
    %v640 = vmul.f32 %v627, 0.5
    %v641 = vmul.f32 %v606, 0.5
    %v642 = vmul.f32 %v629, 0.5
    %v643 = vmul.f32 %v609, 0.5
    %v644 = vmul.f32 %v632, 0.5
    %v645 = vtanh.pop %v635
    %v646 = vtanh.pop %v636
    %v647 = vtanh.pop %v637
    %v648 = vtanh.pop %v638
    %v649 = vtanh.pop %v639
    %v650 = vtanh.pop %v640
    %v651 = vtanh.pop %v641
    %v652 = vtanh.pop %v642
    %v653 = vtanh.pop %v643
    %v654 = vtanh.pop %v644
    %v655 = vadd.f32 %v645, 1.0
    %v656 = vadd.f32 %v646, 1.0
    %v657 = vadd.f32 %v647, 1.0
    %v658 = vadd.f32 %v648, 1.0
    %v659 = vadd.f32 %v649, 1.0
    %v660 = vadd.f32 %v650, 1.0
    %v661 = vadd.f32 %v651, 1.0
    %v662 = vadd.f32 %v652, 1.0
    %v663 = vadd.f32 %v653, 1.0
    %v664 = vadd.f32 %v654, 1.0
    %v665 = vmul.f32 %v635, %v655
    %v666 = vmul.f32 %v636, %v656
    %v667 = vmul.f32 %v637, %v657
    %v668 = vmul.f32 %v638, %v658
    %v669 = vmul.f32 %v639, %v659
    %v670 = vmul.f32 %v640, %v660
    %v671 = vmul.f32 %v641, %v661
    %v672 = vmul.f32 %v642, %v662
    %v673 = vmul.f32 %v643, %v663
    %v674 = vmul.f32 %v644, %v664
    %s675 = scalar_lea.vmem %s3, 60
    %v676 = vld [vmem:[%s675] sm:$0xf]
    %v677 = vld [vmem:[%s675 + $0x4] sm:$0xf]
    %v678 = vld [vmem:[%s675 + $0x8] sm:$0xf]
    %v679 = vld [vmem:[%s675 + $0xc] sm:$0xf]
    %v680 = vld [vmem:[%s675 + $0x10] sm:$0xf]
    %s681 = scalar_lea.vmem %s4, 120
    %v682 = vld [vmem:[%s681] sm:$0xff]
    %v683 = vld [vmem:[%s681 + $0x8] sm:$0xff]
    %v684 = vld [vmem:[%s681 + $0x10] sm:$0xff]
    %v685 = vld [vmem:[%s681 + $0x18] sm:$0xff]
    %v686 = vld [vmem:[%s681 + $0x20] sm:$0xff]
    %v687 = vpack.c.bf16 %v667, %v665
    %v688 = vpack.c.bf16 %v668, %v666
    %v689 = vpack.c.bf16 %v671, %v669
    %v690 = vpack.c.bf16 %v672, %v670
    %v691 = vpack.c.bf16 %v673, %v673
    %v692 = vpack.c.bf16 %v674, %v674
    %694 = vset.pattern.permute.xlu0 0
    %695 = vperm.xlu0 %694, %v682
    %v696 = vpop.permute.xlu0 %695
    %699 = vset.pattern.permute.xlu0 0
    %700 = vperm.xlu0 %699, %v683
    %v701 = vpop.permute.xlu0 %700
    %704 = vset.pattern.permute.xlu0 0
    %705 = vperm.xlu0 %704, %v684
    %v706 = vpop.permute.xlu0 %705
    %709 = vset.pattern.permute.xlu0 0
    %710 = vperm.xlu0 %709, %v685
    %v711 = vpop.permute.xlu0 %710
    %714 = vset.pattern.permute.xlu0 0
    %715 = vperm.xlu0 %714, %v686
    %v716 = vpop.permute.xlu0 %715
    %v723 = vunpack.c.l.b16 %v676
    %v724 = vunpack.c.l.b16 %v677
    %v725 = vunpack.c.l.b16 %v678
    %v726 = vunpack.c.l.b16 %v679
    %v727 = vunpack.c.l.b16 %v680
    %v728 = vpack.c.b16 %v724, %v723
    %v729 = vpack.c.b16 %v726, %v725
    %v730 = vpack.c.b16 %v727, %v727
    %v732 = vsel %vm258, %v728, 0
    %v735 = vsel %vm258, %v729, 0
    %v738 = vsel %vm258, %v730, 0
    %v741 = vsel %vm268, %v691, 0
    %v744 = vsel %vm268, %v692, 0
    %746 = vmatpush.bf16.msra.mxu0 0
    %747 = vmatpush.bf16.msra.mxu0 0
    %748 = vmatpush.bf16.msra.mxu0 0
    %749 = vmatpush.bf16.msra.mxu0 0
    %750 = vmatpush.bf16.msra.mxu0 0
    %751 = vmatpush.bf16.msra.mxu0 %v741
    %752 = vmatpush.bf16.msra.mxu0 %v689
    %753 = vmatpush.bf16.msra.mxu0 %v687
    %754 = vmatmul.bf16.gmra.mxu0 %v732
    %v755 = vpop.f32.mrf.mxu0
    %v756 = vadd.f32 %v696, %v755
    %v757 = vpop.f32.mrf.mxu0
    %v758 = vadd.f32 %v701, %v757
    %759 = vmatmul.bf16.gmra.mxu0 %v735
    %v760 = vpop.f32.mrf.mxu0
    %v761 = vadd.f32 %v706, %v760
    %v762 = vpop.f32.mrf.mxu0
    %v763 = vadd.f32 %v711, %v762
    %764 = vmatmul.bf16.gmra.mxu0 %v738
    %v765 = vpop.f32.mrf.mxu0
    %v766 = vadd.f32 %v716, %v765
    %v767 = vpop.f32.mrf.mxu0
    %768 = vdwg.mxu0
    %769 = vmatpush.bf16.msra.mxu0 0
    %770 = vmatpush.bf16.msra.mxu0 0
    %771 = vmatpush.bf16.msra.mxu0 0
    %772 = vmatpush.bf16.msra.mxu0 0
    %773 = vmatpush.bf16.msra.mxu0 0
    %774 = vmatpush.bf16.msra.mxu0 %v744
    %775 = vmatpush.bf16.msra.mxu0 %v690
    %776 = vmatpush.bf16.msra.mxu0 %v688
    %777 = vmatmul.bf16.gmra.mxu0 %v732
    %v778 = vpop.f32.mrf.mxu0
    %v779 = vadd.f32 %v696, %v778
    %v780 = vpop.f32.mrf.mxu0
    %v781 = vadd.f32 %v701, %v780
    %782 = vmatmul.bf16.gmra.mxu0 %v735
    %v783 = vpop.f32.mrf.mxu0
    %v784 = vadd.f32 %v706, %v783
    %v785 = vpop.f32.mrf.mxu0
    %v786 = vadd.f32 %v711, %v785
    %787 = vmatmul.bf16.gmra.mxu0 %v738
    %v788 = vpop.f32.mrf.mxu0
    %v789 = vadd.f32 %v716, %v788
    %v790 = vpop.f32.mrf.mxu0
    %791 = vdwg.mxu0
    %v792 = vmul.f32 %v756, 0.5
    %v793 = vmul.f32 %v779, 0.5
    %v794 = vmul.f32 %v758, 0.5
    %v795 = vmul.f32 %v781, 0.5
    %v796 = vmul.f32 %v761, 0.5
    %v797 = vmul.f32 %v784, 0.5
    %v798 = vmul.f32 %v763, 0.5
    %v799 = vmul.f32 %v786, 0.5
    %v800 = vmul.f32 %v766, 0.5
    %v801 = vmul.f32 %v789, 0.5
    %v802 = vtanh.pop %v792
    %v803 = vtanh.pop %v793
    %v804 = vtanh.pop %v794
    %v805 = vtanh.pop %v795
    %v806 = vtanh.pop %v796
    %v807 = vtanh.pop %v797
    %v808 = vtanh.pop %v798
    %v809 = vtanh.pop %v799
    %v810 = vtanh.pop %v800
    %v811 = vtanh.pop %v801
    %v812 = vadd.f32 %v802, 1.0
    %v813 = vadd.f32 %v803, 1.0
    %v814 = vadd.f32 %v804, 1.0
    %v815 = vadd.f32 %v805, 1.0
    %v816 = vadd.f32 %v806, 1.0
    %v817 = vadd.f32 %v807, 1.0
    %v818 = vadd.f32 %v808, 1.0
    %v819 = vadd.f32 %v809, 1.0
    %v820 = vadd.f32 %v810, 1.0
    %v821 = vadd.f32 %v811, 1.0
    %v822 = vmul.f32 %v792, %v812
    %v823 = vmul.f32 %v793, %v813
    %v824 = vmul.f32 %v794, %v814
    %v825 = vmul.f32 %v795, %v815
    %v826 = vmul.f32 %v796, %v816
    %v827 = vmul.f32 %v797, %v817
    %v828 = vmul.f32 %v798, %v818
    %v829 = vmul.f32 %v799, %v819
    %v830 = vmul.f32 %v800, %v820
    %v831 = vmul.f32 %v801, %v821
    %s832 = scalar_lea.vmem %s3, 80
    %v833 = vld [vmem:[%s832] sm:$0xf]
    %v834 = vld [vmem:[%s832 + $0x4] sm:$0xf]
    %v835 = vld [vmem:[%s832 + $0x8] sm:$0xf]
    %v836 = vld [vmem:[%s832 + $0xc] sm:$0xf]
    %v837 = vld [vmem:[%s832 + $0x10] sm:$0xf]
    %s838 = scalar_lea.vmem %s4, 160
    %v839 = vld [vmem:[%s838] sm:$0xff]
    %v840 = vld [vmem:[%s838 + $0x8] sm:$0xff]
    %v841 = vld [vmem:[%s838 + $0x10] sm:$0xff]
    %v842 = vld [vmem:[%s838 + $0x18] sm:$0xff]
    %v843 = vld [vmem:[%s838 + $0x20] sm:$0xff]
    %v844 = vpack.c.bf16 %v824, %v822
    %v845 = vpack.c.bf16 %v825, %v823
    %v846 = vpack.c.bf16 %v828, %v826
    %v847 = vpack.c.bf16 %v829, %v827
    %v848 = vpack.c.bf16 %v830, %v830
    %v849 = vpack.c.bf16 %v831, %v831
    %851 = vset.pattern.permute.xlu0 0
    %852 = vperm.xlu0 %851, %v839
    %v853 = vpop.permute.xlu0 %852
    %856 = vset.pattern.permute.xlu0 0
    %857 = vperm.xlu0 %856, %v840
    %v858 = vpop.permute.xlu0 %857
    %861 = vset.pattern.permute.xlu0 0
    %862 = vperm.xlu0 %861, %v841
    %v863 = vpop.permute.xlu0 %862
    %866 = vset.pattern.permute.xlu0 0
    %867 = vperm.xlu0 %866, %v842
    %v868 = vpop.permute.xlu0 %867
    %871 = vset.pattern.permute.xlu0 0
    %872 = vperm.xlu0 %871, %v843
    %v873 = vpop.permute.xlu0 %872
    %v880 = vunpack.c.l.b16 %v833
    %v881 = vunpack.c.l.b16 %v834
    %v882 = vunpack.c.l.b16 %v835
    %v883 = vunpack.c.l.b16 %v836
    %v884 = vunpack.c.l.b16 %v837
    %v885 = vpack.c.b16 %v881, %v880
    %v886 = vpack.c.b16 %v883, %v882
    %v887 = vpack.c.b16 %v884, %v884
    %v889 = vsel %vm258, %v885, 0
    %v892 = vsel %vm258, %v886, 0
    %v895 = vsel %vm258, %v887, 0
    %v898 = vsel %vm268, %v848, 0
    %v901 = vsel %vm268, %v849, 0
    %903 = vmatpush.bf16.msra.mxu0 0
    %904 = vmatpush.bf16.msra.mxu0 0
    %905 = vmatpush.bf16.msra.mxu0 0
    %906 = vmatpush.bf16.msra.mxu0 0
    %907 = vmatpush.bf16.msra.mxu0 0
    %908 = vmatpush.bf16.msra.mxu0 %v898
    %909 = vmatpush.bf16.msra.mxu0 %v846
    %910 = vmatpush.bf16.msra.mxu0 %v844
    %911 = vmatmul.bf16.gmra.mxu0 %v889
    %v912 = vpop.f32.mrf.mxu0
    %v913 = vadd.f32 %v853, %v912
    %v914 = vpop.f32.mrf.mxu0
    %v915 = vadd.f32 %v858, %v914
    %916 = vmatmul.bf16.gmra.mxu0 %v892
    %v917 = vpop.f32.mrf.mxu0
    %v918 = vadd.f32 %v863, %v917
    %v919 = vpop.f32.mrf.mxu0
    %v920 = vadd.f32 %v868, %v919
    %921 = vmatmul.bf16.gmra.mxu0 %v895
    %v922 = vpop.f32.mrf.mxu0
    %v923 = vadd.f32 %v873, %v922
    %v924 = vpop.f32.mrf.mxu0
    %925 = vdwg.mxu0
    %926 = vmatpush.bf16.msra.mxu0 0
    %927 = vmatpush.bf16.msra.mxu0 0
    %928 = vmatpush.bf16.msra.mxu0 0
    %929 = vmatpush.bf16.msra.mxu0 0
    %930 = vmatpush.bf16.msra.mxu0 0
    %931 = vmatpush.bf16.msra.mxu0 %v901
    %932 = vmatpush.bf16.msra.mxu0 %v847
    %933 = vmatpush.bf16.msra.mxu0 %v845
    %934 = vmatmul.bf16.gmra.mxu0 %v889
    %v935 = vpop.f32.mrf.mxu0
    %v936 = vadd.f32 %v853, %v935
    %v937 = vpop.f32.mrf.mxu0
    %v938 = vadd.f32 %v858, %v937
    %939 = vmatmul.bf16.gmra.mxu0 %v892
    %v940 = vpop.f32.mrf.mxu0
    %v941 = vadd.f32 %v863, %v940
    %v942 = vpop.f32.mrf.mxu0
    %v943 = vadd.f32 %v868, %v942
    %944 = vmatmul.bf16.gmra.mxu0 %v895
    %v945 = vpop.f32.mrf.mxu0
    %v946 = vadd.f32 %v873, %v945
    %v947 = vpop.f32.mrf.mxu0
    %948 = vdwg.mxu0
    %v949 = vmul.f32 %v913, 0.5
    %v950 = vmul.f32 %v936, 0.5
    %v951 = vmul.f32 %v915, 0.5
    %v952 = vmul.f32 %v938, 0.5
    %v953 = vmul.f32 %v918, 0.5
    %v954 = vmul.f32 %v941, 0.5
    %v955 = vmul.f32 %v920, 0.5
    %v956 = vmul.f32 %v943, 0.5
    %v957 = vmul.f32 %v923, 0.5
    %v958 = vmul.f32 %v946, 0.5
    %v959 = vtanh.pop %v949
    %v960 = vtanh.pop %v950
    %v961 = vtanh.pop %v951
    %v962 = vtanh.pop %v952
    %v963 = vtanh.pop %v953
    %v964 = vtanh.pop %v954
    %v965 = vtanh.pop %v955
    %v966 = vtanh.pop %v956
    %v967 = vtanh.pop %v957
    %v968 = vtanh.pop %v958
    %v969 = vadd.f32 %v959, 1.0
    %v970 = vadd.f32 %v960, 1.0
    %v971 = vadd.f32 %v961, 1.0
    %v972 = vadd.f32 %v962, 1.0
    %v973 = vadd.f32 %v963, 1.0
    %v974 = vadd.f32 %v964, 1.0
    %v975 = vadd.f32 %v965, 1.0
    %v976 = vadd.f32 %v966, 1.0
    %v977 = vadd.f32 %v967, 1.0
    %v978 = vadd.f32 %v968, 1.0
    %v979 = vmul.f32 %v949, %v969
    %v980 = vmul.f32 %v950, %v970
    %v981 = vmul.f32 %v951, %v971
    %v982 = vmul.f32 %v952, %v972
    %v983 = vmul.f32 %v953, %v973
    %v984 = vmul.f32 %v954, %v974
    %v985 = vmul.f32 %v955, %v975
    %v986 = vmul.f32 %v956, %v976
    %v987 = vmul.f32 %v957, %v977
    %v988 = vmul.f32 %v958, %v978
    %s989 = scalar_lea.vmem %s3, 100
    %v990 = vld [vmem:[%s989] sm:$0xf]
    %v991 = vld [vmem:[%s989 + $0x4] sm:$0xf]
    %v992 = vld [vmem:[%s989 + $0x8] sm:$0xf]
    %v993 = vld [vmem:[%s989 + $0xc] sm:$0xf]
    %v994 = vld [vmem:[%s989 + $0x10] sm:$0xf]
    %s995 = scalar_lea.vmem %s4, 200
    %v996 = vld [vmem:[%s995] sm:$0xff]
    %v997 = vld [vmem:[%s995 + $0x8] sm:$0xff]
    %v998 = vld [vmem:[%s995 + $0x10] sm:$0xff]
    %v999 = vld [vmem:[%s995 + $0x18] sm:$0xff]
    %v1000 = vld [vmem:[%s995 + $0x20] sm:$0xff]
    %v1001 = vpack.c.bf16 %v981, %v979
    %v1002 = vpack.c.bf16 %v982, %v980
    %v1003 = vpack.c.bf16 %v985, %v983
    %v1004 = vpack.c.bf16 %v986, %v984
    %v1005 = vpack.c.bf16 %v987, %v987
    %v1006 = vpack.c.bf16 %v988, %v988
    %1008 = vset.pattern.permute.xlu0 0
    %1009 = vperm.xlu0 %1008, %v996
    %v1010 = vpop.permute.xlu0 %1009
    %1013 = vset.pattern.permute.xlu0 0
    %1014 = vperm.xlu0 %1013, %v997
    %v1015 = vpop.permute.xlu0 %1014
    %1018 = vset.pattern.permute.xlu0 0
    %1019 = vperm.xlu0 %1018, %v998
    %v1020 = vpop.permute.xlu0 %1019
    %1023 = vset.pattern.permute.xlu0 0
    %1024 = vperm.xlu0 %1023, %v999
    %v1025 = vpop.permute.xlu0 %1024
    %1028 = vset.pattern.permute.xlu0 0
    %1029 = vperm.xlu0 %1028, %v1000
    %v1030 = vpop.permute.xlu0 %1029
    %v1037 = vunpack.c.l.b16 %v990
    %v1038 = vunpack.c.l.b16 %v991
    %v1039 = vunpack.c.l.b16 %v992
    %v1040 = vunpack.c.l.b16 %v993
    %v1041 = vunpack.c.l.b16 %v994
    %v1042 = vpack.c.b16 %v1038, %v1037
    %v1043 = vpack.c.b16 %v1040, %v1039
    %v1044 = vpack.c.b16 %v1041, %v1041
    %v1046 = vsel %vm258, %v1042, 0
    %v1049 = vsel %vm258, %v1043, 0
    %v1052 = vsel %vm258, %v1044, 0
    %v1055 = vsel %vm268, %v1005, 0
    %v1058 = vsel %vm268, %v1006, 0
    %1060 = vmatpush.bf16.msra.mxu0 0
    %1061 = vmatpush.bf16.msra.mxu0 0
    %1062 = vmatpush.bf16.msra.mxu0 0
    %1063 = vmatpush.bf16.msra.mxu0 0
    %1064 = vmatpush.bf16.msra.mxu0 0
    %1065 = vmatpush.bf16.msra.mxu0 %v1055
    %1066 = vmatpush.bf16.msra.mxu0 %v1003
    %1067 = vmatpush.bf16.msra.mxu0 %v1001
    %1068 = vmatmul.bf16.gmra.mxu0 %v1046
    %v1069 = vpop.f32.mrf.mxu0
    %v1070 = vadd.f32 %v1010, %v1069
    %v1071 = vpop.f32.mrf.mxu0
    %v1072 = vadd.f32 %v1015, %v1071
    %1073 = vmatmul.bf16.gmra.mxu0 %v1049
    %v1074 = vpop.f32.mrf.mxu0
    %v1075 = vadd.f32 %v1020, %v1074
    %v1076 = vpop.f32.mrf.mxu0
    %v1077 = vadd.f32 %v1025, %v1076
    %1078 = vmatmul.bf16.gmra.mxu0 %v1052
    %v1079 = vpop.f32.mrf.mxu0
    %v1080 = vadd.f32 %v1030, %v1079
    %v1081 = vpop.f32.mrf.mxu0
    %1082 = vdwg.mxu0
    %1083 = vmatpush.bf16.msra.mxu0 0
    %1084 = vmatpush.bf16.msra.mxu0 0
    %1085 = vmatpush.bf16.msra.mxu0 0
    %1086 = vmatpush.bf16.msra.mxu0 0
    %1087 = vmatpush.bf16.msra.mxu0 0
    %1088 = vmatpush.bf16.msra.mxu0 %v1058
    %1089 = vmatpush.bf16.msra.mxu0 %v1004
    %1090 = vmatpush.bf16.msra.mxu0 %v1002
    %1091 = vmatmul.bf16.gmra.mxu0 %v1046
    %v1092 = vpop.f32.mrf.mxu0
    %v1093 = vadd.f32 %v1010, %v1092
    %v1094 = vpop.f32.mrf.mxu0
    %v1095 = vadd.f32 %v1015, %v1094
    %1096 = vmatmul.bf16.gmra.mxu0 %v1049
    %v1097 = vpop.f32.mrf.mxu0
    %v1098 = vadd.f32 %v1020, %v1097
    %v1099 = vpop.f32.mrf.mxu0
    %v1100 = vadd.f32 %v1025, %v1099
    %1101 = vmatmul.bf16.gmra.mxu0 %v1052
    %v1102 = vpop.f32.mrf.mxu0
    %v1103 = vadd.f32 %v1030, %v1102
    %v1104 = vpop.f32.mrf.mxu0
    %1105 = vdwg.mxu0
    %v1106 = vmul.f32 %v1070, 0.5
    %v1107 = vmul.f32 %v1093, 0.5
    %v1108 = vmul.f32 %v1072, 0.5
    %v1109 = vmul.f32 %v1095, 0.5
    %v1110 = vmul.f32 %v1075, 0.5
    %v1111 = vmul.f32 %v1098, 0.5
    %v1112 = vmul.f32 %v1077, 0.5
    %v1113 = vmul.f32 %v1100, 0.5
    %v1114 = vmul.f32 %v1080, 0.5
    %v1115 = vmul.f32 %v1103, 0.5
    %v1116 = vtanh.pop %v1106
    %v1117 = vtanh.pop %v1107
    %v1118 = vtanh.pop %v1108
    %v1119 = vtanh.pop %v1109
    %v1120 = vtanh.pop %v1110
    %v1121 = vtanh.pop %v1111
    %v1122 = vtanh.pop %v1112
    %v1123 = vtanh.pop %v1113
    %v1124 = vtanh.pop %v1114
    %v1125 = vtanh.pop %v1115
    %v1126 = vadd.f32 %v1116, 1.0
    %v1127 = vadd.f32 %v1117, 1.0
    %v1128 = vadd.f32 %v1118, 1.0
    %v1129 = vadd.f32 %v1119, 1.0
    %v1130 = vadd.f32 %v1120, 1.0
    %v1131 = vadd.f32 %v1121, 1.0
    %v1132 = vadd.f32 %v1122, 1.0
    %v1133 = vadd.f32 %v1123, 1.0
    %v1134 = vadd.f32 %v1124, 1.0
    %v1135 = vadd.f32 %v1125, 1.0
    %v1136 = vmul.f32 %v1106, %v1126
    %v1137 = vmul.f32 %v1107, %v1127
    %v1138 = vmul.f32 %v1108, %v1128
    %v1139 = vmul.f32 %v1109, %v1129
    %v1140 = vmul.f32 %v1110, %v1130
    %v1141 = vmul.f32 %v1111, %v1131
    %v1142 = vmul.f32 %v1112, %v1132
    %v1143 = vmul.f32 %v1113, %v1133
    %v1144 = vmul.f32 %v1114, %v1134
    %v1145 = vmul.f32 %v1115, %v1135
    %s1146 = scalar_lea.vmem %s3, 120
    %v1147 = vld [vmem:[%s1146] sm:$0xf]
    %v1148 = vld [vmem:[%s1146 + $0x4] sm:$0xf]
    %v1149 = vld [vmem:[%s1146 + $0x8] sm:$0xf]
    %v1150 = vld [vmem:[%s1146 + $0xc] sm:$0xf]
    %v1151 = vld [vmem:[%s1146 + $0x10] sm:$0xf]
    %s1152 = scalar_lea.vmem %s4, 240
    %v1153 = vld [vmem:[%s1152] sm:$0xff]
    %v1154 = vld [vmem:[%s1152 + $0x8] sm:$0xff]
    %v1155 = vld [vmem:[%s1152 + $0x10] sm:$0xff]
    %v1156 = vld [vmem:[%s1152 + $0x18] sm:$0xff]
    %v1157 = vld [vmem:[%s1152 + $0x20] sm:$0xff]
    %v1158 = vpack.c.bf16 %v1138, %v1136
    %v1159 = vpack.c.bf16 %v1139, %v1137
    %v1160 = vpack.c.bf16 %v1142, %v1140
    %v1161 = vpack.c.bf16 %v1143, %v1141
    %v1162 = vpack.c.bf16 %v1144, %v1144
    %v1163 = vpack.c.bf16 %v1145, %v1145
    %1165 = vset.pattern.permute.xlu0 0
    %1166 = vperm.xlu0 %1165, %v1153
    %v1167 = vpop.permute.xlu0 %1166
    %1170 = vset.pattern.permute.xlu0 0
    %1171 = vperm.xlu0 %1170, %v1154
    %v1172 = vpop.permute.xlu0 %1171
    %1175 = vset.pattern.permute.xlu0 0
    %1176 = vperm.xlu0 %1175, %v1155
    %v1177 = vpop.permute.xlu0 %1176
    %1180 = vset.pattern.permute.xlu0 0
    %1181 = vperm.xlu0 %1180, %v1156
    %v1182 = vpop.permute.xlu0 %1181
    %1185 = vset.pattern.permute.xlu0 0
    %1186 = vperm.xlu0 %1185, %v1157
    %v1187 = vpop.permute.xlu0 %1186
    %v1194 = vunpack.c.l.b16 %v1147
    %v1195 = vunpack.c.l.b16 %v1148
    %v1196 = vunpack.c.l.b16 %v1149
    %v1197 = vunpack.c.l.b16 %v1150
    %v1198 = vunpack.c.l.b16 %v1151
    %v1199 = vpack.c.b16 %v1195, %v1194
    %v1200 = vpack.c.b16 %v1197, %v1196
    %v1201 = vpack.c.b16 %v1198, %v1198
    %v1203 = vsel %vm258, %v1199, 0
    %v1206 = vsel %vm258, %v1200, 0
    %v1209 = vsel %vm258, %v1201, 0
    %v1212 = vsel %vm268, %v1162, 0
    %v1215 = vsel %vm268, %v1163, 0
    %1217 = vmatpush.bf16.msra.mxu0 0
    %1218 = vmatpush.bf16.msra.mxu0 0
    %1219 = vmatpush.bf16.msra.mxu0 0
    %1220 = vmatpush.bf16.msra.mxu0 0
    %1221 = vmatpush.bf16.msra.mxu0 0
    %1222 = vmatpush.bf16.msra.mxu0 %v1212
    %1223 = vmatpush.bf16.msra.mxu0 %v1160
    %1224 = vmatpush.bf16.msra.mxu0 %v1158
    %1225 = vmatmul.bf16.gmra.mxu0 %v1203
    %v1226 = vpop.f32.mrf.mxu0
    %v1227 = vadd.f32 %v1167, %v1226
    %v1228 = vpop.f32.mrf.mxu0
    %v1229 = vadd.f32 %v1172, %v1228
    %1230 = vmatmul.bf16.gmra.mxu0 %v1206
    %v1231 = vpop.f32.mrf.mxu0
    %v1232 = vadd.f32 %v1177, %v1231
    %v1233 = vpop.f32.mrf.mxu0
    %v1234 = vadd.f32 %v1182, %v1233
    %1235 = vmatmul.bf16.gmra.mxu0 %v1209
    %v1236 = vpop.f32.mrf.mxu0
    %v1237 = vadd.f32 %v1187, %v1236
    %v1238 = vpop.f32.mrf.mxu0
    %1239 = vdwg.mxu0
    %1240 = vmatpush.bf16.msra.mxu0 0
    %1241 = vmatpush.bf16.msra.mxu0 0
    %1242 = vmatpush.bf16.msra.mxu0 0
    %1243 = vmatpush.bf16.msra.mxu0 0
    %1244 = vmatpush.bf16.msra.mxu0 0
    %1245 = vmatpush.bf16.msra.mxu0 %v1215
    %1246 = vmatpush.bf16.msra.mxu0 %v1161
    %1247 = vmatpush.bf16.msra.mxu0 %v1159
    %1248 = vmatmul.bf16.gmra.mxu0 %v1203
    %v1249 = vpop.f32.mrf.mxu0
    %v1250 = vadd.f32 %v1167, %v1249
    %v1251 = vpop.f32.mrf.mxu0
    %v1252 = vadd.f32 %v1172, %v1251
    %1253 = vmatmul.bf16.gmra.mxu0 %v1206
    %v1254 = vpop.f32.mrf.mxu0
    %v1255 = vadd.f32 %v1177, %v1254
    %v1256 = vpop.f32.mrf.mxu0
    %v1257 = vadd.f32 %v1182, %v1256
    %1258 = vmatmul.bf16.gmra.mxu0 %v1209
    %v1259 = vpop.f32.mrf.mxu0
    %v1260 = vadd.f32 %v1187, %v1259
    %v1261 = vpop.f32.mrf.mxu0
    %1262 = vdwg.mxu0
    %v1263 = vmul.f32 %v1227, 0.5
    %v1264 = vmul.f32 %v1250, 0.5
    %v1265 = vmul.f32 %v1229, 0.5
    %v1266 = vmul.f32 %v1252, 0.5
    %v1267 = vmul.f32 %v1232, 0.5
    %v1268 = vmul.f32 %v1255, 0.5
    %v1269 = vmul.f32 %v1234, 0.5
    %v1270 = vmul.f32 %v1257, 0.5
    %v1271 = vmul.f32 %v1237, 0.5
    %v1272 = vmul.f32 %v1260, 0.5
    %v1273 = vtanh.pop %v1263
    %v1274 = vtanh.pop %v1264
    %v1275 = vtanh.pop %v1265
    %v1276 = vtanh.pop %v1266
    %v1277 = vtanh.pop %v1267
    %v1278 = vtanh.pop %v1268
    %v1279 = vtanh.pop %v1269
    %v1280 = vtanh.pop %v1270
    %v1281 = vtanh.pop %v1271
    %v1282 = vtanh.pop %v1272
    %v1283 = vadd.f32 %v1273, 1.0
    %v1284 = vadd.f32 %v1274, 1.0
    %v1285 = vadd.f32 %v1275, 1.0
    %v1286 = vadd.f32 %v1276, 1.0
    %v1287 = vadd.f32 %v1277, 1.0
    %v1288 = vadd.f32 %v1278, 1.0
    %v1289 = vadd.f32 %v1279, 1.0
    %v1290 = vadd.f32 %v1280, 1.0
    %v1291 = vadd.f32 %v1281, 1.0
    %v1292 = vadd.f32 %v1282, 1.0
    %v1293 = vmul.f32 %v1263, %v1283
    %v1294 = vmul.f32 %v1264, %v1284
    %v1295 = vmul.f32 %v1265, %v1285
    %v1296 = vmul.f32 %v1266, %v1286
    %v1297 = vmul.f32 %v1267, %v1287
    %v1298 = vmul.f32 %v1268, %v1288
    %v1299 = vmul.f32 %v1269, %v1289
    %v1300 = vmul.f32 %v1270, %v1290
    %v1301 = vmul.f32 %v1271, %v1291
    %v1302 = vmul.f32 %v1272, %v1292
    %s1303 = scalar_lea.vmem %s3, 140
    %v1304 = vld [vmem:[%s1303] sm:$0xf]
    %v1305 = vld [vmem:[%s1303 + $0x4] sm:$0xf]
    %v1306 = vld [vmem:[%s1303 + $0x8] sm:$0xf]
    %v1307 = vld [vmem:[%s1303 + $0xc] sm:$0xf]
    %v1308 = vld [vmem:[%s1303 + $0x10] sm:$0xf]
    %s1309 = scalar_lea.vmem %s4, 280
    %v1310 = vld [vmem:[%s1309] sm:$0xff]
    %v1311 = vld [vmem:[%s1309 + $0x8] sm:$0xff]
    %v1312 = vld [vmem:[%s1309 + $0x10] sm:$0xff]
    %v1313 = vld [vmem:[%s1309 + $0x18] sm:$0xff]
    %v1314 = vld [vmem:[%s1309 + $0x20] sm:$0xff]
    %v1315 = vpack.c.bf16 %v1295, %v1293
    %v1316 = vpack.c.bf16 %v1296, %v1294
    %v1317 = vpack.c.bf16 %v1299, %v1297
    %v1318 = vpack.c.bf16 %v1300, %v1298
    %v1319 = vpack.c.bf16 %v1301, %v1301
    %v1320 = vpack.c.bf16 %v1302, %v1302
    %1322 = vset.pattern.permute.xlu0 0
    %1323 = vperm.xlu0 %1322, %v1310
    %v1324 = vpop.permute.xlu0 %1323
    %1327 = vset.pattern.permute.xlu0 0
    %1328 = vperm.xlu0 %1327, %v1311
    %v1329 = vpop.permute.xlu0 %1328
    %1332 = vset.pattern.permute.xlu0 0
    %1333 = vperm.xlu0 %1332, %v1312
    %v1334 = vpop.permute.xlu0 %1333
    %1337 = vset.pattern.permute.xlu0 0
    %1338 = vperm.xlu0 %1337, %v1313
    %v1339 = vpop.permute.xlu0 %1338
    %1342 = vset.pattern.permute.xlu0 0
    %1343 = vperm.xlu0 %1342, %v1314
    %v1344 = vpop.permute.xlu0 %1343
    %v1351 = vunpack.c.l.b16 %v1304
    %v1352 = vunpack.c.l.b16 %v1305
    %v1353 = vunpack.c.l.b16 %v1306
    %v1354 = vunpack.c.l.b16 %v1307
    %v1355 = vunpack.c.l.b16 %v1308
    %v1356 = vpack.c.b16 %v1352, %v1351
    %v1357 = vpack.c.b16 %v1354, %v1353
    %v1358 = vpack.c.b16 %v1355, %v1355
    %v1360 = vsel %vm258, %v1356, 0
    %v1363 = vsel %vm258, %v1357, 0
    %v1366 = vsel %vm258, %v1358, 0
    %v1369 = vsel %vm268, %v1319, 0
    %v1372 = vsel %vm268, %v1320, 0
    %1374 = vmatpush.bf16.msra.mxu0 0
    %1375 = vmatpush.bf16.msra.mxu0 0
    %1376 = vmatpush.bf16.msra.mxu0 0
    %1377 = vmatpush.bf16.msra.mxu0 0
    %1378 = vmatpush.bf16.msra.mxu0 0
    %1379 = vmatpush.bf16.msra.mxu0 %v1369
    %1380 = vmatpush.bf16.msra.mxu0 %v1317
    %1381 = vmatpush.bf16.msra.mxu0 %v1315
    %1382 = vmatmul.bf16.gmra.mxu0 %v1360
    %v1383 = vpop.f32.mrf.mxu0
    %v1384 = vadd.f32 %v1324, %v1383
    %v1385 = vpop.f32.mrf.mxu0
    %v1386 = vadd.f32 %v1329, %v1385
    %1387 = vmatmul.bf16.gmra.mxu0 %v1363
    %v1388 = vpop.f32.mrf.mxu0
    %v1389 = vadd.f32 %v1334, %v1388
    %v1390 = vpop.f32.mrf.mxu0
    %v1391 = vadd.f32 %v1339, %v1390
    %1392 = vmatmul.bf16.gmra.mxu0 %v1366
    %v1393 = vpop.f32.mrf.mxu0
    %v1394 = vadd.f32 %v1344, %v1393
    %v1395 = vpop.f32.mrf.mxu0
    %1396 = vdwg.mxu0
    %1397 = vmatpush.bf16.msra.mxu0 0
    %1398 = vmatpush.bf16.msra.mxu0 0
    %1399 = vmatpush.bf16.msra.mxu0 0
    %1400 = vmatpush.bf16.msra.mxu0 0
    %1401 = vmatpush.bf16.msra.mxu0 0
    %1402 = vmatpush.bf16.msra.mxu0 %v1372
    %1403 = vmatpush.bf16.msra.mxu0 %v1318
    %1404 = vmatpush.bf16.msra.mxu0 %v1316
    %1405 = vmatmul.bf16.gmra.mxu0 %v1360
    %v1406 = vpop.f32.mrf.mxu0
    %v1407 = vadd.f32 %v1324, %v1406
    %v1408 = vpop.f32.mrf.mxu0
    %v1409 = vadd.f32 %v1329, %v1408
    %1410 = vmatmul.bf16.gmra.mxu0 %v1363
    %v1411 = vpop.f32.mrf.mxu0
    %v1412 = vadd.f32 %v1334, %v1411
    %v1413 = vpop.f32.mrf.mxu0
    %v1414 = vadd.f32 %v1339, %v1413
    %1415 = vmatmul.bf16.gmra.mxu0 %v1366
    %v1416 = vpop.f32.mrf.mxu0
    %v1417 = vadd.f32 %v1344, %v1416
    %v1418 = vpop.f32.mrf.mxu0
    %1419 = vdwg.mxu0
    %v1420 = vmul.f32 %v1384, 0.5
    %v1421 = vmul.f32 %v1407, 0.5
    %v1422 = vmul.f32 %v1386, 0.5
    %v1423 = vmul.f32 %v1409, 0.5
    %v1424 = vmul.f32 %v1389, 0.5
    %v1425 = vmul.f32 %v1412, 0.5
    %v1426 = vmul.f32 %v1391, 0.5
    %v1427 = vmul.f32 %v1414, 0.5
    %v1428 = vmul.f32 %v1394, 0.5
    %v1429 = vmul.f32 %v1417, 0.5
    %v1430 = vtanh.pop %v1420
    %v1431 = vtanh.pop %v1421
    %v1432 = vtanh.pop %v1422
    %v1433 = vtanh.pop %v1423
    %v1434 = vtanh.pop %v1424
    %v1435 = vtanh.pop %v1425
    %v1436 = vtanh.pop %v1426
    %v1437 = vtanh.pop %v1427
    %v1438 = vtanh.pop %v1428
    %v1439 = vtanh.pop %v1429
    %v1440 = vadd.f32 %v1430, 1.0
    %v1441 = vadd.f32 %v1431, 1.0
    %v1442 = vadd.f32 %v1432, 1.0
    %v1443 = vadd.f32 %v1433, 1.0
    %v1444 = vadd.f32 %v1434, 1.0
    %v1445 = vadd.f32 %v1435, 1.0
    %v1446 = vadd.f32 %v1436, 1.0
    %v1447 = vadd.f32 %v1437, 1.0
    %v1448 = vadd.f32 %v1438, 1.0
    %v1449 = vadd.f32 %v1439, 1.0
    %v1450 = vmul.f32 %v1420, %v1440
    %v1451 = vmul.f32 %v1421, %v1441
    %v1452 = vmul.f32 %v1422, %v1442
    %v1453 = vmul.f32 %v1423, %v1443
    %v1454 = vmul.f32 %v1424, %v1444
    %v1455 = vmul.f32 %v1425, %v1445
    %v1456 = vmul.f32 %v1426, %v1446
    %v1457 = vmul.f32 %v1427, %v1447
    %v1458 = vmul.f32 %v1428, %v1448
    %v1459 = vmul.f32 %v1429, %v1449
    %s1460 = scalar_lea.vmem %s3, 160
    %v1461 = vld [vmem:[%s1460] sm:$0xf]
    %v1462 = vld [vmem:[%s1460 + $0x4] sm:$0xf]
    %v1463 = vld [vmem:[%s1460 + $0x8] sm:$0xf]
    %v1464 = vld [vmem:[%s1460 + $0xc] sm:$0xf]
    %v1465 = vld [vmem:[%s1460 + $0x10] sm:$0xf]
    %s1466 = scalar_lea.vmem %s4, 320
    %v1467 = vld [vmem:[%s1466] sm:$0xff]
    %v1468 = vld [vmem:[%s1466 + $0x8] sm:$0xff]
    %v1469 = vld [vmem:[%s1466 + $0x10] sm:$0xff]
    %v1470 = vld [vmem:[%s1466 + $0x18] sm:$0xff]
    %v1471 = vld [vmem:[%s1466 + $0x20] sm:$0xff]
    %v1472 = vpack.c.bf16 %v1452, %v1450
    %v1473 = vpack.c.bf16 %v1453, %v1451
    %v1474 = vpack.c.bf16 %v1456, %v1454
    %v1475 = vpack.c.bf16 %v1457, %v1455
    %v1476 = vpack.c.bf16 %v1458, %v1458
    %v1477 = vpack.c.bf16 %v1459, %v1459
    %1479 = vset.pattern.permute.xlu0 0
    %1480 = vperm.xlu0 %1479, %v1467
    %v1481 = vpop.permute.xlu0 %1480
    %1484 = vset.pattern.permute.xlu0 0
    %1485 = vperm.xlu0 %1484, %v1468
    %v1486 = vpop.permute.xlu0 %1485
    %1489 = vset.pattern.permute.xlu0 0
    %1490 = vperm.xlu0 %1489, %v1469
    %v1491 = vpop.permute.xlu0 %1490
    %1494 = vset.pattern.permute.xlu0 0
    %1495 = vperm.xlu0 %1494, %v1470
    %v1496 = vpop.permute.xlu0 %1495
    %1499 = vset.pattern.permute.xlu0 0
    %1500 = vperm.xlu0 %1499, %v1471
    %v1501 = vpop.permute.xlu0 %1500
    %v1508 = vunpack.c.l.b16 %v1461
    %v1509 = vunpack.c.l.b16 %v1462
    %v1510 = vunpack.c.l.b16 %v1463
    %v1511 = vunpack.c.l.b16 %v1464
    %v1512 = vunpack.c.l.b16 %v1465
    %v1513 = vpack.c.b16 %v1509, %v1508
    %v1514 = vpack.c.b16 %v1511, %v1510
    %v1515 = vpack.c.b16 %v1512, %v1512
    %v1517 = vsel %vm258, %v1513, 0
    %v1520 = vsel %vm258, %v1514, 0
    %v1523 = vsel %vm258, %v1515, 0
    %v1526 = vsel %vm268, %v1476, 0
    %v1529 = vsel %vm268, %v1477, 0
    %1531 = vmatpush.bf16.msra.mxu0 0
    %1532 = vmatpush.bf16.msra.mxu0 0
    %1533 = vmatpush.bf16.msra.mxu0 0
    %1534 = vmatpush.bf16.msra.mxu0 0
    %1535 = vmatpush.bf16.msra.mxu0 0
    %1536 = vmatpush.bf16.msra.mxu0 %v1526
    %1537 = vmatpush.bf16.msra.mxu0 %v1474
    %1538 = vmatpush.bf16.msra.mxu0 %v1472
    %1539 = vmatmul.bf16.gmra.mxu0 %v1517
    %v1540 = vpop.f32.mrf.mxu0
    %v1541 = vadd.f32 %v1481, %v1540
    %v1542 = vpop.f32.mrf.mxu0
    %v1543 = vadd.f32 %v1486, %v1542
    %1544 = vmatmul.bf16.gmra.mxu0 %v1520
    %v1545 = vpop.f32.mrf.mxu0
    %v1546 = vadd.f32 %v1491, %v1545
    %v1547 = vpop.f32.mrf.mxu0
    %v1548 = vadd.f32 %v1496, %v1547
    %1549 = vmatmul.bf16.gmra.mxu0 %v1523
    %v1550 = vpop.f32.mrf.mxu0
    %v1551 = vadd.f32 %v1501, %v1550
    %v1552 = vpop.f32.mrf.mxu0
    %1553 = vdwg.mxu0
    %1554 = vmatpush.bf16.msra.mxu0 0
    %1555 = vmatpush.bf16.msra.mxu0 0
    %1556 = vmatpush.bf16.msra.mxu0 0
    %1557 = vmatpush.bf16.msra.mxu0 0
    %1558 = vmatpush.bf16.msra.mxu0 0
    %1559 = vmatpush.bf16.msra.mxu0 %v1529
    %1560 = vmatpush.bf16.msra.mxu0 %v1475
    %1561 = vmatpush.bf16.msra.mxu0 %v1473
    %1562 = vmatmul.bf16.gmra.mxu0 %v1517
    %v1563 = vpop.f32.mrf.mxu0
    %v1564 = vadd.f32 %v1481, %v1563
    %v1565 = vpop.f32.mrf.mxu0
    %v1566 = vadd.f32 %v1486, %v1565
    %1567 = vmatmul.bf16.gmra.mxu0 %v1520
    %v1568 = vpop.f32.mrf.mxu0
    %v1569 = vadd.f32 %v1491, %v1568
    %v1570 = vpop.f32.mrf.mxu0
    %v1571 = vadd.f32 %v1496, %v1570
    %1572 = vmatmul.bf16.gmra.mxu0 %v1523
    %v1573 = vpop.f32.mrf.mxu0
    %v1574 = vadd.f32 %v1501, %v1573
    %v1575 = vpop.f32.mrf.mxu0
    %1576 = vdwg.mxu0
    %v1577 = vmul.f32 %v1541, 0.5
    %v1578 = vmul.f32 %v1564, 0.5
    %v1579 = vmul.f32 %v1543, 0.5
    %v1580 = vmul.f32 %v1566, 0.5
    %v1581 = vmul.f32 %v1546, 0.5
    %v1582 = vmul.f32 %v1569, 0.5
    %v1583 = vmul.f32 %v1548, 0.5
    %v1584 = vmul.f32 %v1571, 0.5
    %v1585 = vmul.f32 %v1551, 0.5
    %v1586 = vmul.f32 %v1574, 0.5
    %v1587 = vtanh.pop %v1577
    %v1588 = vtanh.pop %v1578
    %v1589 = vtanh.pop %v1579
    %v1590 = vtanh.pop %v1580
    %v1591 = vtanh.pop %v1581
    %v1592 = vtanh.pop %v1582
    %v1593 = vtanh.pop %v1583
    %v1594 = vtanh.pop %v1584
    %v1595 = vtanh.pop %v1585
    %v1596 = vtanh.pop %v1586
    %v1597 = vadd.f32 %v1587, 1.0
    %v1598 = vadd.f32 %v1588, 1.0
    %v1599 = vadd.f32 %v1589, 1.0
    %v1600 = vadd.f32 %v1590, 1.0
    %v1601 = vadd.f32 %v1591, 1.0
    %v1602 = vadd.f32 %v1592, 1.0
    %v1603 = vadd.f32 %v1593, 1.0
    %v1604 = vadd.f32 %v1594, 1.0
    %v1605 = vadd.f32 %v1595, 1.0
    %v1606 = vadd.f32 %v1596, 1.0
    %v1607 = vmul.f32 %v1577, %v1597
    %v1608 = vmul.f32 %v1578, %v1598
    %v1609 = vmul.f32 %v1579, %v1599
    %v1610 = vmul.f32 %v1580, %v1600
    %v1611 = vmul.f32 %v1581, %v1601
    %v1612 = vmul.f32 %v1582, %v1602
    %v1613 = vmul.f32 %v1583, %v1603
    %v1614 = vmul.f32 %v1584, %v1604
    %v1615 = vmul.f32 %v1585, %v1605
    %v1616 = vmul.f32 %v1586, %v1606
    %v1617 = vld [vmem:[%s5] sm:$0x1]
    %v1618 = vpack.c.bf16 %v1609, %v1607
    %v1619 = vpack.c.bf16 %v1610, %v1608
    %v1620 = vpack.c.bf16 %v1613, %v1611
    %v1621 = vpack.c.bf16 %v1614, %v1612
    %v1622 = vpack.c.bf16 %v1615, %v1615
    %v1623 = vpack.c.bf16 %v1616, %v1616
    %v1624 = vld [vmem:[#allocation2] sm:$0x1]
    %1626 = vset.pattern.permute.xlu0 0
    %1627 = vperm.xlu0 %1626, %v1624
    %v1628 = vpop.permute.xlu0 %1627
    %v1630 = vperm.slane %v1628, 0
    %v1632 = vsel %vm258, %v1617, 0
    %v1635 = vsel %vm268, %v1622, 0
    %v1638 = vsel %vm268, %v1623, 0
    %1640 = vmatpush.bf16.msra.mxu0 0
    %1641 = vmatpush.bf16.msra.mxu0 0
    %1642 = vmatpush.bf16.msra.mxu0 0
    %1643 = vmatpush.bf16.msra.mxu0 0
    %1644 = vmatpush.bf16.msra.mxu0 0
    %1645 = vmatpush.bf16.msra.mxu0 %v1635
    %1646 = vmatpush.bf16.msra.mxu0 %v1620
    %1647 = vmatpush.bf16.msra.mxu0 %v1618
    %1648 = vmatmul.bf16.gmra.mxu0 %v1632
    %v1649 = vpop.f32.mrf.mxu0
    %v1650 = vadd.f32 %v1630, %v1649
    %v1651 = vpop.f32.mrf.mxu0
    %1652 = vdwg.mxu0
    %1653 = vmatpush.bf16.msra.mxu0 0
    %1654 = vmatpush.bf16.msra.mxu0 0
    %1655 = vmatpush.bf16.msra.mxu0 0
    %1656 = vmatpush.bf16.msra.mxu0 0
    %1657 = vmatpush.bf16.msra.mxu0 0
    %1658 = vmatpush.bf16.msra.mxu0 %v1638
    %1659 = vmatpush.bf16.msra.mxu0 %v1621
    %1660 = vmatpush.bf16.msra.mxu0 %v1619
    %1661 = vmatmul.bf16.gmra.mxu0 %v1632
    %v1662 = vpop.f32.mrf.mxu0
    %v1663 = vadd.f32 %v1630, %v1662
    %v1664 = vpop.f32.mrf.mxu0
    %1665 = vdwg.mxu0
    %v1668 = vrot.slane %v1663, 7
    %vm1669 = vcmask 1040384
    %v1670 = vsel %vm1669, %v1650, %v1668
    %v1672 = vlaneseq
    %vm1673 = vcmp.ge.s32.totalorder %v1672, 0
    %vm1674 = vcmp.lt.s32.totalorder %v1672, 256
    %vm1675 = vmand %vm1673, %vm1674
    %1676 = vst.msk [vmem:[#allocation3] sm:$0x3] %vm1675, %v1670
    // Predicated region
    $region30: #{tpu_custom_call.1} parent=1 // pred_check
      _
    $region31: #{tpu_custom_call.1} parent=1 // pred_check_branch
      %1678 = sbr.rel (0) target = $region33
    $region32: #{tpu_custom_call.1} parent=1 // pred_region
      %1680 = vsyncadd [#allocation4], 0
      %s1682 = sshll.u32 [#allocation3], 4
      %s1683 = int_to_ptr.vmem [resolvable:$true] %s1682
      %s1684 = sshll.u32 %s7, 4
      %s1685 = int_to_ptr.hbm [resolvable:$true] %s1684
      %1687 = dma.vmem_to_hbm [thread:$0]  %s1683, 32, %s1685, [#allocation4]
    $region33: #{tpu_custom_call.1} parent=1 // pred_fallthru
      _
    // Predicated region
    $region34: #{tpu_custom_call.1} parent=1 // pred_check
      _
    $region35: #{tpu_custom_call.1} parent=1 // pred_check_branch
      %1689 = sbr.rel (0) target = $region37
    $region36: #{tpu_custom_call.1} parent=1 // pred_region
      %1691 = dma.done [#allocation4], 32
    $region37: #{tpu_custom_call.1} parent=1 // pred_fallthru
      _
    %1692 = vsyncpa [#allocation4], 1

// kernel: tpu_custom_call.1
$region0: #{tpu_custom_call.1}
  #allocation0 [shape = 'u32[]', space=smem, size = 0x4, offset = 0x4, fixed_abs, tag = 'smem constant byte address 0x4 - core index']
  #allocation1 [shape = 'u32[72,128]{1,0:T(1,128)}', space=vmem, size = 0x9000, scoped, tag = 'internal scratch']
  #allocation2 [shape = 'f32[1,1]{1,0:T(1,128)S(1)}', space=vmem, size = 0x200, scoped, tag = 'scoped memory for tpu_custom_call.1']
  %s0 = inlined_call_operand.vmem [shape: f32[2,256], index: 0, kind: input, shape index: {}]
  %s1 = inlined_call_operand.vmem [shape: f32[40,2], index: 1, kind: input, shape index: {}]
  %s2 = inlined_call_operand.vmem [shape: f32[40,1], index: 2, kind: input, shape index: {}]
  %s3 = inlined_call_operand.vmem [shape: bf16[9,40,40], index: 3, kind: input, shape index: {}]
  %s4 = inlined_call_operand.vmem [shape: f32[9,40,1], index: 4, kind: input, shape index: {}]
  %s5 = inlined_call_operand.vmem [shape: bf16[1,40], index: 5, kind: input, shape index: {}]
  %s6 = inlined_call_operand.<no memory space> [shape: f32[1,1], index: 6, kind: input, shape index: {}]
  %s7 = inlined_call_operand.hbm [shape: f32[1,256], index: 7, kind: output, shape index: {}]
  %s8 = sld [smem:[#allocation0]]
  $region38: #{tpu_custom_call.1} parent=0
    _
  %s10 = ssub.s32 1, %s8
  %s11 = scalar_select 0, %s10, %s8
  %v12 = vstv %s6
  %13 = vst [vmem:[#allocation2] sm:$0x1] %v12
  $region1: #{tpu_custom_call.1} parent=0
    #allocation3 [shape = 'u8[1024]{0}', space=vmem, size = 0x400, scoped, tag = 'output window, operand 0, single buffered']
    #allocation4 [shape = 's32[1]{0}', space=sflag, size = 0x4, scoped, tag = 'scoped memory for tpu_custom_call.1']
    %14 = vsyncpa [#allocation4], 0
    // Predicated region
    $region2: #{tpu_custom_call.1} parent=1 // pred_check
      _
    $region3: #{tpu_custom_call.1} parent=1 // pred_check_branch
      %16 = sbr.rel (0) target = $region5
    $region4: #{tpu_custom_call.1} parent=1 // pred_region
      _
    $region5: #{tpu_custom_call.1} parent=1 // pred_fallthru
      _
    // Predicated region
    $region6: #{tpu_custom_call.1} parent=1 // pred_check
      _
    $region7: #{tpu_custom_call.1} parent=1 // pred_check_branch
      %18 = sbr.rel (0) target = $region9
    $region8: #{tpu_custom_call.1} parent=1 // pred_region
      _
    $region9: #{tpu_custom_call.1} parent=1 // pred_fallthru
      _
    // Predicated region
    $region10: #{tpu_custom_call.1} parent=1 // pred_check
      _
    $region11: #{tpu_custom_call.1} parent=1 // pred_check_branch
      %20 = sbr.rel (0) target = $region13
    $region12: #{tpu_custom_call.1} parent=1 // pred_region
      _
    $region13: #{tpu_custom_call.1} parent=1 // pred_fallthru
      _
    // Predicated region
    $region14: #{tpu_custom_call.1} parent=1 // pred_check
      _
    $region15: #{tpu_custom_call.1} parent=1 // pred_check_branch
      %22 = sbr.rel (0) target = $region17
    $region16: #{tpu_custom_call.1} parent=1 // pred_region
      _
    $region17: #{tpu_custom_call.1} parent=1 // pred_fallthru
      _
    // Predicated region
    $region18: #{tpu_custom_call.1} parent=1 // pred_check
      _
    $region19: #{tpu_custom_call.1} parent=1 // pred_check_branch
      %24 = sbr.rel (0) target = $region21
    $region20: #{tpu_custom_call.1} parent=1 // pred_region
      _
    $region21: #{tpu_custom_call.1} parent=1 // pred_fallthru
      _
    // Predicated region
    $region22: #{tpu_custom_call.1} parent=1 // pred_check
      _
    $region23: #{tpu_custom_call.1} parent=1 // pred_check_branch
      %26 = sbr.rel (0) target = $region25
    $region24: #{tpu_custom_call.1} parent=1 // pred_region
      _
    $region25: #{tpu_custom_call.1} parent=1 // pred_fallthru
      _
    // Predicated region
    $region26: #{tpu_custom_call.1} parent=1 // pred_check
      _
    $region27: #{tpu_custom_call.1} parent=1 // pred_check_branch
      %28 = sbr.rel (0) target = $region29
    $region28: #{tpu_custom_call.1} parent=1 // pred_region
      _
    $region29: #{tpu_custom_call.1} parent=1 // pred_fallthru
      _
    %v30 = vld [vmem:[%s0] sm:$0xf]
    %v31 = vld [vmem:[%s1] sm:$0xff]
    %v32 = vld [vmem:[%s1 + $0x8] sm:$0xff]
    %v33 = vld [vmem:[%s1 + $0x10] sm:$0xff]
    %v34 = vld [vmem:[%s1 + $0x18] sm:$0xff]
    %v35 = vld [vmem:[%s1 + $0x20] sm:$0xff]
    %37 = vset.pattern.permute.xlu0 0
    %38 = vperm.xlu0 %37, %v31
    %v39 = vpop.permute.xlu0 %38
    %42 = vset.pattern.permute.xlu0 0
    %43 = vperm.xlu0 %42, %v32
    %v44 = vpop.permute.xlu0 %43
    %47 = vset.pattern.permute.xlu0 0
    %48 = vperm.xlu0 %47, %v33
    %v49 = vpop.permute.xlu0 %48
    %52 = vset.pattern.permute.xlu0 0
    %53 = vperm.xlu0 %52, %v34
    %v54 = vpop.permute.xlu0 %53
    %57 = vset.pattern.permute.xlu0 0
    %58 = vperm.xlu0 %57, %v35
    %v59 = vpop.permute.xlu0 %58
    %v62 = vperm.slane %v30, 0
    %v63 = vperm.slane %v30, 2
    %v66 = vperm.slane %v62, 0
    %v67 = vperm.slane %v63, 0
    %v68 = vmul.f32 %v39, %v66
    %v69 = vmul.f32 %v39, %v67
    %v70 = vmul.f32 %v44, %v66
    %v71 = vmul.f32 %v44, %v67
    %v72 = vmul.f32 %v49, %v66
    %v73 = vmul.f32 %v49, %v67
    %v74 = vmul.f32 %v54, %v66
    %v75 = vmul.f32 %v54, %v67
    %v76 = vmul.f32 %v59, %v66
    %v77 = vmul.f32 %v59, %v67
    %78 = vset.pattern.permute.xlu0 1
    %79 = vperm.xlu0 %78, %v31
    %v80 = vpop.permute.xlu0 %79
    %82 = vset.pattern.permute.xlu0 1
    %83 = vperm.xlu0 %82, %v32
    %v84 = vpop.permute.xlu0 %83
    %86 = vset.pattern.permute.xlu0 1
    %87 = vperm.xlu0 %86, %v33
    %v88 = vpop.permute.xlu0 %87
    %90 = vset.pattern.permute.xlu0 1
    %91 = vperm.xlu0 %90, %v34
    %v92 = vpop.permute.xlu0 %91
    %94 = vset.pattern.permute.xlu0 1
    %95 = vperm.xlu0 %94, %v35
    %v96 = vpop.permute.xlu0 %95
    %v98 = vperm.slane %v30, 1
    %v99 = vperm.slane %v30, 3
    %v102 = vperm.slane %v98, 1
    %v103 = vperm.slane %v99, 1
    %v104 = vmul.f32 %v80, %v102
    %v105 = vmul.f32 %v80, %v103
    %v106 = vmul.f32 %v84, %v102
    %v107 = vmul.f32 %v84, %v103
    %v108 = vmul.f32 %v88, %v102
    %v109 = vmul.f32 %v88, %v103
    %v110 = vmul.f32 %v92, %v102
    %v111 = vmul.f32 %v92, %v103
    %v112 = vmul.f32 %v96, %v102
    %v113 = vmul.f32 %v96, %v103
    %v114 = vadd.f32 %v68, %v104
    %v115 = vadd.f32 %v69, %v105
    %v116 = vadd.f32 %v70, %v106
    %v117 = vadd.f32 %v71, %v107
    %v118 = vadd.f32 %v72, %v108
    %v119 = vadd.f32 %v73, %v109
    %v120 = vadd.f32 %v74, %v110
    %v121 = vadd.f32 %v75, %v111
    %v122 = vadd.f32 %v76, %v112
    %v123 = vadd.f32 %v77, %v113
    %v124 = vld [vmem:[%s2] sm:$0xff]
    %v125 = vld [vmem:[%s2 + $0x8] sm:$0xff]
    %v126 = vld [vmem:[%s2 + $0x10] sm:$0xff]
    %v127 = vld [vmem:[%s2 + $0x18] sm:$0xff]
    %v128 = vld [vmem:[%s2 + $0x20] sm:$0xff]
    %130 = vset.pattern.permute.xlu0 0
    %131 = vperm.xlu0 %130, %v124
    %v132 = vpop.permute.xlu0 %131
    %135 = vset.pattern.permute.xlu0 0
    %136 = vperm.xlu0 %135, %v125
    %v137 = vpop.permute.xlu0 %136
    %140 = vset.pattern.permute.xlu0 0
    %141 = vperm.xlu0 %140, %v126
    %v142 = vpop.permute.xlu0 %141
    %145 = vset.pattern.permute.xlu0 0
    %146 = vperm.xlu0 %145, %v127
    %v147 = vpop.permute.xlu0 %146
    %150 = vset.pattern.permute.xlu0 0
    %151 = vperm.xlu0 %150, %v128
    %v152 = vpop.permute.xlu0 %151
    %v154 = vadd.f32 %v114, %v132
    %v155 = vadd.f32 %v115, %v132
    %v156 = vadd.f32 %v116, %v137
    %v157 = vadd.f32 %v117, %v137
    %v158 = vadd.f32 %v118, %v142
    %v159 = vadd.f32 %v119, %v142
    %v160 = vadd.f32 %v120, %v147
    %v161 = vadd.f32 %v121, %v147
    %v162 = vadd.f32 %v122, %v152
    %v163 = vadd.f32 %v123, %v152
    %v164 = vmul.f32 %v154, 0.5
    %v165 = vmul.f32 %v155, 0.5
    %v166 = vmul.f32 %v156, 0.5
    %v167 = vmul.f32 %v157, 0.5
    %v168 = vmul.f32 %v158, 0.5
    %v169 = vmul.f32 %v159, 0.5
    %v170 = vmul.f32 %v160, 0.5
    %v171 = vmul.f32 %v161, 0.5
    %v172 = vmul.f32 %v162, 0.5
    %v173 = vmul.f32 %v163, 0.5
    %v174 = vtanh.pop %v164
    %v175 = vtanh.pop %v165
    %v176 = vtanh.pop %v166
    %v177 = vtanh.pop %v167
    %v178 = vtanh.pop %v168
    %v179 = vtanh.pop %v169
    %v180 = vtanh.pop %v170
    %v181 = vtanh.pop %v171
    %v182 = vtanh.pop %v172
    %v183 = vtanh.pop %v173
    %v184 = vadd.f32 %v174, 1.0
    %v185 = vadd.f32 %v175, 1.0
    %v186 = vadd.f32 %v176, 1.0
    %v187 = vadd.f32 %v177, 1.0
    %v188 = vadd.f32 %v178, 1.0
    %v189 = vadd.f32 %v179, 1.0
    %v190 = vadd.f32 %v180, 1.0
    %v191 = vadd.f32 %v181, 1.0
    %v192 = vadd.f32 %v182, 1.0
    %v193 = vadd.f32 %v183, 1.0
    %v194 = vmul.f32 %v164, %v184
    %v195 = vmul.f32 %v165, %v185
    %v196 = vmul.f32 %v166, %v186
    %v197 = vmul.f32 %v167, %v187
    %v198 = vmul.f32 %v168, %v188
    %v199 = vmul.f32 %v169, %v189
    %v200 = vmul.f32 %v170, %v190
    %v201 = vmul.f32 %v171, %v191
    %v202 = vmul.f32 %v172, %v192
    %v203 = vmul.f32 %v173, %v193
    %v204 = vld [vmem:[%s3] sm:$0xf]
    %v205 = vld [vmem:[%s3 + $0x4] sm:$0xf]
    %v206 = vld [vmem:[%s3 + $0x8] sm:$0xf]
    %v207 = vld [vmem:[%s3 + $0xc] sm:$0xf]
    %v208 = vld [vmem:[%s3 + $0x10] sm:$0xf]
    %v209 = vld [vmem:[%s4] sm:$0xff]
    %v210 = vld [vmem:[%s4 + $0x8] sm:$0xff]
    %v211 = vld [vmem:[%s4 + $0x10] sm:$0xff]
    %v212 = vld [vmem:[%s4 + $0x18] sm:$0xff]
    %v213 = vld [vmem:[%s4 + $0x20] sm:$0xff]
    %v214 = vpack.c.bf16 %v196, %v194
    %v215 = vpack.c.bf16 %v197, %v195
    %v216 = vpack.c.bf16 %v200, %v198
    %v217 = vpack.c.bf16 %v201, %v199
    %v218 = vpack.c.bf16 %v202, %v202
    %v219 = vpack.c.bf16 %v203, %v203
    %221 = vset.pattern.permute.xlu0 0
    %222 = vperm.xlu0 %221, %v209
    %v223 = vpop.permute.xlu0 %222
    %226 = vset.pattern.permute.xlu0 0
    %227 = vperm.xlu0 %226, %v210
    %v228 = vpop.permute.xlu0 %227
    %231 = vset.pattern.permute.xlu0 0
    %232 = vperm.xlu0 %231, %v211
    %v233 = vpop.permute.xlu0 %232
    %236 = vset.pattern.permute.xlu0 0
    %237 = vperm.xlu0 %236, %v212
    %v238 = vpop.permute.xlu0 %237
    %241 = vset.pattern.permute.xlu0 0
    %242 = vperm.xlu0 %241, %v213
    %v243 = vpop.permute.xlu0 %242
    %v250 = vunpack.c.l.b16 %v204
    %v251 = vunpack.c.l.b16 %v205
    %v252 = vunpack.c.l.b16 %v206
    %v253 = vunpack.c.l.b16 %v207
    %v254 = vunpack.c.l.b16 %v208
    %v255 = vpack.c.b16 %v251, %v250
    %v256 = vpack.c.b16 %v253, %v252
    %v257 = vpack.c.b16 %v254, %v254
    %vm258 = vcmask 326656
    %v260 = vsel %vm258, %v255, 0
    %v263 = vsel %vm258, %v256, 0
    %v266 = vsel %vm258, %v257, 0
    %vm268 = vcmask 1043456
    %v270 = vsel %vm268, %v218, 0
    %v273 = vsel %vm268, %v219, 0
    %275 = vmatpush.bf16.msra.mxu0 0
    %276 = vmatpush.bf16.msra.mxu0 0
    %277 = vmatpush.bf16.msra.mxu0 0
    %278 = vmatpush.bf16.msra.mxu0 0
    %279 = vmatpush.bf16.msra.mxu0 0
    %280 = vmatpush.bf16.msra.mxu0 %v270
    %281 = vmatpush.bf16.msra.mxu0 %v216
    %282 = vmatpush.bf16.msra.mxu0 %v214
    %283 = vmatmul.bf16.gmra.mxu0 %v260
    %v284 = vpop.f32.mrf.mxu0
    %v285 = vadd.f32 %v223, %v284
    %v286 = vpop.f32.mrf.mxu0
    %v287 = vadd.f32 %v228, %v286
    %288 = vmatmul.bf16.gmra.mxu0 %v263
    %v289 = vpop.f32.mrf.mxu0
    %v290 = vadd.f32 %v233, %v289
    %v291 = vpop.f32.mrf.mxu0
    %v292 = vadd.f32 %v238, %v291
    %293 = vmatmul.bf16.gmra.mxu0 %v266
    %v294 = vpop.f32.mrf.mxu0
    %v295 = vadd.f32 %v243, %v294
    %v296 = vpop.f32.mrf.mxu0
    %297 = vdwg.mxu0
    %298 = vmatpush.bf16.msra.mxu0 0
    %299 = vmatpush.bf16.msra.mxu0 0
    %300 = vmatpush.bf16.msra.mxu0 0
    %301 = vmatpush.bf16.msra.mxu0 0
    %302 = vmatpush.bf16.msra.mxu0 0
    %303 = vmatpush.bf16.msra.mxu0 %v273
    %304 = vmatpush.bf16.msra.mxu0 %v217
    %305 = vmatpush.bf16.msra.mxu0 %v215
    %306 = vmatmul.bf16.gmra.mxu0 %v260
    %v307 = vpop.f32.mrf.mxu0
    %v308 = vadd.f32 %v223, %v307
    %v309 = vpop.f32.mrf.mxu0
    %v310 = vadd.f32 %v228, %v309
    %311 = vmatmul.bf16.gmra.mxu0 %v263
    %v312 = vpop.f32.mrf.mxu0
    %v313 = vadd.f32 %v233, %v312
    %v314 = vpop.f32.mrf.mxu0
    %v315 = vadd.f32 %v238, %v314
    %316 = vmatmul.bf16.gmra.mxu0 %v266
    %v317 = vpop.f32.mrf.mxu0
    %v318 = vadd.f32 %v243, %v317
    %v319 = vpop.f32.mrf.mxu0
    %320 = vdwg.mxu0
    %v321 = vmul.f32 %v285, 0.5
    %v322 = vmul.f32 %v308, 0.5
    %v323 = vmul.f32 %v287, 0.5
    %v324 = vmul.f32 %v310, 0.5
    %v325 = vmul.f32 %v290, 0.5
    %v326 = vmul.f32 %v313, 0.5
    %v327 = vmul.f32 %v292, 0.5
    %v328 = vmul.f32 %v315, 0.5
    %v329 = vmul.f32 %v295, 0.5
    %v330 = vmul.f32 %v318, 0.5
    %v331 = vtanh.pop %v321
    %v332 = vtanh.pop %v322
    %v333 = vtanh.pop %v323
    %v334 = vtanh.pop %v324
    %v335 = vtanh.pop %v325
    %v336 = vtanh.pop %v326
    %v337 = vtanh.pop %v327
    %v338 = vtanh.pop %v328
    %v339 = vtanh.pop %v329
    %v340 = vtanh.pop %v330
    %v341 = vadd.f32 %v331, 1.0
    %v342 = vadd.f32 %v332, 1.0
    %v343 = vadd.f32 %v333, 1.0
    %v344 = vadd.f32 %v334, 1.0
    %v345 = vadd.f32 %v335, 1.0
    %v346 = vadd.f32 %v336, 1.0
    %v347 = vadd.f32 %v337, 1.0
    %v348 = vadd.f32 %v338, 1.0
    %v349 = vadd.f32 %v339, 1.0
    %v350 = vadd.f32 %v340, 1.0
    %v351 = vmul.f32 %v321, %v341
    %v352 = vmul.f32 %v322, %v342
    %v353 = vmul.f32 %v323, %v343
    %v354 = vmul.f32 %v324, %v344
    %v355 = vmul.f32 %v325, %v345
    %v356 = vmul.f32 %v326, %v346
    %v357 = vmul.f32 %v327, %v347
    %v358 = vmul.f32 %v328, %v348
    %v359 = vmul.f32 %v329, %v349
    %v360 = vmul.f32 %v330, %v350
    %s361 = scalar_lea.vmem %s3, 20
    %v362 = vld [vmem:[%s361] sm:$0xf]
    %v363 = vld [vmem:[%s361 + $0x4] sm:$0xf]
    %v364 = vld [vmem:[%s361 + $0x8] sm:$0xf]
    %v365 = vld [vmem:[%s361 + $0xc] sm:$0xf]
    %v366 = vld [vmem:[%s361 + $0x10] sm:$0xf]
    %s367 = scalar_lea.vmem %s4, 40
    %v368 = vld [vmem:[%s367] sm:$0xff]
    %v369 = vld [vmem:[%s367 + $0x8] sm:$0xff]
    %v370 = vld [vmem:[%s367 + $0x10] sm:$0xff]
    %v371 = vld [vmem:[%s367 + $0x18] sm:$0xff]
    %v372 = vld [vmem:[%s367 + $0x20] sm:$0xff]
    %v373 = vpack.c.bf16 %v353, %v351
    %v374 = vpack.c.bf16 %v354, %v352
    %v375 = vpack.c.bf16 %v357, %v355
    %v376 = vpack.c.bf16 %v358, %v356
    %v377 = vpack.c.bf16 %v359, %v359
    %v378 = vpack.c.bf16 %v360, %v360
    %380 = vset.pattern.permute.xlu0 0
    %381 = vperm.xlu0 %380, %v368
    %v382 = vpop.permute.xlu0 %381
    %385 = vset.pattern.permute.xlu0 0
    %386 = vperm.xlu0 %385, %v369
    %v387 = vpop.permute.xlu0 %386
    %390 = vset.pattern.permute.xlu0 0
    %391 = vperm.xlu0 %390, %v370
    %v392 = vpop.permute.xlu0 %391
    %395 = vset.pattern.permute.xlu0 0
    %396 = vperm.xlu0 %395, %v371
    %v397 = vpop.permute.xlu0 %396
    %400 = vset.pattern.permute.xlu0 0
    %401 = vperm.xlu0 %400, %v372
    %v402 = vpop.permute.xlu0 %401
    %v409 = vunpack.c.l.b16 %v362
    %v410 = vunpack.c.l.b16 %v363
    %v411 = vunpack.c.l.b16 %v364
    %v412 = vunpack.c.l.b16 %v365
    %v413 = vunpack.c.l.b16 %v366
    %v414 = vpack.c.b16 %v410, %v409
    %v415 = vpack.c.b16 %v412, %v411
    %v416 = vpack.c.b16 %v413, %v413
    %v418 = vsel %vm258, %v414, 0
    %v421 = vsel %vm258, %v415, 0
    %v424 = vsel %vm258, %v416, 0
    %v427 = vsel %vm268, %v377, 0
    %v430 = vsel %vm268, %v378, 0
    %432 = vmatpush.bf16.msra.mxu0 0
    %433 = vmatpush.bf16.msra.mxu0 0
    %434 = vmatpush.bf16.msra.mxu0 0
    %435 = vmatpush.bf16.msra.mxu0 0
    %436 = vmatpush.bf16.msra.mxu0 0
    %437 = vmatpush.bf16.msra.mxu0 %v427
    %438 = vmatpush.bf16.msra.mxu0 %v375
    %439 = vmatpush.bf16.msra.mxu0 %v373
    %440 = vmatmul.bf16.gmra.mxu0 %v418
    %v441 = vpop.f32.mrf.mxu0
    %v442 = vadd.f32 %v382, %v441
    %v443 = vpop.f32.mrf.mxu0
    %v444 = vadd.f32 %v387, %v443
    %445 = vmatmul.bf16.gmra.mxu0 %v421
    %v446 = vpop.f32.mrf.mxu0
    %v447 = vadd.f32 %v392, %v446
    %v448 = vpop.f32.mrf.mxu0
    %v449 = vadd.f32 %v397, %v448
    %450 = vmatmul.bf16.gmra.mxu0 %v424
    %v451 = vpop.f32.mrf.mxu0
    %v452 = vadd.f32 %v402, %v451
    %v453 = vpop.f32.mrf.mxu0
    %454 = vdwg.mxu0
    %455 = vmatpush.bf16.msra.mxu0 0
    %456 = vmatpush.bf16.msra.mxu0 0
    %457 = vmatpush.bf16.msra.mxu0 0
    %458 = vmatpush.bf16.msra.mxu0 0
    %459 = vmatpush.bf16.msra.mxu0 0
    %460 = vmatpush.bf16.msra.mxu0 %v430
    %461 = vmatpush.bf16.msra.mxu0 %v376
    %462 = vmatpush.bf16.msra.mxu0 %v374
    %463 = vmatmul.bf16.gmra.mxu0 %v418
    %v464 = vpop.f32.mrf.mxu0
    %v465 = vadd.f32 %v382, %v464
    %v466 = vpop.f32.mrf.mxu0
    %v467 = vadd.f32 %v387, %v466
    %468 = vmatmul.bf16.gmra.mxu0 %v421
    %v469 = vpop.f32.mrf.mxu0
    %v470 = vadd.f32 %v392, %v469
    %v471 = vpop.f32.mrf.mxu0
    %v472 = vadd.f32 %v397, %v471
    %473 = vmatmul.bf16.gmra.mxu0 %v424
    %v474 = vpop.f32.mrf.mxu0
    %v475 = vadd.f32 %v402, %v474
    %v476 = vpop.f32.mrf.mxu0
    %477 = vdwg.mxu0
    %v478 = vmul.f32 %v442, 0.5
    %v479 = vmul.f32 %v465, 0.5
    %v480 = vmul.f32 %v444, 0.5
    %v481 = vmul.f32 %v467, 0.5
    %v482 = vmul.f32 %v447, 0.5
    %v483 = vmul.f32 %v470, 0.5
    %v484 = vmul.f32 %v449, 0.5
    %v485 = vmul.f32 %v472, 0.5
    %v486 = vmul.f32 %v452, 0.5
    %v487 = vmul.f32 %v475, 0.5
    %v488 = vtanh.pop %v478
    %v489 = vtanh.pop %v479
    %v490 = vtanh.pop %v480
    %v491 = vtanh.pop %v481
    %v492 = vtanh.pop %v482
    %v493 = vtanh.pop %v483
    %v494 = vtanh.pop %v484
    %v495 = vtanh.pop %v485
    %v496 = vtanh.pop %v486
    %v497 = vtanh.pop %v487
    %v498 = vadd.f32 %v488, 1.0
    %v499 = vadd.f32 %v489, 1.0
    %v500 = vadd.f32 %v490, 1.0
    %v501 = vadd.f32 %v491, 1.0
    %v502 = vadd.f32 %v492, 1.0
    %v503 = vadd.f32 %v493, 1.0
    %v504 = vadd.f32 %v494, 1.0
    %v505 = vadd.f32 %v495, 1.0
    %v506 = vadd.f32 %v496, 1.0
    %v507 = vadd.f32 %v497, 1.0
    %v508 = vmul.f32 %v478, %v498
    %v509 = vmul.f32 %v479, %v499
    %v510 = vmul.f32 %v480, %v500
    %v511 = vmul.f32 %v481, %v501
    %v512 = vmul.f32 %v482, %v502
    %v513 = vmul.f32 %v483, %v503
    %v514 = vmul.f32 %v484, %v504
    %v515 = vmul.f32 %v485, %v505
    %v516 = vmul.f32 %v486, %v506
    %v517 = vmul.f32 %v487, %v507
    %s518 = scalar_lea.vmem %s3, 40
    %v519 = vld [vmem:[%s518] sm:$0xf]
    %v520 = vld [vmem:[%s518 + $0x4] sm:$0xf]
    %v521 = vld [vmem:[%s518 + $0x8] sm:$0xf]
    %v522 = vld [vmem:[%s518 + $0xc] sm:$0xf]
    %v523 = vld [vmem:[%s518 + $0x10] sm:$0xf]
    %s524 = scalar_lea.vmem %s4, 80
    %v525 = vld [vmem:[%s524] sm:$0xff]
    %v526 = vld [vmem:[%s524 + $0x8] sm:$0xff]
    %v527 = vld [vmem:[%s524 + $0x10] sm:$0xff]
    %v528 = vld [vmem:[%s524 + $0x18] sm:$0xff]
    %v529 = vld [vmem:[%s524 + $0x20] sm:$0xff]
    %v530 = vpack.c.bf16 %v510, %v508
    %v531 = vpack.c.bf16 %v511, %v509
    %v532 = vpack.c.bf16 %v514, %v512
    %v533 = vpack.c.bf16 %v515, %v513
    %v534 = vpack.c.bf16 %v516, %v516
    %v535 = vpack.c.bf16 %v517, %v517
    %537 = vset.pattern.permute.xlu0 0
    %538 = vperm.xlu0 %537, %v525
    %v539 = vpop.permute.xlu0 %538
    %542 = vset.pattern.permute.xlu0 0
    %543 = vperm.xlu0 %542, %v526
    %v544 = vpop.permute.xlu0 %543
    %547 = vset.pattern.permute.xlu0 0
    %548 = vperm.xlu0 %547, %v527
    %v549 = vpop.permute.xlu0 %548
    %552 = vset.pattern.permute.xlu0 0
    %553 = vperm.xlu0 %552, %v528
    %v554 = vpop.permute.xlu0 %553
    %557 = vset.pattern.permute.xlu0 0
    %558 = vperm.xlu0 %557, %v529
    %v559 = vpop.permute.xlu0 %558
    %v566 = vunpack.c.l.b16 %v519
    %v567 = vunpack.c.l.b16 %v520
    %v568 = vunpack.c.l.b16 %v521
    %v569 = vunpack.c.l.b16 %v522
    %v570 = vunpack.c.l.b16 %v523
    %v571 = vpack.c.b16 %v567, %v566
    %v572 = vpack.c.b16 %v569, %v568
    %v573 = vpack.c.b16 %v570, %v570
    %v575 = vsel %vm258, %v571, 0
    %v578 = vsel %vm258, %v572, 0
    %v581 = vsel %vm258, %v573, 0
    %v584 = vsel %vm268, %v534, 0
    %v587 = vsel %vm268, %v535, 0
    %589 = vmatpush.bf16.msra.mxu0 0
    %590 = vmatpush.bf16.msra.mxu0 0
    %591 = vmatpush.bf16.msra.mxu0 0
    %592 = vmatpush.bf16.msra.mxu0 0
    %593 = vmatpush.bf16.msra.mxu0 0
    %594 = vmatpush.bf16.msra.mxu0 %v584
    %595 = vmatpush.bf16.msra.mxu0 %v532
    %596 = vmatpush.bf16.msra.mxu0 %v530
    %597 = vmatmul.bf16.gmra.mxu0 %v575
    %v598 = vpop.f32.mrf.mxu0
    %v599 = vadd.f32 %v539, %v598
    %v600 = vpop.f32.mrf.mxu0
    %v601 = vadd.f32 %v544, %v600
    %602 = vmatmul.bf16.gmra.mxu0 %v578
    %v603 = vpop.f32.mrf.mxu0
    %v604 = vadd.f32 %v549, %v603
    %v605 = vpop.f32.mrf.mxu0
    %v606 = vadd.f32 %v554, %v605
    %607 = vmatmul.bf16.gmra.mxu0 %v581
    %v608 = vpop.f32.mrf.mxu0
    %v609 = vadd.f32 %v559, %v608
    %v610 = vpop.f32.mrf.mxu0
    %611 = vdwg.mxu0
    %612 = vmatpush.bf16.msra.mxu0 0
    %613 = vmatpush.bf16.msra.mxu0 0
    %614 = vmatpush.bf16.msra.mxu0 0
    %615 = vmatpush.bf16.msra.mxu0 0
    %616 = vmatpush.bf16.msra.mxu0 0
    %617 = vmatpush.bf16.msra.mxu0 %v587
    %618 = vmatpush.bf16.msra.mxu0 %v533
    %619 = vmatpush.bf16.msra.mxu0 %v531
    %620 = vmatmul.bf16.gmra.mxu0 %v575
    %v621 = vpop.f32.mrf.mxu0
    %v622 = vadd.f32 %v539, %v621
    %v623 = vpop.f32.mrf.mxu0
    %v624 = vadd.f32 %v544, %v623
    %625 = vmatmul.bf16.gmra.mxu0 %v578
    %v626 = vpop.f32.mrf.mxu0
    %v627 = vadd.f32 %v549, %v626
    %v628 = vpop.f32.mrf.mxu0
    %v629 = vadd.f32 %v554, %v628
    %630 = vmatmul.bf16.gmra.mxu0 %v581
    %v631 = vpop.f32.mrf.mxu0
    %v632 = vadd.f32 %v559, %v631
    %v633 = vpop.f32.mrf.mxu0
    %634 = vdwg.mxu0
    %v635 = vmul.f32 %v599, 0.5
    %v636 = vmul.f32 %v622, 0.5
    %v637 = vmul.f32 %v601, 0.5
    %v638 = vmul.f32 %v624, 0.5
    %v639 = vmul.f32 %v604, 0.5
    %v640 = vmul.f32 %v627, 0.5
    %v641 = vmul.f32 %v606, 0.5
    %v642 = vmul.f32 %v629, 0.5
    %v643 = vmul.f32 %v609, 0.5
    %v644 = vmul.f32 %v632, 0.5
    %v645 = vtanh.pop %v635
    %v646 = vtanh.pop %v636
    %v647 = vtanh.pop %v637
    %v648 = vtanh.pop %v638
    %v649 = vtanh.pop %v639
    %v650 = vtanh.pop %v640
    %v651 = vtanh.pop %v641
    %v652 = vtanh.pop %v642
    %v653 = vtanh.pop %v643
    %v654 = vtanh.pop %v644
    %v655 = vadd.f32 %v645, 1.0
    %v656 = vadd.f32 %v646, 1.0
    %v657 = vadd.f32 %v647, 1.0
    %v658 = vadd.f32 %v648, 1.0
    %v659 = vadd.f32 %v649, 1.0
    %v660 = vadd.f32 %v650, 1.0
    %v661 = vadd.f32 %v651, 1.0
    %v662 = vadd.f32 %v652, 1.0
    %v663 = vadd.f32 %v653, 1.0
    %v664 = vadd.f32 %v654, 1.0
    %v665 = vmul.f32 %v635, %v655
    %v666 = vmul.f32 %v636, %v656
    %v667 = vmul.f32 %v637, %v657
    %v668 = vmul.f32 %v638, %v658
    %v669 = vmul.f32 %v639, %v659
    %v670 = vmul.f32 %v640, %v660
    %v671 = vmul.f32 %v641, %v661
    %v672 = vmul.f32 %v642, %v662
    %v673 = vmul.f32 %v643, %v663
    %v674 = vmul.f32 %v644, %v664
    %s675 = scalar_lea.vmem %s3, 60
    %v676 = vld [vmem:[%s675] sm:$0xf]
    %v677 = vld [vmem:[%s675 + $0x4] sm:$0xf]
    %v678 = vld [vmem:[%s675 + $0x8] sm:$0xf]
    %v679 = vld [vmem:[%s675 + $0xc] sm:$0xf]
    %v680 = vld [vmem:[%s675 + $0x10] sm:$0xf]
    %s681 = scalar_lea.vmem %s4, 120
    %v682 = vld [vmem:[%s681] sm:$0xff]
    %v683 = vld [vmem:[%s681 + $0x8] sm:$0xff]
    %v684 = vld [vmem:[%s681 + $0x10] sm:$0xff]
    %v685 = vld [vmem:[%s681 + $0x18] sm:$0xff]
    %v686 = vld [vmem:[%s681 + $0x20] sm:$0xff]
    %v687 = vpack.c.bf16 %v667, %v665
    %v688 = vpack.c.bf16 %v668, %v666
    %v689 = vpack.c.bf16 %v671, %v669
    %v690 = vpack.c.bf16 %v672, %v670
    %v691 = vpack.c.bf16 %v673, %v673
    %v692 = vpack.c.bf16 %v674, %v674
    %694 = vset.pattern.permute.xlu0 0
    %695 = vperm.xlu0 %694, %v682
    %v696 = vpop.permute.xlu0 %695
    %699 = vset.pattern.permute.xlu0 0
    %700 = vperm.xlu0 %699, %v683
    %v701 = vpop.permute.xlu0 %700
    %704 = vset.pattern.permute.xlu0 0
    %705 = vperm.xlu0 %704, %v684
    %v706 = vpop.permute.xlu0 %705
    %709 = vset.pattern.permute.xlu0 0
    %710 = vperm.xlu0 %709, %v685
    %v711 = vpop.permute.xlu0 %710
    %714 = vset.pattern.permute.xlu0 0
    %715 = vperm.xlu0 %714, %v686
    %v716 = vpop.permute.xlu0 %715
    %v723 = vunpack.c.l.b16 %v676
    %v724 = vunpack.c.l.b16 %v677
    %v725 = vunpack.c.l.b16 %v678
    %v726 = vunpack.c.l.b16 %v679
    %v727 = vunpack.c.l.b16 %v680
    %v728 = vpack.c.b16 %v724, %v723
    %v729 = vpack.c.b16 %v726, %v725
    %v730 = vpack.c.b16 %v727, %v727
    %v732 = vsel %vm258, %v728, 0
    %v735 = vsel %vm258, %v729, 0
    %v738 = vsel %vm258, %v730, 0
    %v741 = vsel %vm268, %v691, 0
    %v744 = vsel %vm268, %v692, 0
    %746 = vmatpush.bf16.msra.mxu0 0
    %747 = vmatpush.bf16.msra.mxu0 0
    %748 = vmatpush.bf16.msra.mxu0 0
    %749 = vmatpush.bf16.msra.mxu0 0
    %750 = vmatpush.bf16.msra.mxu0 0
    %751 = vmatpush.bf16.msra.mxu0 %v741
    %752 = vmatpush.bf16.msra.mxu0 %v689
    %753 = vmatpush.bf16.msra.mxu0 %v687
    %754 = vmatmul.bf16.gmra.mxu0 %v732
    %v755 = vpop.f32.mrf.mxu0
    %v756 = vadd.f32 %v696, %v755
    %v757 = vpop.f32.mrf.mxu0
    %v758 = vadd.f32 %v701, %v757
    %759 = vmatmul.bf16.gmra.mxu0 %v735
    %v760 = vpop.f32.mrf.mxu0
    %v761 = vadd.f32 %v706, %v760
    %v762 = vpop.f32.mrf.mxu0
    %v763 = vadd.f32 %v711, %v762
    %764 = vmatmul.bf16.gmra.mxu0 %v738
    %v765 = vpop.f32.mrf.mxu0
    %v766 = vadd.f32 %v716, %v765
    %v767 = vpop.f32.mrf.mxu0
    %768 = vdwg.mxu0
    %769 = vmatpush.bf16.msra.mxu0 0
    %770 = vmatpush.bf16.msra.mxu0 0
    %771 = vmatpush.bf16.msra.mxu0 0
    %772 = vmatpush.bf16.msra.mxu0 0
    %773 = vmatpush.bf16.msra.mxu0 0
    %774 = vmatpush.bf16.msra.mxu0 %v744
    %775 = vmatpush.bf16.msra.mxu0 %v690
    %776 = vmatpush.bf16.msra.mxu0 %v688
    %777 = vmatmul.bf16.gmra.mxu0 %v732
    %v778 = vpop.f32.mrf.mxu0
    %v779 = vadd.f32 %v696, %v778
    %v780 = vpop.f32.mrf.mxu0
    %v781 = vadd.f32 %v701, %v780
    %782 = vmatmul.bf16.gmra.mxu0 %v735
    %v783 = vpop.f32.mrf.mxu0
    %v784 = vadd.f32 %v706, %v783
    %v785 = vpop.f32.mrf.mxu0
    %v786 = vadd.f32 %v711, %v785
    %787 = vmatmul.bf16.gmra.mxu0 %v738
    %v788 = vpop.f32.mrf.mxu0
    %v789 = vadd.f32 %v716, %v788
    %v790 = vpop.f32.mrf.mxu0
    %791 = vdwg.mxu0
    %v792 = vmul.f32 %v756, 0.5
    %v793 = vmul.f32 %v779, 0.5
    %v794 = vmul.f32 %v758, 0.5
    %v795 = vmul.f32 %v781, 0.5
    %v796 = vmul.f32 %v761, 0.5
    %v797 = vmul.f32 %v784, 0.5
    %v798 = vmul.f32 %v763, 0.5
    %v799 = vmul.f32 %v786, 0.5
    %v800 = vmul.f32 %v766, 0.5
    %v801 = vmul.f32 %v789, 0.5
    %v802 = vtanh.pop %v792
    %v803 = vtanh.pop %v793
    %v804 = vtanh.pop %v794
    %v805 = vtanh.pop %v795
    %v806 = vtanh.pop %v796
    %v807 = vtanh.pop %v797
    %v808 = vtanh.pop %v798
    %v809 = vtanh.pop %v799
    %v810 = vtanh.pop %v800
    %v811 = vtanh.pop %v801
    %v812 = vadd.f32 %v802, 1.0
    %v813 = vadd.f32 %v803, 1.0
    %v814 = vadd.f32 %v804, 1.0
    %v815 = vadd.f32 %v805, 1.0
    %v816 = vadd.f32 %v806, 1.0
    %v817 = vadd.f32 %v807, 1.0
    %v818 = vadd.f32 %v808, 1.0
    %v819 = vadd.f32 %v809, 1.0
    %v820 = vadd.f32 %v810, 1.0
    %v821 = vadd.f32 %v811, 1.0
    %v822 = vmul.f32 %v792, %v812
    %v823 = vmul.f32 %v793, %v813
    %v824 = vmul.f32 %v794, %v814
    %v825 = vmul.f32 %v795, %v815
    %v826 = vmul.f32 %v796, %v816
    %v827 = vmul.f32 %v797, %v817
    %v828 = vmul.f32 %v798, %v818
    %v829 = vmul.f32 %v799, %v819
    %v830 = vmul.f32 %v800, %v820
    %v831 = vmul.f32 %v801, %v821
    %s832 = scalar_lea.vmem %s3, 80
    %v833 = vld [vmem:[%s832] sm:$0xf]
    %v834 = vld [vmem:[%s832 + $0x4] sm:$0xf]
    %v835 = vld [vmem:[%s832 + $0x8] sm:$0xf]
    %v836 = vld [vmem:[%s832 + $0xc] sm:$0xf]
    %v837 = vld [vmem:[%s832 + $0x10] sm:$0xf]
    %s838 = scalar_lea.vmem %s4, 160
    %v839 = vld [vmem:[%s838] sm:$0xff]
    %v840 = vld [vmem:[%s838 + $0x8] sm:$0xff]
    %v841 = vld [vmem:[%s838 + $0x10] sm:$0xff]
    %v842 = vld [vmem:[%s838 + $0x18] sm:$0xff]
    %v843 = vld [vmem:[%s838 + $0x20] sm:$0xff]
    %v844 = vpack.c.bf16 %v824, %v822
    %v845 = vpack.c.bf16 %v825, %v823
    %v846 = vpack.c.bf16 %v828, %v826
    %v847 = vpack.c.bf16 %v829, %v827
    %v848 = vpack.c.bf16 %v830, %v830
    %v849 = vpack.c.bf16 %v831, %v831
    %851 = vset.pattern.permute.xlu0 0
    %852 = vperm.xlu0 %851, %v839
    %v853 = vpop.permute.xlu0 %852
    %856 = vset.pattern.permute.xlu0 0
    %857 = vperm.xlu0 %856, %v840
    %v858 = vpop.permute.xlu0 %857
    %861 = vset.pattern.permute.xlu0 0
    %862 = vperm.xlu0 %861, %v841
    %v863 = vpop.permute.xlu0 %862
    %866 = vset.pattern.permute.xlu0 0
    %867 = vperm.xlu0 %866, %v842
    %v868 = vpop.permute.xlu0 %867
    %871 = vset.pattern.permute.xlu0 0
    %872 = vperm.xlu0 %871, %v843
    %v873 = vpop.permute.xlu0 %872
    %v880 = vunpack.c.l.b16 %v833
    %v881 = vunpack.c.l.b16 %v834
    %v882 = vunpack.c.l.b16 %v835
    %v883 = vunpack.c.l.b16 %v836
    %v884 = vunpack.c.l.b16 %v837
    %v885 = vpack.c.b16 %v881, %v880
    %v886 = vpack.c.b16 %v883, %v882
    %v887 = vpack.c.b16 %v884, %v884
    %v889 = vsel %vm258, %v885, 0
    %v892 = vsel %vm258, %v886, 0
    %v895 = vsel %vm258, %v887, 0
    %v898 = vsel %vm268, %v848, 0
    %v901 = vsel %vm268, %v849, 0
    %903 = vmatpush.bf16.msra.mxu0 0
    %904 = vmatpush.bf16.msra.mxu0 0
    %905 = vmatpush.bf16.msra.mxu0 0
    %906 = vmatpush.bf16.msra.mxu0 0
    %907 = vmatpush.bf16.msra.mxu0 0
    %908 = vmatpush.bf16.msra.mxu0 %v898
    %909 = vmatpush.bf16.msra.mxu0 %v846
    %910 = vmatpush.bf16.msra.mxu0 %v844
    %911 = vmatmul.bf16.gmra.mxu0 %v889
    %v912 = vpop.f32.mrf.mxu0
    %v913 = vadd.f32 %v853, %v912
    %v914 = vpop.f32.mrf.mxu0
    %v915 = vadd.f32 %v858, %v914
    %916 = vmatmul.bf16.gmra.mxu0 %v892
    %v917 = vpop.f32.mrf.mxu0
    %v918 = vadd.f32 %v863, %v917
    %v919 = vpop.f32.mrf.mxu0
    %v920 = vadd.f32 %v868, %v919
    %921 = vmatmul.bf16.gmra.mxu0 %v895
    %v922 = vpop.f32.mrf.mxu0
    %v923 = vadd.f32 %v873, %v922
    %v924 = vpop.f32.mrf.mxu0
    %925 = vdwg.mxu0
    %926 = vmatpush.bf16.msra.mxu0 0
    %927 = vmatpush.bf16.msra.mxu0 0
    %928 = vmatpush.bf16.msra.mxu0 0
    %929 = vmatpush.bf16.msra.mxu0 0
    %930 = vmatpush.bf16.msra.mxu0 0
    %931 = vmatpush.bf16.msra.mxu0 %v901
    %932 = vmatpush.bf16.msra.mxu0 %v847
    %933 = vmatpush.bf16.msra.mxu0 %v845
    %934 = vmatmul.bf16.gmra.mxu0 %v889
    %v935 = vpop.f32.mrf.mxu0
    %v936 = vadd.f32 %v853, %v935
    %v937 = vpop.f32.mrf.mxu0
    %v938 = vadd.f32 %v858, %v937
    %939 = vmatmul.bf16.gmra.mxu0 %v892
    %v940 = vpop.f32.mrf.mxu0
    %v941 = vadd.f32 %v863, %v940
    %v942 = vpop.f32.mrf.mxu0
    %v943 = vadd.f32 %v868, %v942
    %944 = vmatmul.bf16.gmra.mxu0 %v895
    %v945 = vpop.f32.mrf.mxu0
    %v946 = vadd.f32 %v873, %v945
    %v947 = vpop.f32.mrf.mxu0
    %948 = vdwg.mxu0
    %v949 = vmul.f32 %v913, 0.5
    %v950 = vmul.f32 %v936, 0.5
    %v951 = vmul.f32 %v915, 0.5
    %v952 = vmul.f32 %v938, 0.5
    %v953 = vmul.f32 %v918, 0.5
    %v954 = vmul.f32 %v941, 0.5
    %v955 = vmul.f32 %v920, 0.5
    %v956 = vmul.f32 %v943, 0.5
    %v957 = vmul.f32 %v923, 0.5
    %v958 = vmul.f32 %v946, 0.5
    %v959 = vtanh.pop %v949
    %v960 = vtanh.pop %v950
    %v961 = vtanh.pop %v951
    %v962 = vtanh.pop %v952
    %v963 = vtanh.pop %v953
    %v964 = vtanh.pop %v954
    %v965 = vtanh.pop %v955
    %v966 = vtanh.pop %v956
    %v967 = vtanh.pop %v957
    %v968 = vtanh.pop %v958
    %v969 = vadd.f32 %v959, 1.0
    %v970 = vadd.f32 %v960, 1.0
    %v971 = vadd.f32 %v961, 1.0
    %v972 = vadd.f32 %v962, 1.0
    %v973 = vadd.f32 %v963, 1.0
    %v974 = vadd.f32 %v964, 1.0
    %v975 = vadd.f32 %v965, 1.0
    %v976 = vadd.f32 %v966, 1.0
    %v977 = vadd.f32 %v967, 1.0
    %v978 = vadd.f32 %v968, 1.0
    %v979 = vmul.f32 %v949, %v969
    %v980 = vmul.f32 %v950, %v970
    %v981 = vmul.f32 %v951, %v971
    %v982 = vmul.f32 %v952, %v972
    %v983 = vmul.f32 %v953, %v973
    %v984 = vmul.f32 %v954, %v974
    %v985 = vmul.f32 %v955, %v975
    %v986 = vmul.f32 %v956, %v976
    %v987 = vmul.f32 %v957, %v977
    %v988 = vmul.f32 %v958, %v978
    %s989 = scalar_lea.vmem %s3, 100
    %v990 = vld [vmem:[%s989] sm:$0xf]
    %v991 = vld [vmem:[%s989 + $0x4] sm:$0xf]
    %v992 = vld [vmem:[%s989 + $0x8] sm:$0xf]
    %v993 = vld [vmem:[%s989 + $0xc] sm:$0xf]
    %v994 = vld [vmem:[%s989 + $0x10] sm:$0xf]
    %s995 = scalar_lea.vmem %s4, 200
    %v996 = vld [vmem:[%s995] sm:$0xff]
    %v997 = vld [vmem:[%s995 + $0x8] sm:$0xff]
    %v998 = vld [vmem:[%s995 + $0x10] sm:$0xff]
    %v999 = vld [vmem:[%s995 + $0x18] sm:$0xff]
    %v1000 = vld [vmem:[%s995 + $0x20] sm:$0xff]
    %v1001 = vpack.c.bf16 %v981, %v979
    %v1002 = vpack.c.bf16 %v982, %v980
    %v1003 = vpack.c.bf16 %v985, %v983
    %v1004 = vpack.c.bf16 %v986, %v984
    %v1005 = vpack.c.bf16 %v987, %v987
    %v1006 = vpack.c.bf16 %v988, %v988
    %1008 = vset.pattern.permute.xlu0 0
    %1009 = vperm.xlu0 %1008, %v996
    %v1010 = vpop.permute.xlu0 %1009
    %1013 = vset.pattern.permute.xlu0 0
    %1014 = vperm.xlu0 %1013, %v997
    %v1015 = vpop.permute.xlu0 %1014
    %1018 = vset.pattern.permute.xlu0 0
    %1019 = vperm.xlu0 %1018, %v998
    %v1020 = vpop.permute.xlu0 %1019
    %1023 = vset.pattern.permute.xlu0 0
    %1024 = vperm.xlu0 %1023, %v999
    %v1025 = vpop.permute.xlu0 %1024
    %1028 = vset.pattern.permute.xlu0 0
    %1029 = vperm.xlu0 %1028, %v1000
    %v1030 = vpop.permute.xlu0 %1029
    %v1037 = vunpack.c.l.b16 %v990
    %v1038 = vunpack.c.l.b16 %v991
    %v1039 = vunpack.c.l.b16 %v992
    %v1040 = vunpack.c.l.b16 %v993
    %v1041 = vunpack.c.l.b16 %v994
    %v1042 = vpack.c.b16 %v1038, %v1037
    %v1043 = vpack.c.b16 %v1040, %v1039
    %v1044 = vpack.c.b16 %v1041, %v1041
    %v1046 = vsel %vm258, %v1042, 0
    %v1049 = vsel %vm258, %v1043, 0
    %v1052 = vsel %vm258, %v1044, 0
    %v1055 = vsel %vm268, %v1005, 0
    %v1058 = vsel %vm268, %v1006, 0
    %1060 = vmatpush.bf16.msra.mxu0 0
    %1061 = vmatpush.bf16.msra.mxu0 0
    %1062 = vmatpush.bf16.msra.mxu0 0
    %1063 = vmatpush.bf16.msra.mxu0 0
    %1064 = vmatpush.bf16.msra.mxu0 0
    %1065 = vmatpush.bf16.msra.mxu0 %v1055
    %1066 = vmatpush.bf16.msra.mxu0 %v1003
    %1067 = vmatpush.bf16.msra.mxu0 %v1001
    %1068 = vmatmul.bf16.gmra.mxu0 %v1046
    %v1069 = vpop.f32.mrf.mxu0
    %v1070 = vadd.f32 %v1010, %v1069
    %v1071 = vpop.f32.mrf.mxu0
    %v1072 = vadd.f32 %v1015, %v1071
    %1073 = vmatmul.bf16.gmra.mxu0 %v1049
    %v1074 = vpop.f32.mrf.mxu0
    %v1075 = vadd.f32 %v1020, %v1074
    %v1076 = vpop.f32.mrf.mxu0
    %v1077 = vadd.f32 %v1025, %v1076
    %1078 = vmatmul.bf16.gmra.mxu0 %v1052
    %v1079 = vpop.f32.mrf.mxu0
    %v1080 = vadd.f32 %v1030, %v1079
    %v1081 = vpop.f32.mrf.mxu0
    %1082 = vdwg.mxu0
    %1083 = vmatpush.bf16.msra.mxu0 0
    %1084 = vmatpush.bf16.msra.mxu0 0
    %1085 = vmatpush.bf16.msra.mxu0 0
    %1086 = vmatpush.bf16.msra.mxu0 0
    %1087 = vmatpush.bf16.msra.mxu0 0
    %1088 = vmatpush.bf16.msra.mxu0 %v1058
    %1089 = vmatpush.bf16.msra.mxu0 %v1004
    %1090 = vmatpush.bf16.msra.mxu0 %v1002
    %1091 = vmatmul.bf16.gmra.mxu0 %v1046
    %v1092 = vpop.f32.mrf.mxu0
    %v1093 = vadd.f32 %v1010, %v1092
    %v1094 = vpop.f32.mrf.mxu0
    %v1095 = vadd.f32 %v1015, %v1094
    %1096 = vmatmul.bf16.gmra.mxu0 %v1049
    %v1097 = vpop.f32.mrf.mxu0
    %v1098 = vadd.f32 %v1020, %v1097
    %v1099 = vpop.f32.mrf.mxu0
    %v1100 = vadd.f32 %v1025, %v1099
    %1101 = vmatmul.bf16.gmra.mxu0 %v1052
    %v1102 = vpop.f32.mrf.mxu0
    %v1103 = vadd.f32 %v1030, %v1102
    %v1104 = vpop.f32.mrf.mxu0
    %1105 = vdwg.mxu0
    %v1106 = vmul.f32 %v1070, 0.5
    %v1107 = vmul.f32 %v1093, 0.5
    %v1108 = vmul.f32 %v1072, 0.5
    %v1109 = vmul.f32 %v1095, 0.5
    %v1110 = vmul.f32 %v1075, 0.5
    %v1111 = vmul.f32 %v1098, 0.5
    %v1112 = vmul.f32 %v1077, 0.5
    %v1113 = vmul.f32 %v1100, 0.5
    %v1114 = vmul.f32 %v1080, 0.5
    %v1115 = vmul.f32 %v1103, 0.5
    %v1116 = vtanh.pop %v1106
    %v1117 = vtanh.pop %v1107
    %v1118 = vtanh.pop %v1108
    %v1119 = vtanh.pop %v1109
    %v1120 = vtanh.pop %v1110
    %v1121 = vtanh.pop %v1111
    %v1122 = vtanh.pop %v1112
    %v1123 = vtanh.pop %v1113
    %v1124 = vtanh.pop %v1114
    %v1125 = vtanh.pop %v1115
    %v1126 = vadd.f32 %v1116, 1.0
    %v1127 = vadd.f32 %v1117, 1.0
    %v1128 = vadd.f32 %v1118, 1.0
    %v1129 = vadd.f32 %v1119, 1.0
    %v1130 = vadd.f32 %v1120, 1.0
    %v1131 = vadd.f32 %v1121, 1.0
    %v1132 = vadd.f32 %v1122, 1.0
    %v1133 = vadd.f32 %v1123, 1.0
    %v1134 = vadd.f32 %v1124, 1.0
    %v1135 = vadd.f32 %v1125, 1.0
    %v1136 = vmul.f32 %v1106, %v1126
    %v1137 = vmul.f32 %v1107, %v1127
    %v1138 = vmul.f32 %v1108, %v1128
    %v1139 = vmul.f32 %v1109, %v1129
    %v1140 = vmul.f32 %v1110, %v1130
    %v1141 = vmul.f32 %v1111, %v1131
    %v1142 = vmul.f32 %v1112, %v1132
    %v1143 = vmul.f32 %v1113, %v1133
    %v1144 = vmul.f32 %v1114, %v1134
    %v1145 = vmul.f32 %v1115, %v1135
    %s1146 = scalar_lea.vmem %s3, 120
    %v1147 = vld [vmem:[%s1146] sm:$0xf]
    %v1148 = vld [vmem:[%s1146 + $0x4] sm:$0xf]
    %v1149 = vld [vmem:[%s1146 + $0x8] sm:$0xf]
    %v1150 = vld [vmem:[%s1146 + $0xc] sm:$0xf]
    %v1151 = vld [vmem:[%s1146 + $0x10] sm:$0xf]
    %s1152 = scalar_lea.vmem %s4, 240
    %v1153 = vld [vmem:[%s1152] sm:$0xff]
    %v1154 = vld [vmem:[%s1152 + $0x8] sm:$0xff]
    %v1155 = vld [vmem:[%s1152 + $0x10] sm:$0xff]
    %v1156 = vld [vmem:[%s1152 + $0x18] sm:$0xff]
    %v1157 = vld [vmem:[%s1152 + $0x20] sm:$0xff]
    %v1158 = vpack.c.bf16 %v1138, %v1136
    %v1159 = vpack.c.bf16 %v1139, %v1137
    %v1160 = vpack.c.bf16 %v1142, %v1140
    %v1161 = vpack.c.bf16 %v1143, %v1141
    %v1162 = vpack.c.bf16 %v1144, %v1144
    %v1163 = vpack.c.bf16 %v1145, %v1145
    %1165 = vset.pattern.permute.xlu0 0
    %1166 = vperm.xlu0 %1165, %v1153
    %v1167 = vpop.permute.xlu0 %1166
    %1170 = vset.pattern.permute.xlu0 0
    %1171 = vperm.xlu0 %1170, %v1154
    %v1172 = vpop.permute.xlu0 %1171
    %1175 = vset.pattern.permute.xlu0 0
    %1176 = vperm.xlu0 %1175, %v1155
    %v1177 = vpop.permute.xlu0 %1176
    %1180 = vset.pattern.permute.xlu0 0
    %1181 = vperm.xlu0 %1180, %v1156
    %v1182 = vpop.permute.xlu0 %1181
    %1185 = vset.pattern.permute.xlu0 0
    %1186 = vperm.xlu0 %1185, %v1157
    %v1187 = vpop.permute.xlu0 %1186
    %v1194 = vunpack.c.l.b16 %v1147
    %v1195 = vunpack.c.l.b16 %v1148
    %v1196 = vunpack.c.l.b16 %v1149
    %v1197 = vunpack.c.l.b16 %v1150
    %v1198 = vunpack.c.l.b16 %v1151
    %v1199 = vpack.c.b16 %v1195, %v1194
    %v1200 = vpack.c.b16 %v1197, %v1196
    %v1201 = vpack.c.b16 %v1198, %v1198
    %v1203 = vsel %vm258, %v1199, 0
    %v1206 = vsel %vm258, %v1200, 0
    %v1209 = vsel %vm258, %v1201, 0
    %v1212 = vsel %vm268, %v1162, 0
    %v1215 = vsel %vm268, %v1163, 0
    %1217 = vmatpush.bf16.msra.mxu0 0
    %1218 = vmatpush.bf16.msra.mxu0 0
    %1219 = vmatpush.bf16.msra.mxu0 0
    %1220 = vmatpush.bf16.msra.mxu0 0
    %1221 = vmatpush.bf16.msra.mxu0 0
    %1222 = vmatpush.bf16.msra.mxu0 %v1212
    %1223 = vmatpush.bf16.msra.mxu0 %v1160
    %1224 = vmatpush.bf16.msra.mxu0 %v1158
    %1225 = vmatmul.bf16.gmra.mxu0 %v1203
    %v1226 = vpop.f32.mrf.mxu0
    %v1227 = vadd.f32 %v1167, %v1226
    %v1228 = vpop.f32.mrf.mxu0
    %v1229 = vadd.f32 %v1172, %v1228
    %1230 = vmatmul.bf16.gmra.mxu0 %v1206
    %v1231 = vpop.f32.mrf.mxu0
    %v1232 = vadd.f32 %v1177, %v1231
    %v1233 = vpop.f32.mrf.mxu0
    %v1234 = vadd.f32 %v1182, %v1233
    %1235 = vmatmul.bf16.gmra.mxu0 %v1209
    %v1236 = vpop.f32.mrf.mxu0
    %v1237 = vadd.f32 %v1187, %v1236
    %v1238 = vpop.f32.mrf.mxu0
    %1239 = vdwg.mxu0
    %1240 = vmatpush.bf16.msra.mxu0 0
    %1241 = vmatpush.bf16.msra.mxu0 0
    %1242 = vmatpush.bf16.msra.mxu0 0
    %1243 = vmatpush.bf16.msra.mxu0 0
    %1244 = vmatpush.bf16.msra.mxu0 0
    %1245 = vmatpush.bf16.msra.mxu0 %v1215
    %1246 = vmatpush.bf16.msra.mxu0 %v1161
    %1247 = vmatpush.bf16.msra.mxu0 %v1159
    %1248 = vmatmul.bf16.gmra.mxu0 %v1203
    %v1249 = vpop.f32.mrf.mxu0
    %v1250 = vadd.f32 %v1167, %v1249
    %v1251 = vpop.f32.mrf.mxu0
    %v1252 = vadd.f32 %v1172, %v1251
    %1253 = vmatmul.bf16.gmra.mxu0 %v1206
    %v1254 = vpop.f32.mrf.mxu0
    %v1255 = vadd.f32 %v1177, %v1254
    %v1256 = vpop.f32.mrf.mxu0
    %v1257 = vadd.f32 %v1182, %v1256
    %1258 = vmatmul.bf16.gmra.mxu0 %v1209
    %v1259 = vpop.f32.mrf.mxu0
    %v1260 = vadd.f32 %v1187, %v1259
    %v1261 = vpop.f32.mrf.mxu0
    %1262 = vdwg.mxu0
    %v1263 = vmul.f32 %v1227, 0.5
    %v1264 = vmul.f32 %v1250, 0.5
    %v1265 = vmul.f32 %v1229, 0.5
    %v1266 = vmul.f32 %v1252, 0.5
    %v1267 = vmul.f32 %v1232, 0.5
    %v1268 = vmul.f32 %v1255, 0.5
    %v1269 = vmul.f32 %v1234, 0.5
    %v1270 = vmul.f32 %v1257, 0.5
    %v1271 = vmul.f32 %v1237, 0.5
    %v1272 = vmul.f32 %v1260, 0.5
    %v1273 = vtanh.pop %v1263
    %v1274 = vtanh.pop %v1264
    %v1275 = vtanh.pop %v1265
    %v1276 = vtanh.pop %v1266
    %v1277 = vtanh.pop %v1267
    %v1278 = vtanh.pop %v1268
    %v1279 = vtanh.pop %v1269
    %v1280 = vtanh.pop %v1270
    %v1281 = vtanh.pop %v1271
    %v1282 = vtanh.pop %v1272
    %v1283 = vadd.f32 %v1273, 1.0
    %v1284 = vadd.f32 %v1274, 1.0
    %v1285 = vadd.f32 %v1275, 1.0
    %v1286 = vadd.f32 %v1276, 1.0
    %v1287 = vadd.f32 %v1277, 1.0
    %v1288 = vadd.f32 %v1278, 1.0
    %v1289 = vadd.f32 %v1279, 1.0
    %v1290 = vadd.f32 %v1280, 1.0
    %v1291 = vadd.f32 %v1281, 1.0
    %v1292 = vadd.f32 %v1282, 1.0
    %v1293 = vmul.f32 %v1263, %v1283
    %v1294 = vmul.f32 %v1264, %v1284
    %v1295 = vmul.f32 %v1265, %v1285
    %v1296 = vmul.f32 %v1266, %v1286
    %v1297 = vmul.f32 %v1267, %v1287
    %v1298 = vmul.f32 %v1268, %v1288
    %v1299 = vmul.f32 %v1269, %v1289
    %v1300 = vmul.f32 %v1270, %v1290
    %v1301 = vmul.f32 %v1271, %v1291
    %v1302 = vmul.f32 %v1272, %v1292
    %s1303 = scalar_lea.vmem %s3, 140
    %v1304 = vld [vmem:[%s1303] sm:$0xf]
    %v1305 = vld [vmem:[%s1303 + $0x4] sm:$0xf]
    %v1306 = vld [vmem:[%s1303 + $0x8] sm:$0xf]
    %v1307 = vld [vmem:[%s1303 + $0xc] sm:$0xf]
    %v1308 = vld [vmem:[%s1303 + $0x10] sm:$0xf]
    %s1309 = scalar_lea.vmem %s4, 280
    %v1310 = vld [vmem:[%s1309] sm:$0xff]
    %v1311 = vld [vmem:[%s1309 + $0x8] sm:$0xff]
    %v1312 = vld [vmem:[%s1309 + $0x10] sm:$0xff]
    %v1313 = vld [vmem:[%s1309 + $0x18] sm:$0xff]
    %v1314 = vld [vmem:[%s1309 + $0x20] sm:$0xff]
    %v1315 = vpack.c.bf16 %v1295, %v1293
    %v1316 = vpack.c.bf16 %v1296, %v1294
    %v1317 = vpack.c.bf16 %v1299, %v1297
    %v1318 = vpack.c.bf16 %v1300, %v1298
    %v1319 = vpack.c.bf16 %v1301, %v1301
    %v1320 = vpack.c.bf16 %v1302, %v1302
    %1322 = vset.pattern.permute.xlu0 0
    %1323 = vperm.xlu0 %1322, %v1310
    %v1324 = vpop.permute.xlu0 %1323
    %1327 = vset.pattern.permute.xlu0 0
    %1328 = vperm.xlu0 %1327, %v1311
    %v1329 = vpop.permute.xlu0 %1328
    %1332 = vset.pattern.permute.xlu0 0
    %1333 = vperm.xlu0 %1332, %v1312
    %v1334 = vpop.permute.xlu0 %1333
    %1337 = vset.pattern.permute.xlu0 0
    %1338 = vperm.xlu0 %1337, %v1313
    %v1339 = vpop.permute.xlu0 %1338
    %1342 = vset.pattern.permute.xlu0 0
    %1343 = vperm.xlu0 %1342, %v1314
    %v1344 = vpop.permute.xlu0 %1343
    %v1351 = vunpack.c.l.b16 %v1304
    %v1352 = vunpack.c.l.b16 %v1305
    %v1353 = vunpack.c.l.b16 %v1306
    %v1354 = vunpack.c.l.b16 %v1307
    %v1355 = vunpack.c.l.b16 %v1308
    %v1356 = vpack.c.b16 %v1352, %v1351
    %v1357 = vpack.c.b16 %v1354, %v1353
    %v1358 = vpack.c.b16 %v1355, %v1355
    %v1360 = vsel %vm258, %v1356, 0
    %v1363 = vsel %vm258, %v1357, 0
    %v1366 = vsel %vm258, %v1358, 0
    %v1369 = vsel %vm268, %v1319, 0
    %v1372 = vsel %vm268, %v1320, 0
    %1374 = vmatpush.bf16.msra.mxu0 0
    %1375 = vmatpush.bf16.msra.mxu0 0
    %1376 = vmatpush.bf16.msra.mxu0 0
    %1377 = vmatpush.bf16.msra.mxu0 0
    %1378 = vmatpush.bf16.msra.mxu0 0
    %1379 = vmatpush.bf16.msra.mxu0 %v1369
    %1380 = vmatpush.bf16.msra.mxu0 %v1317
    %1381 = vmatpush.bf16.msra.mxu0 %v1315
    %1382 = vmatmul.bf16.gmra.mxu0 %v1360
    %v1383 = vpop.f32.mrf.mxu0
    %v1384 = vadd.f32 %v1324, %v1383
    %v1385 = vpop.f32.mrf.mxu0
    %v1386 = vadd.f32 %v1329, %v1385
    %1387 = vmatmul.bf16.gmra.mxu0 %v1363
    %v1388 = vpop.f32.mrf.mxu0
    %v1389 = vadd.f32 %v1334, %v1388
    %v1390 = vpop.f32.mrf.mxu0
    %v1391 = vadd.f32 %v1339, %v1390
    %1392 = vmatmul.bf16.gmra.mxu0 %v1366
    %v1393 = vpop.f32.mrf.mxu0
    %v1394 = vadd.f32 %v1344, %v1393
    %v1395 = vpop.f32.mrf.mxu0
    %1396 = vdwg.mxu0
    %1397 = vmatpush.bf16.msra.mxu0 0
    %1398 = vmatpush.bf16.msra.mxu0 0
    %1399 = vmatpush.bf16.msra.mxu0 0
    %1400 = vmatpush.bf16.msra.mxu0 0
    %1401 = vmatpush.bf16.msra.mxu0 0
    %1402 = vmatpush.bf16.msra.mxu0 %v1372
    %1403 = vmatpush.bf16.msra.mxu0 %v1318
    %1404 = vmatpush.bf16.msra.mxu0 %v1316
    %1405 = vmatmul.bf16.gmra.mxu0 %v1360
    %v1406 = vpop.f32.mrf.mxu0
    %v1407 = vadd.f32 %v1324, %v1406
    %v1408 = vpop.f32.mrf.mxu0
    %v1409 = vadd.f32 %v1329, %v1408
    %1410 = vmatmul.bf16.gmra.mxu0 %v1363
    %v1411 = vpop.f32.mrf.mxu0
    %v1412 = vadd.f32 %v1334, %v1411
    %v1413 = vpop.f32.mrf.mxu0
    %v1414 = vadd.f32 %v1339, %v1413
    %1415 = vmatmul.bf16.gmra.mxu0 %v1366
    %v1416 = vpop.f32.mrf.mxu0
    %v1417 = vadd.f32 %v1344, %v1416
    %v1418 = vpop.f32.mrf.mxu0
    %1419 = vdwg.mxu0
    %v1420 = vmul.f32 %v1384, 0.5
    %v1421 = vmul.f32 %v1407, 0.5
    %v1422 = vmul.f32 %v1386, 0.5
    %v1423 = vmul.f32 %v1409, 0.5
    %v1424 = vmul.f32 %v1389, 0.5
    %v1425 = vmul.f32 %v1412, 0.5
    %v1426 = vmul.f32 %v1391, 0.5
    %v1427 = vmul.f32 %v1414, 0.5
    %v1428 = vmul.f32 %v1394, 0.5
    %v1429 = vmul.f32 %v1417, 0.5
    %v1430 = vtanh.pop %v1420
    %v1431 = vtanh.pop %v1421
    %v1432 = vtanh.pop %v1422
    %v1433 = vtanh.pop %v1423
    %v1434 = vtanh.pop %v1424
    %v1435 = vtanh.pop %v1425
    %v1436 = vtanh.pop %v1426
    %v1437 = vtanh.pop %v1427
    %v1438 = vtanh.pop %v1428
    %v1439 = vtanh.pop %v1429
    %v1440 = vadd.f32 %v1430, 1.0
    %v1441 = vadd.f32 %v1431, 1.0
    %v1442 = vadd.f32 %v1432, 1.0
    %v1443 = vadd.f32 %v1433, 1.0
    %v1444 = vadd.f32 %v1434, 1.0
    %v1445 = vadd.f32 %v1435, 1.0
    %v1446 = vadd.f32 %v1436, 1.0
    %v1447 = vadd.f32 %v1437, 1.0
    %v1448 = vadd.f32 %v1438, 1.0
    %v1449 = vadd.f32 %v1439, 1.0
    %v1450 = vmul.f32 %v1420, %v1440
    %v1451 = vmul.f32 %v1421, %v1441
    %v1452 = vmul.f32 %v1422, %v1442
    %v1453 = vmul.f32 %v1423, %v1443
    %v1454 = vmul.f32 %v1424, %v1444
    %v1455 = vmul.f32 %v1425, %v1445
    %v1456 = vmul.f32 %v1426, %v1446
    %v1457 = vmul.f32 %v1427, %v1447
    %v1458 = vmul.f32 %v1428, %v1448
    %v1459 = vmul.f32 %v1429, %v1449
    %s1460 = scalar_lea.vmem %s3, 160
    %v1461 = vld [vmem:[%s1460] sm:$0xf]
    %v1462 = vld [vmem:[%s1460 + $0x4] sm:$0xf]
    %v1463 = vld [vmem:[%s1460 + $0x8] sm:$0xf]
    %v1464 = vld [vmem:[%s1460 + $0xc] sm:$0xf]
    %v1465 = vld [vmem:[%s1460 + $0x10] sm:$0xf]
    %s1466 = scalar_lea.vmem %s4, 320
    %v1467 = vld [vmem:[%s1466] sm:$0xff]
    %v1468 = vld [vmem:[%s1466 + $0x8] sm:$0xff]
    %v1469 = vld [vmem:[%s1466 + $0x10] sm:$0xff]
    %v1470 = vld [vmem:[%s1466 + $0x18] sm:$0xff]
    %v1471 = vld [vmem:[%s1466 + $0x20] sm:$0xff]
    %v1472 = vpack.c.bf16 %v1452, %v1450
    %v1473 = vpack.c.bf16 %v1453, %v1451
    %v1474 = vpack.c.bf16 %v1456, %v1454
    %v1475 = vpack.c.bf16 %v1457, %v1455
    %v1476 = vpack.c.bf16 %v1458, %v1458
    %v1477 = vpack.c.bf16 %v1459, %v1459
    %1479 = vset.pattern.permute.xlu0 0
    %1480 = vperm.xlu0 %1479, %v1467
    %v1481 = vpop.permute.xlu0 %1480
    %1484 = vset.pattern.permute.xlu0 0
    %1485 = vperm.xlu0 %1484, %v1468
    %v1486 = vpop.permute.xlu0 %1485
    %1489 = vset.pattern.permute.xlu0 0
    %1490 = vperm.xlu0 %1489, %v1469
    %v1491 = vpop.permute.xlu0 %1490
    %1494 = vset.pattern.permute.xlu0 0
    %1495 = vperm.xlu0 %1494, %v1470
    %v1496 = vpop.permute.xlu0 %1495
    %1499 = vset.pattern.permute.xlu0 0
    %1500 = vperm.xlu0 %1499, %v1471
    %v1501 = vpop.permute.xlu0 %1500
    %v1508 = vunpack.c.l.b16 %v1461
    %v1509 = vunpack.c.l.b16 %v1462
    %v1510 = vunpack.c.l.b16 %v1463
    %v1511 = vunpack.c.l.b16 %v1464
    %v1512 = vunpack.c.l.b16 %v1465
    %v1513 = vpack.c.b16 %v1509, %v1508
    %v1514 = vpack.c.b16 %v1511, %v1510
    %v1515 = vpack.c.b16 %v1512, %v1512
    %v1517 = vsel %vm258, %v1513, 0
    %v1520 = vsel %vm258, %v1514, 0
    %v1523 = vsel %vm258, %v1515, 0
    %v1526 = vsel %vm268, %v1476, 0
    %v1529 = vsel %vm268, %v1477, 0
    %1531 = vmatpush.bf16.msra.mxu0 0
    %1532 = vmatpush.bf16.msra.mxu0 0
    %1533 = vmatpush.bf16.msra.mxu0 0
    %1534 = vmatpush.bf16.msra.mxu0 0
    %1535 = vmatpush.bf16.msra.mxu0 0
    %1536 = vmatpush.bf16.msra.mxu0 %v1526
    %1537 = vmatpush.bf16.msra.mxu0 %v1474
    %1538 = vmatpush.bf16.msra.mxu0 %v1472
    %1539 = vmatmul.bf16.gmra.mxu0 %v1517
    %v1540 = vpop.f32.mrf.mxu0
    %v1541 = vadd.f32 %v1481, %v1540
    %v1542 = vpop.f32.mrf.mxu0
    %v1543 = vadd.f32 %v1486, %v1542
    %1544 = vmatmul.bf16.gmra.mxu0 %v1520
    %v1545 = vpop.f32.mrf.mxu0
    %v1546 = vadd.f32 %v1491, %v1545
    %v1547 = vpop.f32.mrf.mxu0
    %v1548 = vadd.f32 %v1496, %v1547
    %1549 = vmatmul.bf16.gmra.mxu0 %v1523
    %v1550 = vpop.f32.mrf.mxu0
    %v1551 = vadd.f32 %v1501, %v1550
    %v1552 = vpop.f32.mrf.mxu0
    %1553 = vdwg.mxu0
    %1554 = vmatpush.bf16.msra.mxu0 0
    %1555 = vmatpush.bf16.msra.mxu0 0
    %1556 = vmatpush.bf16.msra.mxu0 0
    %1557 = vmatpush.bf16.msra.mxu0 0
    %1558 = vmatpush.bf16.msra.mxu0 0
    %1559 = vmatpush.bf16.msra.mxu0 %v1529
    %1560 = vmatpush.bf16.msra.mxu0 %v1475
    %1561 = vmatpush.bf16.msra.mxu0 %v1473
    %1562 = vmatmul.bf16.gmra.mxu0 %v1517
    %v1563 = vpop.f32.mrf.mxu0
    %v1564 = vadd.f32 %v1481, %v1563
    %v1565 = vpop.f32.mrf.mxu0
    %v1566 = vadd.f32 %v1486, %v1565
    %1567 = vmatmul.bf16.gmra.mxu0 %v1520
    %v1568 = vpop.f32.mrf.mxu0
    %v1569 = vadd.f32 %v1491, %v1568
    %v1570 = vpop.f32.mrf.mxu0
    %v1571 = vadd.f32 %v1496, %v1570
    %1572 = vmatmul.bf16.gmra.mxu0 %v1523
    %v1573 = vpop.f32.mrf.mxu0
    %v1574 = vadd.f32 %v1501, %v1573
    %v1575 = vpop.f32.mrf.mxu0
    %1576 = vdwg.mxu0
    %v1577 = vmul.f32 %v1541, 0.5
    %v1578 = vmul.f32 %v1564, 0.5
    %v1579 = vmul.f32 %v1543, 0.5
    %v1580 = vmul.f32 %v1566, 0.5
    %v1581 = vmul.f32 %v1546, 0.5
    %v1582 = vmul.f32 %v1569, 0.5
    %v1583 = vmul.f32 %v1548, 0.5
    %v1584 = vmul.f32 %v1571, 0.5
    %v1585 = vmul.f32 %v1551, 0.5
    %v1586 = vmul.f32 %v1574, 0.5
    %v1587 = vtanh.pop %v1577
    %v1588 = vtanh.pop %v1578
    %v1589 = vtanh.pop %v1579
    %v1590 = vtanh.pop %v1580
    %v1591 = vtanh.pop %v1581
    %v1592 = vtanh.pop %v1582
    %v1593 = vtanh.pop %v1583
    %v1594 = vtanh.pop %v1584
    %v1595 = vtanh.pop %v1585
    %v1596 = vtanh.pop %v1586
    %v1597 = vadd.f32 %v1587, 1.0
    %v1598 = vadd.f32 %v1588, 1.0
    %v1599 = vadd.f32 %v1589, 1.0
    %v1600 = vadd.f32 %v1590, 1.0
    %v1601 = vadd.f32 %v1591, 1.0
    %v1602 = vadd.f32 %v1592, 1.0
    %v1603 = vadd.f32 %v1593, 1.0
    %v1604 = vadd.f32 %v1594, 1.0
    %v1605 = vadd.f32 %v1595, 1.0
    %v1606 = vadd.f32 %v1596, 1.0
    %v1607 = vmul.f32 %v1577, %v1597
    %v1608 = vmul.f32 %v1578, %v1598
    %v1609 = vmul.f32 %v1579, %v1599
    %v1610 = vmul.f32 %v1580, %v1600
    %v1611 = vmul.f32 %v1581, %v1601
    %v1612 = vmul.f32 %v1582, %v1602
    %v1613 = vmul.f32 %v1583, %v1603
    %v1614 = vmul.f32 %v1584, %v1604
    %v1615 = vmul.f32 %v1585, %v1605
    %v1616 = vmul.f32 %v1586, %v1606
    %v1617 = vld [vmem:[%s5] sm:$0x1]
    %v1618 = vpack.c.bf16 %v1609, %v1607
    %v1619 = vpack.c.bf16 %v1610, %v1608
    %v1620 = vpack.c.bf16 %v1613, %v1611
    %v1621 = vpack.c.bf16 %v1614, %v1612
    %v1622 = vpack.c.bf16 %v1615, %v1615
    %v1623 = vpack.c.bf16 %v1616, %v1616
    %v1624 = vld [vmem:[#allocation2] sm:$0x1]
    %1626 = vset.pattern.permute.xlu0 0
    %1627 = vperm.xlu0 %1626, %v1624
    %v1628 = vpop.permute.xlu0 %1627
    %v1630 = vperm.slane %v1628, 0
    %v1632 = vsel %vm258, %v1617, 0
    %v1635 = vsel %vm268, %v1622, 0
    %v1638 = vsel %vm268, %v1623, 0
    %1640 = vmatpush.bf16.msra.mxu0 0
    %1641 = vmatpush.bf16.msra.mxu0 0
    %1642 = vmatpush.bf16.msra.mxu0 0
    %1643 = vmatpush.bf16.msra.mxu0 0
    %1644 = vmatpush.bf16.msra.mxu0 0
    %1645 = vmatpush.bf16.msra.mxu0 %v1635
    %1646 = vmatpush.bf16.msra.mxu0 %v1620
    %1647 = vmatpush.bf16.msra.mxu0 %v1618
    %1648 = vmatmul.bf16.gmra.mxu0 %v1632
    %v1649 = vpop.f32.mrf.mxu0
    %v1650 = vadd.f32 %v1630, %v1649
    %v1651 = vpop.f32.mrf.mxu0
    %1652 = vdwg.mxu0
    %1653 = vmatpush.bf16.msra.mxu0 0
    %1654 = vmatpush.bf16.msra.mxu0 0
    %1655 = vmatpush.bf16.msra.mxu0 0
    %1656 = vmatpush.bf16.msra.mxu0 0
    %1657 = vmatpush.bf16.msra.mxu0 0
    %1658 = vmatpush.bf16.msra.mxu0 %v1638
    %1659 = vmatpush.bf16.msra.mxu0 %v1621
    %1660 = vmatpush.bf16.msra.mxu0 %v1619
    %1661 = vmatmul.bf16.gmra.mxu0 %v1632
    %v1662 = vpop.f32.mrf.mxu0
    %v1663 = vadd.f32 %v1630, %v1662
    %v1664 = vpop.f32.mrf.mxu0
    %1665 = vdwg.mxu0
    %v1668 = vrot.slane %v1663, 7
    %vm1669 = vcmask 1040384
    %v1670 = vsel %vm1669, %v1650, %v1668
    %v1672 = vlaneseq
    %vm1673 = vcmp.ge.s32.totalorder %v1672, 0
    %vm1674 = vcmp.lt.s32.totalorder %v1672, 256
    %vm1675 = vmand %vm1673, %vm1674
    %1676 = vst.msk [vmem:[#allocation3] sm:$0x3] %vm1675, %v1670
    // Predicated region
    $region30: #{tpu_custom_call.1} parent=1 // pred_check
      _
    $region31: #{tpu_custom_call.1} parent=1 // pred_check_branch
      %1678 = sbr.rel (0) target = $region33
    $region32: #{tpu_custom_call.1} parent=1 // pred_region
      %1680 = vsyncadd [#allocation4], 0
      %s1682 = sshll.u32 [#allocation3], 4
      %s1683 = int_to_ptr.vmem [resolvable:$true] %s1682
      %s1684 = sshll.u32 %s7, 4
      %s1685 = int_to_ptr.hbm [resolvable:$true] %s1684
      %1687 = dma.vmem_to_hbm [thread:$0]  %s1683, 32, %s1685, [#allocation4]
    $region33: #{tpu_custom_call.1} parent=1 // pred_fallthru
      _
    // Predicated region
    $region34: #{tpu_custom_call.1} parent=1 // pred_check
      _
    $region35: #{tpu_custom_call.1} parent=1 // pred_check_branch
      %1689 = sbr.rel (0) target = $region37
    $region36: #{tpu_custom_call.1} parent=1 // pred_region
      %1691 = dma.done [#allocation4], 32
    $region37: #{tpu_custom_call.1} parent=1 // pred_fallthru
      _
    %1692 = vsyncpa [#allocation4], 1

</llo_original>
